<compile_context>
chip_gen: v7x
topology: tpu7x:2x2x1
jax: 0.10.0
libtpu: 0.0.40
codegen_flags: <defaults>
</compile_context>

<pallas_src>
import functools

import jax
import jax.numpy as jnp
import numpy as np
from jax import lax
from jax.experimental import pallas as pl
from jax.experimental.pallas import tpu as pltpu


# ----------------------------- Pallas kernel -----------------------------


def _aspp_kernel(xpad_ref, w11_ref, w330_ref, w331_ref, w332_ref, b4_ref,
                 wp_ref, bp_ref, wfm_ref, wfp_ref, bf_ref, out_ref,
                 *, H, W, P, rates):
    Cin = xpad_ref.shape[-1]
    HW = H * W

    # bf16 image stays bf16 all the way into the MXU (no f32 widening copy).
    xpad = xpad_ref[0]                                      # (Hp, Wp, Cin) bf16

    def view(dy, dx):
        # Shifted HxW window of the zero-padded image, flattened to (HW, Cin).
        return xpad[P + dy:P + dy + H, P + dx:P + dx + W, :].reshape(HW, Cin)

    center = view(0, 0)                                     # (HW, Cin) bf16

    # 1x1 Conv-BN-ReLU branch: single matmul, K = Cin.
    h11 = jnp.dot(center, w11_ref[...], preferred_element_type=jnp.float32)

    # Dilated 3x3 branches: one bf16 9-shift slab and one MXU call per branch
    # (K = 9*Cin) -- no zero-padded (shift, branch) blocks as in v2's wbig.
    def branch(r, w_ref):
        slab = jnp.concatenate(
            [view(dy, dx) for dy in (-r, 0, r) for dx in (-r, 0, r)], axis=1)
        return jnp.dot(slab, w_ref[...], preferred_element_type=jnp.float32)

    h = jnp.concatenate(
        [h11,
         branch(rates[0], w330_ref),
         branch(rates[1], w331_ref),
         branch(rates[2], w332_ref)], axis=1)               # (HW, 4*Cn) f32
    h = jnp.maximum(h + b4_ref[...], 0.0)

    # Image-pooling branch: global mean -> 1x1 conv -> ReLU, folded into the
    # final bias (bilinear "upsample" of a 1x1 map is a per-channel constant).
    mean = jnp.mean(center.astype(jnp.float32), axis=0, keepdims=True)  # (1, Cin)
    pool = jnp.maximum(
        jnp.dot(mean.astype(jnp.bfloat16), wp_ref[...],
                preferred_element_type=jnp.float32) + bp_ref[...], 0.0)  # (1, Cn)
    bias_col = bf_ref[...] + jnp.sum(
        wfp_ref[...].astype(jnp.float32) * pool, axis=1, keepdims=True)  # (Cin, 1)

    # Final 1x1 conv as a bf16 NT matmul producing channels-major (Cin, HW):
    # lane-dense output store, no wrapper-side transpose.
    out_t = lax.dot_general(wfm_ref[...], h.astype(jnp.bfloat16),
                            (((1,), (1,)), ((), ())),
                            preferred_element_type=jnp.float32)          # (Cin, HW)
    out_ref[0] = jnp.maximum(out_t + bias_col, 0.0).astype(out_ref.dtype)


# ----------------------------- wrapper -----------------------------


def _pick_vmem_limit_bytes():
    """~48 MiB on v7x (64 MiB physical VMEM/TC), up to ~100 MiB on v5e/v6e."""
    try:
        cap = pltpu.get_tpu_info().vmem_capacity_bytes
    except Exception:
        return 48 * 1024 * 1024
    return max(min(cap - 16 * 1024 * 1024, 100 * 1024 * 1024), 32 * 1024 * 1024)


def aspp_forward(x_nchw, kp, rates):
    """x_nchw: (B, Cin, H, W) float32 -> (B, Cin, H, W) float32."""
    B, Cin, H, W = x_nchw.shape
    rates = tuple(rates)
    P = max(rates)

    # NCHW -> NHWC, zero-pad the halo once, ship to the kernel in bf16.
    x_nhwc = jnp.transpose(x_nchw, (0, 2, 3, 1)).astype(jnp.bfloat16)
    xpad = jnp.pad(x_nhwc, ((0, 0), (P, P), (P, P), (0, 0)))
    Hp, Wp = H + 2 * P, W + 2 * P

    weight_names = ('w11', 'w330', 'w331', 'w332', 'b4', 'wp', 'bp',
                    'wfm_t', 'wfp_t', 'bf_col')
    weights = [kp[n] for n in weight_names]

    def full_spec(a):
        n = a.ndim
        return pl.BlockSpec(a.shape, lambda b, _n=n: (0,) * _n)

    in_specs = ([pl.BlockSpec((1, Hp, Wp, Cin), lambda b: (b, 0, 0, 0))]
                + [full_spec(a) for a in weights])

    # One grid step per batch image; with B=2 the "parallel" axis feeds both
    # megacore TensorCores.  (Row tiling for production shapes: see TODO above.)
    out = pl.pallas_call(
        functools.partial(_aspp_kernel, H=H, W=W, P=P, rates=rates),
        out_shape=jax.ShapeDtypeStruct((B, Cin, H * W), jnp.float32),
        grid_spec=pltpu.PrefetchScalarGridSpec(
            num_scalar_prefetch=0,
            grid=(B,),
            in_specs=in_specs,
            out_specs=pl.BlockSpec((1, Cin, H * W), lambda b: (b, 0, 0)),
        ),
        compiler_params=pltpu.CompilerParams(
            dimension_semantics=("parallel",),
            vmem_limit_bytes=_pick_vmem_limit_bytes()),
    )(xpad, *weights)

    # Lane-dense (B, Cin, HW) kernel output -> NCHW is a free reshape.
    return out.reshape(B, Cin, H, W)


# ----------------------------- params (deterministic) -----------------------------


def init_aspp_params(key, in_channels, num_channels, rates, eps=1e-5):
    """Deterministic init of all conv/BN params; BN (eval mode) folded into conv.

    Returns folded params in OIHW layout.  The pure-JAX reference consumes
    these directly; build_kernel_params() restacks them for the Pallas kernel.
    """
    keys = jax.random.split(key, 6 * 3)

    def conv_w(k, o, i, kh, kw):
        bound = 1.0 / np.sqrt(i * kh * kw)
        return jax.random.uniform(k, (o, i, kh, kw), jnp.float32, -bound, bound)

    def conv_b(k, o, fan_in):
        bound = 1.0 / np.sqrt(fan_in)
        return jax.random.uniform(k, (o,), jnp.float32, -bound, bound)

    def bn_params(k, o):
        k1, k2, k3, k4 = jax.random.split(k, 4)
        gamma = jax.random.uniform(k1, (o,), jnp.float32, 0.5, 1.5)
        beta = jax.random.uniform(k2, (o,), jnp.float32, -0.2, 0.2)
        mean = jax.random.uniform(k3, (o,), jnp.float32, -0.1, 0.1)
        var = jax.random.uniform(k4, (o,), jnp.float32, 0.8, 1.2)
        return gamma, beta, mean, var

    def fold(w, b, bn):
        gamma, beta, mean, var = bn
        scale = gamma / jnp.sqrt(var + eps)
        return w * scale[:, None, None, None], (b - mean) * scale + beta

    def make_block(kw_, kb_, kbn_, o, i, ksz):
        w = conv_w(kw_, o, i, ksz, ksz)
        b = conv_b(kb_, o, i * ksz * ksz)
        return fold(w, b, bn_params(kbn_, o))

    Cin, Cn = in_channels, num_channels
    w11, b11 = make_block(keys[0], keys[1], keys[2], Cn, Cin, 1)
    w330, b330 = make_block(keys[3], keys[4], keys[5], Cn, Cin, 3)
    w331, b331 = make_block(keys[6], keys[7], keys[8], Cn, Cin, 3)
    w332, b332 = make_block(keys[9], keys[10], keys[11], Cn, Cin, 3)
    wp, bp = make_block(keys[12], keys[13], keys[14], Cn, Cin, 1)
    wf, bf = make_block(keys[15], keys[16], keys[17], Cin, 5 * Cn, 1)

    return dict(w11=w11, b11=b11, w330=w330, b330=b330, w331=w331, b331=b331,
                w332=w332, b332=b332, wp=wp, bp=bp, wf=wf, bf=bf)


def build_kernel_params(ref, rates):
    """Restack the folded OIHW params into the kernel's fused bf16 layouts."""
    del rates  # tap ordering is rate-independent (dy-major, dx-minor)

    w11 = np.asarray(ref['w11'])            # (Cn, Cin, 1, 1)
    Cn, Cin = w11.shape[0], w11.shape[1]

    def stack33(name):
        # Rows ordered like the kernel's per-branch slab: tap (dy, dx) with
        # dy-major, dx-minor; tap (ti, tj) of the OIHW weight maps to
        # shift ((ti-1)*r, (tj-1)*r).
        w = np.asarray(ref[name])           # (Cn, Cin, 3, 3)
        rows = [w[:, :, ti, tj].T for ti in range(3) for tj in range(3)]
        return np.concatenate(rows, axis=0)  # (9*Cin, Cn)

    b4 = np.concatenate([np.asarray(ref[n])
                         for n in ('b11', 'b330', 'b331', 'b332')])
    wf = np.asarray(ref['wf'])[:, :, 0, 0]  # (Cin, 5*Cn), output-major (O, I)
    wp = np.asarray(ref['wp'])[:, :, 0, 0]  # (Cn, Cin)

    return dict(
        w11=jnp.asarray(w11[:, :, 0, 0].T, jnp.bfloat16),          # (Cin, Cn)
        w330=jnp.asarray(stack33('w330'), jnp.bfloat16),           # (9*Cin, Cn)
        w331=jnp.asarray(stack33('w331'), jnp.bfloat16),
        w332=jnp.asarray(stack33('w332'), jnp.bfloat16),
        b4=jnp.asarray(b4[None, :], jnp.float32),                  # (1, 4*Cn)
        wp=jnp.asarray(wp.T, jnp.bfloat16),                        # (Cin, Cn)
        bp=jnp.asarray(np.asarray(ref['bp'])[None, :], jnp.float32),
        wfm_t=jnp.asarray(wf[:, :4 * Cn], jnp.bfloat16),           # (Cin, 4*Cn)
        wfp_t=jnp.asarray(wf[:, 4 * Cn:], jnp.bfloat16),           # (Cin, Cn)
        bf_col=jnp.asarray(np.asarray(ref['bf'])[:, None], jnp.float32),  # (Cin, 1)
    )


# ----------------------------- pure-JAX reference -----------------------------


def aspp_reference(x, ref, rates):
    def cbr(inp, w, b, dilation, pad):
        y = lax.conv_general_dilated(
            inp, w, window_strides=(1, 1),
            padding=[(pad, pad), (pad, pad)],
            rhs_dilation=(dilation, dilation),
            dimension_numbers=('NCHW', 'OIHW', 'NCHW'))
        return jnp.maximum(y + b[None, :, None, None], 0.0)

    c11 = cbr(x, ref['w11'], ref['b11'], 1, 0)
    c0 = cbr(x, ref['w330'], ref['b330'], rates[0], rates[0])
    c1 = cbr(x, ref['w331'], ref['b331'], rates[1], rates[1])
    c2 = cbr(x, ref['w332'], ref['b332'], rates[2], rates[2])
    xm = jnp.mean(x, axis=(2, 3), keepdims=True)
    p = cbr(xm, ref['wp'], ref['bp'], 1, 0)
    p = jnp.broadcast_to(p, (x.shape[0], p.shape[1], x.shape[2], x.shape[3]))
    cat = jnp.concatenate([c11, c0, c1, c2, p], axis=1)
    return cbr(cat, ref['wf'], ref['bf'], 1, 0)


# ----------------------------- main -----------------------------


if __name__ == "__main__":
    B, Cin, H, W = 2, 4, 16, 16
    Cn = 8
    rates = (1, 2, 3)

    key = jax.random.PRNGKey(0)
    kx, kparam = jax.random.split(key)
    x = jax.random.normal(kx, (B, Cin, H, W), dtype=jnp.float32)

    ref = init_aspp_params(kparam, Cin, Cn, rates)
    kp = build_kernel_params(ref, rates)

    out = jax.block_until_ready(aspp_forward(x, kp, rates))
    assert out.shape == (B, Cin, H, W), out.shape

    expected = jax.block_until_ready(aspp_reference(x, ref, rates))
    # bf16 image / bf16 weights on the MXU (f32 accumulation) => 2e-2 tol.
    np.testing.assert_allclose(np.asarray(out), np.asarray(expected),
                               rtol=2e-2, atol=2e-2)

    print("KERNEL_OK")
</pallas_src>

<mosaic_0001>
module attributes {stable_mosaic.version = 11 : i64} {
  func.func @_aspp_kernel(%arg0: i32, %arg1: memref<1x22x22x4xbf16, #tpu.memory_space<vmem>>, %arg2: memref<4x8xbf16, #tpu.memory_space<vmem>>, %arg3: memref<36x8xbf16, #tpu.memory_space<vmem>>, %arg4: memref<36x8xbf16, #tpu.memory_space<vmem>>, %arg5: memref<36x8xbf16, #tpu.memory_space<vmem>>, %arg6: memref<1x32xf32, #tpu.memory_space<vmem>>, %arg7: memref<4x8xbf16, #tpu.memory_space<vmem>>, %arg8: memref<1x8xf32, #tpu.memory_space<vmem>>, %arg9: memref<4x32xbf16, #tpu.memory_space<vmem>>, %arg10: memref<4x8xbf16, #tpu.memory_space<vmem>>, %arg11: memref<4x1xf32, #tpu.memory_space<vmem>>, %arg12: memref<1x4x256xf32, #tpu.memory_space<vmem>>) attributes {dimension_semantics = [#tpu.dimension_semantics<parallel>], iteration_bounds = array<i64: 2>, scalar_prefetch = 0 : i64, scratch_operands = 0 : i64, tpu.core_type = #tpu.core_type<tc>, window_params = [{transform_indices = @transform_0, window_bounds = array<i64: 1, 22, 22, 4>}, {pipeline_mode = #tpu.pipeline_mode<synchronous>, transform_indices = @transform_1, window_bounds = array<i64: 4, 8>}, {pipeline_mode = #tpu.pipeline_mode<synchronous>, transform_indices = @transform_2, window_bounds = array<i64: 36, 8>}, {pipeline_mode = #tpu.pipeline_mode<synchronous>, transform_indices = @transform_3, window_bounds = array<i64: 36, 8>}, {pipeline_mode = #tpu.pipeline_mode<synchronous>, transform_indices = @transform_4, window_bounds = array<i64: 36, 8>}, {pipeline_mode = #tpu.pipeline_mode<synchronous>, transform_indices = @transform_5, window_bounds = array<i64: 1, 32>}, {pipeline_mode = #tpu.pipeline_mode<synchronous>, transform_indices = @transform_6, window_bounds = array<i64: 4, 8>}, {pipeline_mode = #tpu.pipeline_mode<synchronous>, transform_indices = @transform_7, window_bounds = array<i64: 1, 8>}, {pipeline_mode = #tpu.pipeline_mode<synchronous>, transform_indices = @transform_8, window_bounds = array<i64: 4, 32>}, {pipeline_mode = #tpu.pipeline_mode<synchronous>, transform_indices = @transform_9, window_bounds = array<i64: 4, 8>}, {pipeline_mode = #tpu.pipeline_mode<synchronous>, transform_indices = @transform_10, window_bounds = array<i64: 4, 1>}, {transform_indices = @transform_11, window_bounds = array<i64: 1, 4, 256>}]} {
    %c0 = arith.constant 0 : index
    %c0_0 = arith.constant 0 : index
    %c0_1 = arith.constant 0 : index
    %c0_2 = arith.constant 0 : index
    %0 = vector.load %arg1[%c0, %c0_0, %c0_1, %c0_2] : memref<1x22x22x4xbf16, #tpu.memory_space<vmem>>, vector<1x22x22x4xbf16>
    %1 = vector.shape_cast %0 : vector<1x22x22x4xbf16> to vector<22x22x4xbf16>
    %2 = vector.extract_strided_slice %1 {offsets = [3, 3, 0], sizes = [16, 16, 4], strides = [1, 1, 1]} : vector<22x22x4xbf16> to vector<16x16x4xbf16>
    %3 = vector.shape_cast %2 : vector<16x16x4xbf16> to vector<256x4xbf16>
    %c0_3 = arith.constant 0 : index
    %c0_4 = arith.constant 0 : index
    %4 = vector.load %arg2[%c0_3, %c0_4] : memref<4x8xbf16, #tpu.memory_space<vmem>>, vector<4x8xbf16>
    %cst = arith.constant dense<0.000000e+00> : vector<256x8xf32>
    %5 = tpu.matmul %3, %4, %cst {dimension_numbers = #tpu.dot_dimension_numbers<[1], [0], [0], [1], [0, 0, 1, 1], [], []>} : vector<256x4xbf16>, vector<4x8xbf16>, vector<256x8xf32> -> vector<256x8xf32>
    %6 = vector.extract_strided_slice %1 {offsets = [2, 2, 0], sizes = [16, 16, 4], strides = [1, 1, 1]} : vector<22x22x4xbf16> to vector<16x16x4xbf16>
    %7 = vector.shape_cast %6 : vector<16x16x4xbf16> to vector<256x4xbf16>
    %8 = vector.extract_strided_slice %1 {offsets = [2, 3, 0], sizes = [16, 16, 4], strides = [1, 1, 1]} : vector<22x22x4xbf16> to vector<16x16x4xbf16>
    %9 = vector.shape_cast %8 : vector<16x16x4xbf16> to vector<256x4xbf16>
    %10 = vector.extract_strided_slice %1 {offsets = [2, 4, 0], sizes = [16, 16, 4], strides = [1, 1, 1]} : vector<22x22x4xbf16> to vector<16x16x4xbf16>
    %11 = vector.shape_cast %10 : vector<16x16x4xbf16> to vector<256x4xbf16>
    %12 = vector.extract_strided_slice %1 {offsets = [3, 2, 0], sizes = [16, 16, 4], strides = [1, 1, 1]} : vector<22x22x4xbf16> to vector<16x16x4xbf16>
    %13 = vector.shape_cast %12 : vector<16x16x4xbf16> to vector<256x4xbf16>
    %14 = vector.extract_strided_slice %1 {offsets = [3, 3, 0], sizes = [16, 16, 4], strides = [1, 1, 1]} : vector<22x22x4xbf16> to vector<16x16x4xbf16>
    %15 = vector.shape_cast %14 : vector<16x16x4xbf16> to vector<256x4xbf16>
    %16 = vector.extract_strided_slice %1 {offsets = [3, 4, 0], sizes = [16, 16, 4], strides = [1, 1, 1]} : vector<22x22x4xbf16> to vector<16x16x4xbf16>
    %17 = vector.shape_cast %16 : vector<16x16x4xbf16> to vector<256x4xbf16>
    %18 = vector.extract_strided_slice %1 {offsets = [4, 2, 0], sizes = [16, 16, 4], strides = [1, 1, 1]} : vector<22x22x4xbf16> to vector<16x16x4xbf16>
    %19 = vector.shape_cast %18 : vector<16x16x4xbf16> to vector<256x4xbf16>
    %20 = vector.extract_strided_slice %1 {offsets = [4, 3, 0], sizes = [16, 16, 4], strides = [1, 1, 1]} : vector<22x22x4xbf16> to vector<16x16x4xbf16>
    %21 = vector.shape_cast %20 : vector<16x16x4xbf16> to vector<256x4xbf16>
    %22 = vector.extract_strided_slice %1 {offsets = [4, 4, 0], sizes = [16, 16, 4], strides = [1, 1, 1]} : vector<22x22x4xbf16> to vector<16x16x4xbf16>
    %23 = vector.shape_cast %22 : vector<16x16x4xbf16> to vector<256x4xbf16>
    %24 = tpu.concatenate %7, %9, %11, %13, %15, %17, %19, %21, %23 in 1 : vector<256x4xbf16>, vector<256x4xbf16>, vector<256x4xbf16>, vector<256x4xbf16>, vector<256x4xbf16>, vector<256x4xbf16>, vector<256x4xbf16>, vector<256x4xbf16>, vector<256x4xbf16> -> vector<256x36xbf16>
    %c0_5 = arith.constant 0 : index
    %c0_6 = arith.constant 0 : index
    %25 = vector.load %arg3[%c0_5, %c0_6] : memref<36x8xbf16, #tpu.memory_space<vmem>>, vector<36x8xbf16>
    %cst_7 = arith.constant dense<0.000000e+00> : vector<256x8xf32>
    %26 = tpu.matmul %24, %25, %cst_7 {dimension_numbers = #tpu.dot_dimension_numbers<[1], [0], [0], [1], [0, 0, 1, 1], [], []>} : vector<256x36xbf16>, vector<36x8xbf16>, vector<256x8xf32> -> vector<256x8xf32>
    %27 = vector.extract_strided_slice %1 {offsets = [1, 1, 0], sizes = [16, 16, 4], strides = [1, 1, 1]} : vector<22x22x4xbf16> to vector<16x16x4xbf16>
    %28 = vector.shape_cast %27 : vector<16x16x4xbf16> to vector<256x4xbf16>
    %29 = vector.extract_strided_slice %1 {offsets = [1, 3, 0], sizes = [16, 16, 4], strides = [1, 1, 1]} : vector<22x22x4xbf16> to vector<16x16x4xbf16>
    %30 = vector.shape_cast %29 : vector<16x16x4xbf16> to vector<256x4xbf16>
    %31 = vector.extract_strided_slice %1 {offsets = [1, 5, 0], sizes = [16, 16, 4], strides = [1, 1, 1]} : vector<22x22x4xbf16> to vector<16x16x4xbf16>
    %32 = vector.shape_cast %31 : vector<16x16x4xbf16> to vector<256x4xbf16>
    %33 = vector.extract_strided_slice %1 {offsets = [3, 1, 0], sizes = [16, 16, 4], strides = [1, 1, 1]} : vector<22x22x4xbf16> to vector<16x16x4xbf16>
    %34 = vector.shape_cast %33 : vector<16x16x4xbf16> to vector<256x4xbf16>
    %35 = vector.extract_strided_slice %1 {offsets = [3, 3, 0], sizes = [16, 16, 4], strides = [1, 1, 1]} : vector<22x22x4xbf16> to vector<16x16x4xbf16>
    %36 = vector.shape_cast %35 : vector<16x16x4xbf16> to vector<256x4xbf16>
    %37 = vector.extract_strided_slice %1 {offsets = [3, 5, 0], sizes = [16, 16, 4], strides = [1, 1, 1]} : vector<22x22x4xbf16> to vector<16x16x4xbf16>
    %38 = vector.shape_cast %37 : vector<16x16x4xbf16> to vector<256x4xbf16>
    %39 = vector.extract_strided_slice %1 {offsets = [5, 1, 0], sizes = [16, 16, 4], strides = [1, 1, 1]} : vector<22x22x4xbf16> to vector<16x16x4xbf16>
    %40 = vector.shape_cast %39 : vector<16x16x4xbf16> to vector<256x4xbf16>
    %41 = vector.extract_strided_slice %1 {offsets = [5, 3, 0], sizes = [16, 16, 4], strides = [1, 1, 1]} : vector<22x22x4xbf16> to vector<16x16x4xbf16>
    %42 = vector.shape_cast %41 : vector<16x16x4xbf16> to vector<256x4xbf16>
    %43 = vector.extract_strided_slice %1 {offsets = [5, 5, 0], sizes = [16, 16, 4], strides = [1, 1, 1]} : vector<22x22x4xbf16> to vector<16x16x4xbf16>
    %44 = vector.shape_cast %43 : vector<16x16x4xbf16> to vector<256x4xbf16>
    %45 = tpu.concatenate %28, %30, %32, %34, %36, %38, %40, %42, %44 in 1 : vector<256x4xbf16>, vector<256x4xbf16>, vector<256x4xbf16>, vector<256x4xbf16>, vector<256x4xbf16>, vector<256x4xbf16>, vector<256x4xbf16>, vector<256x4xbf16>, vector<256x4xbf16> -> vector<256x36xbf16>
    %c0_8 = arith.constant 0 : index
    %c0_9 = arith.constant 0 : index
    %46 = vector.load %arg4[%c0_8, %c0_9] : memref<36x8xbf16, #tpu.memory_space<vmem>>, vector<36x8xbf16>
    %cst_10 = arith.constant dense<0.000000e+00> : vector<256x8xf32>
    %47 = tpu.matmul %45, %46, %cst_10 {dimension_numbers = #tpu.dot_dimension_numbers<[1], [0], [0], [1], [0, 0, 1, 1], [], []>} : vector<256x36xbf16>, vector<36x8xbf16>, vector<256x8xf32> -> vector<256x8xf32>
    %48 = vector.extract_strided_slice %1 {offsets = [0, 0, 0], sizes = [16, 16, 4], strides = [1, 1, 1]} : vector<22x22x4xbf16> to vector<16x16x4xbf16>
    %49 = vector.shape_cast %48 : vector<16x16x4xbf16> to vector<256x4xbf16>
    %50 = vector.extract_strided_slice %1 {offsets = [0, 3, 0], sizes = [16, 16, 4], strides = [1, 1, 1]} : vector<22x22x4xbf16> to vector<16x16x4xbf16>
    %51 = vector.shape_cast %50 : vector<16x16x4xbf16> to vector<256x4xbf16>
    %52 = vector.extract_strided_slice %1 {offsets = [0, 6, 0], sizes = [16, 16, 4], strides = [1, 1, 1]} : vector<22x22x4xbf16> to vector<16x16x4xbf16>
    %53 = vector.shape_cast %52 : vector<16x16x4xbf16> to vector<256x4xbf16>
    %54 = vector.extract_strided_slice %1 {offsets = [3, 0, 0], sizes = [16, 16, 4], strides = [1, 1, 1]} : vector<22x22x4xbf16> to vector<16x16x4xbf16>
    %55 = vector.shape_cast %54 : vector<16x16x4xbf16> to vector<256x4xbf16>
    %56 = vector.extract_strided_slice %1 {offsets = [3, 3, 0], sizes = [16, 16, 4], strides = [1, 1, 1]} : vector<22x22x4xbf16> to vector<16x16x4xbf16>
    %57 = vector.shape_cast %56 : vector<16x16x4xbf16> to vector<256x4xbf16>
    %58 = vector.extract_strided_slice %1 {offsets = [3, 6, 0], sizes = [16, 16, 4], strides = [1, 1, 1]} : vector<22x22x4xbf16> to vector<16x16x4xbf16>
    %59 = vector.shape_cast %58 : vector<16x16x4xbf16> to vector<256x4xbf16>
    %60 = vector.extract_strided_slice %1 {offsets = [6, 0, 0], sizes = [16, 16, 4], strides = [1, 1, 1]} : vector<22x22x4xbf16> to vector<16x16x4xbf16>
    %61 = vector.shape_cast %60 : vector<16x16x4xbf16> to vector<256x4xbf16>
    %62 = vector.extract_strided_slice %1 {offsets = [6, 3, 0], sizes = [16, 16, 4], strides = [1, 1, 1]} : vector<22x22x4xbf16> to vector<16x16x4xbf16>
    %63 = vector.shape_cast %62 : vector<16x16x4xbf16> to vector<256x4xbf16>
    %64 = vector.extract_strided_slice %1 {offsets = [6, 6, 0], sizes = [16, 16, 4], strides = [1, 1, 1]} : vector<22x22x4xbf16> to vector<16x16x4xbf16>
    %65 = vector.shape_cast %64 : vector<16x16x4xbf16> to vector<256x4xbf16>
    %66 = tpu.concatenate %49, %51, %53, %55, %57, %59, %61, %63, %65 in 1 : vector<256x4xbf16>, vector<256x4xbf16>, vector<256x4xbf16>, vector<256x4xbf16>, vector<256x4xbf16>, vector<256x4xbf16>, vector<256x4xbf16>, vector<256x4xbf16>, vector<256x4xbf16> -> vector<256x36xbf16>
    %c0_11 = arith.constant 0 : index
    %c0_12 = arith.constant 0 : index
    %67 = vector.load %arg5[%c0_11, %c0_12] : memref<36x8xbf16, #tpu.memory_space<vmem>>, vector<36x8xbf16>
    %cst_13 = arith.constant dense<0.000000e+00> : vector<256x8xf32>
    %68 = tpu.matmul %66, %67, %cst_13 {dimension_numbers = #tpu.dot_dimension_numbers<[1], [0], [0], [1], [0, 0, 1, 1], [], []>} : vector<256x36xbf16>, vector<36x8xbf16>, vector<256x8xf32> -> vector<256x8xf32>
    %69 = tpu.concatenate %5, %26, %47, %68 in 1 : vector<256x8xf32>, vector<256x8xf32>, vector<256x8xf32>, vector<256x8xf32> -> vector<256x32xf32>
    %c0_14 = arith.constant 0 : index
    %c0_15 = arith.constant 0 : index
    %70 = vector.load %arg6[%c0_14, %c0_15] : memref<1x32xf32, #tpu.memory_space<vmem>>, vector<1x32xf32>
    %71 = vector.broadcast %70 : vector<1x32xf32> to vector<256x32xf32>
    %72 = arith.addf %69, %71 : vector<256x32xf32>
    %cst_16 = arith.constant 0.000000e+00 : f32
    %73 = vector.broadcast %cst_16 : f32 to vector<256x32xf32>
    %74 = arith.maximumf %72, %73 : vector<256x32xf32>
    %75 = arith.extf %3 : vector<256x4xbf16> to vector<256x4xf32>
    %cst_17 = arith.constant dense<0.000000e+00> : vector<4xf32>
    %76 = vector.multi_reduction <add>, %75, %cst_17 [0] : vector<256x4xf32> to vector<4xf32>
    %77 = vector.shape_cast %76 : vector<4xf32> to vector<1x4xf32>
    %cst_18 = arith.constant 2.560000e+02 : f32
    %78 = vector.broadcast %cst_18 : f32 to vector<1x4xf32>
    %79 = arith.divf %77, %78 : vector<1x4xf32>
    %80 = arith.truncf %79 : vector<1x4xf32> to vector<1x4xbf16>
    %c0_19 = arith.constant 0 : index
    %c0_20 = arith.constant 0 : index
    %81 = vector.load %arg7[%c0_19, %c0_20] : memref<4x8xbf16, #tpu.memory_space<vmem>>, vector<4x8xbf16>
    %cst_21 = arith.constant dense<0.000000e+00> : vector<1x8xf32>
    %82 = tpu.matmul %80, %81, %cst_21 {dimension_numbers = #tpu.dot_dimension_numbers<[1], [0], [0], [1], [0, 0, 1, 1], [], []>} : vector<1x4xbf16>, vector<4x8xbf16>, vector<1x8xf32> -> vector<1x8xf32>
    %c0_22 = arith.constant 0 : index
    %c0_23 = arith.constant 0 : index
    %83 = vector.load %arg8[%c0_22, %c0_23] : memref<1x8xf32, #tpu.memory_space<vmem>>, vector<1x8xf32>
    %84 = arith.addf %82, %83 : vector<1x8xf32>
    %cst_24 = arith.constant 0.000000e+00 : f32
    %85 = vector.broadcast %cst_24 : f32 to vector<1x8xf32>
    %86 = arith.maximumf %84, %85 : vector<1x8xf32>
    %c0_25 = arith.constant 0 : index
    %c0_26 = arith.constant 0 : index
    %87 = vector.load %arg11[%c0_25, %c0_26] : memref<4x1xf32, #tpu.memory_space<vmem>>, vector<4x1xf32>
    %c0_27 = arith.constant 0 : index
    %c0_28 = arith.constant 0 : index
    %88 = vector.load %arg10[%c0_27, %c0_28] : memref<4x8xbf16, #tpu.memory_space<vmem>>, vector<4x8xbf16>
    %89 = arith.extf %88 : vector<4x8xbf16> to vector<4x8xf32>
    %90 = vector.broadcast %86 : vector<1x8xf32> to vector<4x8xf32>
    %91 = arith.mulf %89, %90 : vector<4x8xf32>
    %cst_29 = arith.constant dense<0.000000e+00> : vector<4xf32>
    %92 = vector.multi_reduction <add>, %91, %cst_29 [1] : vector<4x8xf32> to vector<4xf32>
    %93 = vector.shape_cast %92 : vector<4xf32> to vector<4x1xf32>
    %94 = arith.addf %87, %93 : vector<4x1xf32>
    %c0_30 = arith.constant 0 : index
    %c0_31 = arith.constant 0 : index
    %95 = vector.load %arg9[%c0_30, %c0_31] : memref<4x32xbf16, #tpu.memory_space<vmem>>, vector<4x32xbf16>
    %96 = arith.truncf %74 : vector<256x32xf32> to vector<256x32xbf16>
    %cst_32 = arith.constant dense<0.000000e+00> : vector<4x256xf32>
    %97 = tpu.matmul %95, %96, %cst_32 {dimension_numbers = #tpu.dot_dimension_numbers<[1], [1], [0], [0], [0, 0, 1, 0], [], []>} : vector<4x32xbf16>, vector<256x32xbf16>, vector<4x256xf32> -> vector<4x256xf32>
    %98 = vector.broadcast %94 : vector<4x1xf32> to vector<4x256xf32>
    %99 = arith.addf %97, %98 : vector<4x256xf32>
    %cst_33 = arith.constant 0.000000e+00 : f32
    %100 = vector.broadcast %cst_33 : f32 to vector<4x256xf32>
    %101 = arith.maximumf %99, %100 : vector<4x256xf32>
    %c0_34 = arith.constant 0 : index
    %c0_35 = arith.constant 0 : index
    %c0_36 = arith.constant 0 : index
    %102 = vector.load %arg12[%c0_34, %c0_35, %c0_36] : memref<1x4x256xf32, #tpu.memory_space<vmem>>, vector<1x4x256xf32>
    %103 = vector.shape_cast %102 : vector<1x4x256xf32> to vector<4x256xf32>
    %104 = vector.shape_cast %101 : vector<4x256xf32> to vector<1x4x256xf32>
    tpu.vector_store %arg12[%c0_34, %c0_35, %c0_36], %104 {strides = array<i32>} : memref<1x4x256xf32, #tpu.memory_space<vmem>>, vector<1x4x256xf32>,
    return
  }
  func.func @transform_0(%arg0: i32) -> (i32, i32, i32, i32) {
    %c0_i32 = arith.constant 0 : i32
    %c0_i32_0 = arith.constant 0 : i32
    %c0_i32_1 = arith.constant 0 : i32
    %c0_i32_2 = arith.constant 0 : i32
    return %arg0, %c0_i32, %c0_i32_0, %c0_i32_1 : i32, i32, i32, i32
  }
  func.func @transform_1(%arg0: i32) -> (i32, i32) {
    %c0_i32 = arith.constant 0 : i32
    %c0_i32_0 = arith.constant 0 : i32
    %c0_i32_1 = arith.constant 0 : i32
    return %c0_i32, %c0_i32_0 : i32, i32
  }
  func.func @transform_2(%arg0: i32) -> (i32, i32) {
    %c0_i32 = arith.constant 0 : i32
    %c0_i32_0 = arith.constant 0 : i32
    %c0_i32_1 = arith.constant 0 : i32
    return %c0_i32, %c0_i32_0 : i32, i32
  }
  func.func @transform_3(%arg0: i32) -> (i32, i32) {
    %c0_i32 = arith.constant 0 : i32
    %c0_i32_0 = arith.constant 0 : i32
    %c0_i32_1 = arith.constant 0 : i32
    return %c0_i32, %c0_i32_0 : i32, i32
  }
  func.func @transform_4(%arg0: i32) -> (i32, i32) {
    %c0_i32 = arith.constant 0 : i32
    %c0_i32_0 = arith.constant 0 : i32
    %c0_i32_1 = arith.constant 0 : i32
    return %c0_i32, %c0_i32_0 : i32, i32
  }
  func.func @transform_5(%arg0: i32) -> (i32, i32) {
    %c0_i32 = arith.constant 0 : i32
    %c0_i32_0 = arith.constant 0 : i32
    %c0_i32_1 = arith.constant 0 : i32
    return %c0_i32, %c0_i32_0 : i32, i32
  }
  func.func @transform_6(%arg0: i32) -> (i32, i32) {
    %c0_i32 = arith.constant 0 : i32
    %c0_i32_0 = arith.constant 0 : i32
    %c0_i32_1 = arith.constant 0 : i32
    return %c0_i32, %c0_i32_0 : i32, i32
  }
  func.func @transform_7(%arg0: i32) -> (i32, i32) {
    %c0_i32 = arith.constant 0 : i32
    %c0_i32_0 = arith.constant 0 : i32
    %c0_i32_1 = arith.constant 0 : i32
    return %c0_i32, %c0_i32_0 : i32, i32
  }
  func.func @transform_8(%arg0: i32) -> (i32, i32) {
    %c0_i32 = arith.constant 0 : i32
    %c0_i32_0 = arith.constant 0 : i32
    %c0_i32_1 = arith.constant 0 : i32
    return %c0_i32, %c0_i32_0 : i32, i32
  }
  func.func @transform_9(%arg0: i32) -> (i32, i32) {
    %c0_i32 = arith.constant 0 : i32
    %c0_i32_0 = arith.constant 0 : i32
    %c0_i32_1 = arith.constant 0 : i32
    return %c0_i32, %c0_i32_0 : i32, i32
  }
  func.func @transform_10(%arg0: i32) -> (i32, i32) {
    %c0_i32 = arith.constant 0 : i32
    %c0_i32_0 = arith.constant 0 : i32
    %c0_i32_1 = arith.constant 0 : i32
    return %c0_i32, %c0_i32_0 : i32, i32
  }
  func.func @transform_11(%arg0: i32) -> (i32, i32, i32) {
    %c0_i32 = arith.constant 0 : i32
    %c0_i32_0 = arith.constant 0 : i32
    %c0_i32_1 = arith.constant 0 : i32
    return %arg0, %c0_i32, %c0_i32_0 : i32, i32, i32
  }
}

</mosaic_0001>

<llo_original>
// kernel: tpu_custom_call.1
$region0: #{tpu_custom_call.1}
  #allocation0 [shape = 'u32[]', space=smem, size = 0x4, offset = 0x4, fixed_abs, tag = 'smem constant byte address 0x4 - core index']
  #allocation1 [shape = 'u32[144,128]{1,0:T(1,128)}', space=vmem, size = 0x12000, scoped, tag = 'internal scratch']
  %s0 = inlined_call_operand.vmem [shape: bf16[2,22,22,4], index: 0, kind: input, shape index: {}]
  %s1 = inlined_call_operand.vmem [shape: bf16[4,8], index: 1, kind: input, shape index: {}]
  %s2 = inlined_call_operand.vmem [shape: bf16[36,8], index: 2, kind: input, shape index: {}]
  %s3 = inlined_call_operand.vmem [shape: bf16[36,8], index: 3, kind: input, shape index: {}]
  %s4 = inlined_call_operand.vmem [shape: bf16[36,8], index: 4, kind: input, shape index: {}]
  %s5 = inlined_call_operand.vmem [shape: f32[1,32], index: 5, kind: input, shape index: {}]
  %s6 = inlined_call_operand.vmem [shape: bf16[4,8], index: 6, kind: input, shape index: {}]
  %s7 = inlined_call_operand.vmem [shape: f32[1,8], index: 7, kind: input, shape index: {}]
  %s8 = inlined_call_operand.vmem [shape: bf16[4,32], index: 8, kind: input, shape index: {}]
  %s9 = inlined_call_operand.vmem [shape: bf16[4,8], index: 9, kind: input, shape index: {}]
  %s10 = inlined_call_operand.vmem [shape: f32[4,1], index: 10, kind: input, shape index: {}]
  %s11 = inlined_call_operand.hbm [shape: f32[2,4,256], index: 11, kind: output, shape index: {}]
  %s12 = sld [smem:[#allocation0]]
  $region77: #{tpu_custom_call.1} parent=0
    _
  %s14 = ssub.s32 1, %s12
  %s15 = scalar_select 0, %s14, %s12
  $region1: #{tpu_custom_call.1} parent=0
    #allocation2 [shape = 'u8[8192]{0}', space=vmem, size = 0x2000, scoped, tag = 'output window, operand 0']
    #allocation3 [shape = 's32[2]{0}', space=sflag, size = 0x8, scoped, tag = 'scoped memory for tpu_custom_call.1']
    %16 = vsyncpa [#allocation3], 0
    %s17 = scalar_lea.sflag [#allocation3], 1
    %18 = vsyncpa %s17, 0
    loop: start=0, step=1, limit=4
    $region2: #{tpu_custom_call.1} parent=1 // loop_pre_header
      _
    $region3: #{tpu_custom_call.1} parent=1 // loop_header
      %s20 = sphi 0, %s24
      %p21 = scmp.ge.s32.totalorder %s20, 4
      %s30 = sphi 0, %s32
      %s33 = sphi 0, %s30
      %s34 = sphi 0, %s33
      %s50 = sphi 0, %s34
      %s54 = sphi 0, %s54
      %s56 = sphi 0, %s54
      %s57 = sphi 0, %s56
      %s71 = sphi 0, %s57
      %s75 = sphi 0, %s75
      %s77 = sphi 0, %s75
      %s78 = sphi 0, %s77
      %s92 = sphi 0, %s78
      %s96 = sphi 0, %s96
      %s98 = sphi 0, %s96
      %s99 = sphi 0, %s98
      %s113 = sphi 0, %s99
      %s117 = sphi 0, %s117
      %s119 = sphi 0, %s117
      %s120 = sphi 0, %s119
      %s134 = sphi 0, %s120
      %s138 = sphi 0, %s138
      %s140 = sphi 0, %s138
      %s141 = sphi 0, %s140
      %s155 = sphi 0, %s141
      %s159 = sphi 0, %s159
      %s161 = sphi 0, %s159
      %s162 = sphi 0, %s161
      %s176 = sphi 0, %s162
      %s180 = sphi 0, %s180
      %s182 = sphi 0, %s180
      %s183 = sphi 0, %s182
      %s197 = sphi 0, %s183
      %s201 = sphi 0, %s201
      %s203 = sphi 0, %s201
      %s204 = sphi 0, %s203
      %s218 = sphi 0, %s204
      %s222 = sphi 0, %s222
      %s224 = sphi 0, %s222
      %s225 = sphi 0, %s224
      %s239 = sphi 0, %s225
      %s243 = sphi 0, %s243
      %s245 = sphi 0, %s243
      %s246 = sphi 0, %s245
      %s260 = sphi 0, %s246
      %s266 = sphi 0, %s268
      %s269 = sphi 0, %s266
      %s270 = sphi 0, %s269
      %s286 = sphi 0, %s270
    $region4: #{tpu_custom_call.1} parent=1 // loop_header_branch
      %23 = sbr.rel (%p21) target = $region8
    $region5: #{tpu_custom_call.1} parent=1 // loop_body
      %s25 = ssub.s32 %s20, 1
      %s26 = ssub.s32 %s20, 2
      %s27 = sadd.s32 %s20, 1
      %s28 = ssub.s32 %s20, %s27
      %p29 = scmp.eq.s32.totalorder %s28, 0
      %s31 = sadd.s32 %s30, 1
      %s32 = scalar_select %p29, %s30, %s31
      %p35 = pneg %p29
      %p36 = scmp.eq.s32.totalorder %s20, 1
      %p37 = por %p35, %p36
      %p38 = scmp.ne.s32.totalorder %s30, %s33
      %p39 = scmp.eq.s32.totalorder %s20, 0
      %p40 = por %p38, %p39
      %p41 = scmp.ne.s32.totalorder %s30, %s33
      %p42 = scmp.eq.s32.totalorder %s25, 1
      %p43 = por %p41, %p42
      %p44 = scmp.ne.s32.totalorder %s33, %s34
      %p45 = scmp.eq.s32.totalorder %s25, 0
      %p46 = por %p44, %p45
      %p47 = scmp.ne.s32.totalorder %s33, %s34
      %p48 = scmp.eq.s32.totalorder %s26, 1
      %p49 = por %p47, %p48
      %p51 = scmp.ne.s32.totalorder %s34, %s50
      %p52 = scmp.eq.s32.totalorder %s26, 0
      %p53 = por %p51, %p52
      %s55 = sadd.s32 %s54, 1
      %p58 = scmp.eq.s32.totalorder %s20, 1
      %p59 = scmp.ne.s32.totalorder %s54, %s56
      %p60 = scmp.eq.s32.totalorder %s20, 0
      %p61 = por %p59, %p60
      %p62 = scmp.ne.s32.totalorder %s54, %s56
      %p63 = scmp.eq.s32.totalorder %s25, 1
      %p64 = por %p62, %p63
      %p65 = scmp.ne.s32.totalorder %s56, %s57
      %p66 = scmp.eq.s32.totalorder %s25, 0
      %p67 = por %p65, %p66
      %p68 = scmp.ne.s32.totalorder %s56, %s57
      %p69 = scmp.eq.s32.totalorder %s26, 1
      %p70 = por %p68, %p69
      %p72 = scmp.ne.s32.totalorder %s57, %s71
      %p73 = scmp.eq.s32.totalorder %s26, 0
      %p74 = por %p72, %p73
      %s76 = sadd.s32 %s75, 1
      %p79 = scmp.eq.s32.totalorder %s20, 1
      %p80 = scmp.ne.s32.totalorder %s75, %s77
      %p81 = scmp.eq.s32.totalorder %s20, 0
      %p82 = por %p80, %p81
      %p83 = scmp.ne.s32.totalorder %s75, %s77
      %p84 = scmp.eq.s32.totalorder %s25, 1
      %p85 = por %p83, %p84
      %p86 = scmp.ne.s32.totalorder %s77, %s78
      %p87 = scmp.eq.s32.totalorder %s25, 0
      %p88 = por %p86, %p87
      %p89 = scmp.ne.s32.totalorder %s77, %s78
      %p90 = scmp.eq.s32.totalorder %s26, 1
      %p91 = por %p89, %p90
      %p93 = scmp.ne.s32.totalorder %s78, %s92
      %p94 = scmp.eq.s32.totalorder %s26, 0
      %p95 = por %p93, %p94
      %s97 = sadd.s32 %s96, 1
      %p100 = scmp.eq.s32.totalorder %s20, 1
      %p101 = scmp.ne.s32.totalorder %s96, %s98
      %p102 = scmp.eq.s32.totalorder %s20, 0
      %p103 = por %p101, %p102
      %p104 = scmp.ne.s32.totalorder %s96, %s98
      %p105 = scmp.eq.s32.totalorder %s25, 1
      %p106 = por %p104, %p105
      %p107 = scmp.ne.s32.totalorder %s98, %s99
      %p108 = scmp.eq.s32.totalorder %s25, 0
      %p109 = por %p107, %p108
      %p110 = scmp.ne.s32.totalorder %s98, %s99
      %p111 = scmp.eq.s32.totalorder %s26, 1
      %p112 = por %p110, %p111
      %p114 = scmp.ne.s32.totalorder %s99, %s113
      %p115 = scmp.eq.s32.totalorder %s26, 0
      %p116 = por %p114, %p115
      %s118 = sadd.s32 %s117, 1
      %p121 = scmp.eq.s32.totalorder %s20, 1
      %p122 = scmp.ne.s32.totalorder %s117, %s119
      %p123 = scmp.eq.s32.totalorder %s20, 0
      %p124 = por %p122, %p123
      %p125 = scmp.ne.s32.totalorder %s117, %s119
      %p126 = scmp.eq.s32.totalorder %s25, 1
      %p127 = por %p125, %p126
      %p128 = scmp.ne.s32.totalorder %s119, %s120
      %p129 = scmp.eq.s32.totalorder %s25, 0
      %p130 = por %p128, %p129
      %p131 = scmp.ne.s32.totalorder %s119, %s120
      %p132 = scmp.eq.s32.totalorder %s26, 1
      %p133 = por %p131, %p132
      %p135 = scmp.ne.s32.totalorder %s120, %s134
      %p136 = scmp.eq.s32.totalorder %s26, 0
      %p137 = por %p135, %p136
      %s139 = sadd.s32 %s138, 1
      %p142 = scmp.eq.s32.totalorder %s20, 1
      %p143 = scmp.ne.s32.totalorder %s138, %s140
      %p144 = scmp.eq.s32.totalorder %s20, 0
      %p145 = por %p143, %p144
      %p146 = scmp.ne.s32.totalorder %s138, %s140
      %p147 = scmp.eq.s32.totalorder %s25, 1
      %p148 = por %p146, %p147
      %p149 = scmp.ne.s32.totalorder %s140, %s141
      %p150 = scmp.eq.s32.totalorder %s25, 0
      %p151 = por %p149, %p150
      %p152 = scmp.ne.s32.totalorder %s140, %s141
      %p153 = scmp.eq.s32.totalorder %s26, 1
      %p154 = por %p152, %p153
      %p156 = scmp.ne.s32.totalorder %s141, %s155
      %p157 = scmp.eq.s32.totalorder %s26, 0
      %p158 = por %p156, %p157
      %s160 = sadd.s32 %s159, 1
      %p163 = scmp.eq.s32.totalorder %s20, 1
      %p164 = scmp.ne.s32.totalorder %s159, %s161
      %p165 = scmp.eq.s32.totalorder %s20, 0
      %p166 = por %p164, %p165
      %p167 = scmp.ne.s32.totalorder %s159, %s161
      %p168 = scmp.eq.s32.totalorder %s25, 1
      %p169 = por %p167, %p168
      %p170 = scmp.ne.s32.totalorder %s161, %s162
      %p171 = scmp.eq.s32.totalorder %s25, 0
      %p172 = por %p170, %p171
      %p173 = scmp.ne.s32.totalorder %s161, %s162
      %p174 = scmp.eq.s32.totalorder %s26, 1
      %p175 = por %p173, %p174
      %p177 = scmp.ne.s32.totalorder %s162, %s176
      %p178 = scmp.eq.s32.totalorder %s26, 0
      %p179 = por %p177, %p178
      %s181 = sadd.s32 %s180, 1
      %p184 = scmp.eq.s32.totalorder %s20, 1
      %p185 = scmp.ne.s32.totalorder %s180, %s182
      %p186 = scmp.eq.s32.totalorder %s20, 0
      %p187 = por %p185, %p186
      %p188 = scmp.ne.s32.totalorder %s180, %s182
      %p189 = scmp.eq.s32.totalorder %s25, 1
      %p190 = por %p188, %p189
      %p191 = scmp.ne.s32.totalorder %s182, %s183
      %p192 = scmp.eq.s32.totalorder %s25, 0
      %p193 = por %p191, %p192
      %p194 = scmp.ne.s32.totalorder %s182, %s183
      %p195 = scmp.eq.s32.totalorder %s26, 1
      %p196 = por %p194, %p195
      %p198 = scmp.ne.s32.totalorder %s183, %s197
      %p199 = scmp.eq.s32.totalorder %s26, 0
      %p200 = por %p198, %p199
      %s202 = sadd.s32 %s201, 1
      %p205 = scmp.eq.s32.totalorder %s20, 1
      %p206 = scmp.ne.s32.totalorder %s201, %s203
      %p207 = scmp.eq.s32.totalorder %s20, 0
      %p208 = por %p206, %p207
      %p209 = scmp.ne.s32.totalorder %s201, %s203
      %p210 = scmp.eq.s32.totalorder %s25, 1
      %p211 = por %p209, %p210
      %p212 = scmp.ne.s32.totalorder %s203, %s204
      %p213 = scmp.eq.s32.totalorder %s25, 0
      %p214 = por %p212, %p213
      %p215 = scmp.ne.s32.totalorder %s203, %s204
      %p216 = scmp.eq.s32.totalorder %s26, 1
      %p217 = por %p215, %p216
      %p219 = scmp.ne.s32.totalorder %s204, %s218
      %p220 = scmp.eq.s32.totalorder %s26, 0
      %p221 = por %p219, %p220
      %s223 = sadd.s32 %s222, 1
      %p226 = scmp.eq.s32.totalorder %s20, 1
      %p227 = scmp.ne.s32.totalorder %s222, %s224
      %p228 = scmp.eq.s32.totalorder %s20, 0
      %p229 = por %p227, %p228
      %p230 = scmp.ne.s32.totalorder %s222, %s224
      %p231 = scmp.eq.s32.totalorder %s25, 1
      %p232 = por %p230, %p231
      %p233 = scmp.ne.s32.totalorder %s224, %s225
      %p234 = scmp.eq.s32.totalorder %s25, 0
      %p235 = por %p233, %p234
      %p236 = scmp.ne.s32.totalorder %s224, %s225
      %p237 = scmp.eq.s32.totalorder %s26, 1
      %p238 = por %p236, %p237
      %p240 = scmp.ne.s32.totalorder %s225, %s239
      %p241 = scmp.eq.s32.totalorder %s26, 0
      %p242 = por %p240, %p241
      %s244 = sadd.s32 %s243, 1
      %p247 = scmp.eq.s32.totalorder %s20, 1
      %p248 = scmp.ne.s32.totalorder %s243, %s245
      %p249 = scmp.eq.s32.totalorder %s20, 0
      %p250 = por %p248, %p249
      %p251 = scmp.ne.s32.totalorder %s243, %s245
      %p252 = scmp.eq.s32.totalorder %s25, 1
      %p253 = por %p251, %p252
      %p254 = scmp.ne.s32.totalorder %s245, %s246
      %p255 = scmp.eq.s32.totalorder %s25, 0
      %p256 = por %p254, %p255
      %p257 = scmp.ne.s32.totalorder %s245, %s246
      %p258 = scmp.eq.s32.totalorder %s26, 1
      %p259 = por %p257, %p258
      %p261 = scmp.ne.s32.totalorder %s246, %s260
      %p262 = scmp.eq.s32.totalorder %s26, 0
      %p263 = por %p261, %p262
      %s264 = ssub.s32 %s20, %s27
      %p265 = scmp.eq.s32.totalorder %s264, 0
      %s267 = sadd.s32 %s266, 1
      %s268 = scalar_select %p265, %s266, %s267
      %p271 = pneg %p265
      %p272 = scmp.eq.s32.totalorder %s20, 1
      %p273 = por %p271, %p272
      %p274 = scmp.ne.s32.totalorder %s266, %s269
      %p275 = scmp.eq.s32.totalorder %s20, 0
      %p276 = por %p274, %p275
      %p277 = scmp.ne.s32.totalorder %s266, %s269
      %p278 = scmp.eq.s32.totalorder %s25, 1
      %p279 = por %p277, %p278
      %p280 = scmp.ne.s32.totalorder %s269, %s270
      %p281 = scmp.eq.s32.totalorder %s25, 0
      %p282 = por %p280, %p281
      %p283 = scmp.ne.s32.totalorder %s269, %s270
      %p284 = scmp.eq.s32.totalorder %s26, 1
      %p285 = por %p283, %p284
      %p287 = scmp.ne.s32.totalorder %s270, %s286
      %p288 = scmp.eq.s32.totalorder %s26, 0
      %p289 = por %p287, %p288
      %p290 = scmp.le.s32.totalorder 1, %s20
      %p291 = scmp.lt.s32.totalorder %s20, 3
      %p292 = pnand %p290, %p291
      %p293 = pneg %p292
      // Predicated region
      $region9: #{tpu_custom_call.1} parent=5 // pred_check
        _
      $region10: #{tpu_custom_call.1} parent=5 // pred_check_branch
        %295 = sbr.rel (%p292) target = $region12
      $region11: #{tpu_custom_call.1} parent=5 // pred_region
        %s296 = ssub.s32 %s20, 1
        // Predicated region
        $region13: #{tpu_custom_call.1} parent=11 // pred_check
          %p297 = pneg %p67
        $region14: #{tpu_custom_call.1} parent=11 // pred_check_branch
          %299 = sbr.rel (%p297) target = $region16
        $region15: #{tpu_custom_call.1} parent=11 // pred_region
          _
        $region16: #{tpu_custom_call.1} parent=11 // pred_fallthru
          _
        // Predicated region
        $region17: #{tpu_custom_call.1} parent=11 // pred_check
          %p300 = pneg %p88
        $region18: #{tpu_custom_call.1} parent=11 // pred_check_branch
          %302 = sbr.rel (%p300) target = $region20
        $region19: #{tpu_custom_call.1} parent=11 // pred_region
          _
        $region20: #{tpu_custom_call.1} parent=11 // pred_fallthru
          _
        // Predicated region
        $region21: #{tpu_custom_call.1} parent=11 // pred_check
          %p303 = pneg %p109
        $region22: #{tpu_custom_call.1} parent=11 // pred_check_branch
          %305 = sbr.rel (%p303) target = $region24
        $region23: #{tpu_custom_call.1} parent=11 // pred_region
          _
        $region24: #{tpu_custom_call.1} parent=11 // pred_fallthru
          _
        // Predicated region
        $region25: #{tpu_custom_call.1} parent=11 // pred_check
          %p306 = pneg %p130
        $region26: #{tpu_custom_call.1} parent=11 // pred_check_branch
          %308 = sbr.rel (%p306) target = $region28
        $region27: #{tpu_custom_call.1} parent=11 // pred_region
          _
        $region28: #{tpu_custom_call.1} parent=11 // pred_fallthru
          _
        // Predicated region
        $region29: #{tpu_custom_call.1} parent=11 // pred_check
          %p309 = pneg %p151
        $region30: #{tpu_custom_call.1} parent=11 // pred_check_branch
          %311 = sbr.rel (%p309) target = $region32
        $region31: #{tpu_custom_call.1} parent=11 // pred_region
          _
        $region32: #{tpu_custom_call.1} parent=11 // pred_fallthru
          _
        // Predicated region
        $region33: #{tpu_custom_call.1} parent=11 // pred_check
          %p312 = pneg %p172
        $region34: #{tpu_custom_call.1} parent=11 // pred_check_branch
          %314 = sbr.rel (%p312) target = $region36
        $region35: #{tpu_custom_call.1} parent=11 // pred_region
          _
        $region36: #{tpu_custom_call.1} parent=11 // pred_fallthru
          _
        // Predicated region
        $region37: #{tpu_custom_call.1} parent=11 // pred_check
          %p315 = pneg %p193
        $region38: #{tpu_custom_call.1} parent=11 // pred_check_branch
          %317 = sbr.rel (%p315) target = $region40
        $region39: #{tpu_custom_call.1} parent=11 // pred_region
          _
        $region40: #{tpu_custom_call.1} parent=11 // pred_fallthru
          _
        // Predicated region
        $region41: #{tpu_custom_call.1} parent=11 // pred_check
          %p318 = pneg %p214
        $region42: #{tpu_custom_call.1} parent=11 // pred_check_branch
          %320 = sbr.rel (%p318) target = $region44
        $region43: #{tpu_custom_call.1} parent=11 // pred_region
          _
        $region44: #{tpu_custom_call.1} parent=11 // pred_fallthru
          _
        // Predicated region
        $region45: #{tpu_custom_call.1} parent=11 // pred_check
          %p321 = pneg %p235
        $region46: #{tpu_custom_call.1} parent=11 // pred_check_branch
          %323 = sbr.rel (%p321) target = $region48
        $region47: #{tpu_custom_call.1} parent=11 // pred_region
          _
        $region48: #{tpu_custom_call.1} parent=11 // pred_fallthru
          _
        // Predicated region
        $region49: #{tpu_custom_call.1} parent=11 // pred_check
          %p324 = pneg %p256
        $region50: #{tpu_custom_call.1} parent=11 // pred_check_branch
          %326 = sbr.rel (%p324) target = $region52
        $region51: #{tpu_custom_call.1} parent=11 // pred_region
          _
        $region52: #{tpu_custom_call.1} parent=11 // pred_fallthru
          _
      $region12: #{tpu_custom_call.1} parent=5 // pred_fallthru
        _
      %p327 = scmp.lt.s32.totalorder %s20, 2
      // Predicated region
      $region53: #{tpu_custom_call.1} parent=5 // pred_check
        %p328 = pneg %p327
      $region54: #{tpu_custom_call.1} parent=5 // pred_check_branch
        %330 = sbr.rel (%p328) target = $region56
      $region55: #{tpu_custom_call.1} parent=5 // pred_region
        // Predicated region
        $region57: #{tpu_custom_call.1} parent=55 // pred_check
          %p331 = pneg %p40
        $region58: #{tpu_custom_call.1} parent=55 // pred_check_branch
          %333 = sbr.rel (%p331) target = $region60
        $region59: #{tpu_custom_call.1} parent=55 // pred_region
          %p334 = scmp.lt.s32.totalorder %s20, 1
          %s335 = scalar_select %p334, %s20, 1
          %s336 = smul.addr %s335, 66
          %s337 = smul.addr %s336, 4
          %s338 = scalar_lea.vmem %s0, %s337
        $region60: #{tpu_custom_call.1} parent=55 // pred_fallthru
          _
      $region56: #{tpu_custom_call.1} parent=5 // pred_fallthru
        _
      %p339 = scmp.le.s32.totalorder 1, %s20
      %p340 = scmp.lt.s32.totalorder %s20, 3
      %p341 = pnand %p339, %p340
      %p342 = pneg %p341
      // Predicated region
      $region61: #{tpu_custom_call.1} parent=5 // pred_check
        _
      $region62: #{tpu_custom_call.1} parent=5 // pred_check_branch
        %344 = sbr.rel (%p341) target = $region64
      $region63: #{tpu_custom_call.1} parent=5 // pred_region
        %s345 = ssub.s32 %s20, 1
        %p346 = scmp.lt.s32.totalorder %s25, 1
        %s347 = scalar_select %p346, %s25, 1
        %s348 = smul.addr %s347, 66
        %s349 = smul.addr %s348, 4
        %s350 = scalar_lea.vmem %s0, %s349
        %p351 = pneg %p46
        %p352 = pneg %p43
        %p353 = pneg %p67
        %p354 = pneg %p64
        %p355 = pneg %p88
        %p356 = pneg %p85
        %p357 = pneg %p109
        %p358 = pneg %p106
        %p359 = pneg %p130
        %p360 = pneg %p127
        %p361 = pneg %p151
        %p362 = pneg %p148
        %p363 = pneg %p172
        %p364 = pneg %p169
        %p365 = pneg %p193
        %p366 = pneg %p190
        %p367 = pneg %p214
        %p368 = pneg %p211
        %p369 = pneg %p235
        %p370 = pneg %p232
        %p371 = pneg %p256
        %p372 = pneg %p253
        %p373 = pneg %p282
        %p374 = pneg %p279
        %s375 = sand.u32 %s269, 1
        %s376 = scalar_lea.sflag [#allocation3], %s375
        %s377 = sand.u32 %s269, 1
        %s378 = smul.addr %s377, 8
        %s379 = scalar_lea.vmem [#allocation2], %s378
        %p380 = scmp.lt.s32.totalorder %s25, 1
        %s381 = scalar_select %p380, %s25, 1
        %s382 = smul.addr %s381, 66
        %s383 = smul.addr %s382, 4
        %s384 = scalar_lea.vmem %s0, %s383
        %v386 = vld [vmem:[%s384] sm:$0xf]
        %v387 = vld [vmem:[%s384 + $0x4] sm:$0xf]
        %v388 = vld [vmem:[%s384 + $0x8] sm:$0x7]
        %v389 = vld [vmem:[%s384 + $0xc] sm:$0xf]
        %v390 = vld [vmem:[%s384 + $0x10] sm:$0xf]
        %v391 = vld [vmem:[%s384 + $0x14] sm:$0x7]
        %v392 = vld [vmem:[%s384 + $0x18] sm:$0xf]
        %v393 = vld [vmem:[%s384 + $0x1c] sm:$0xf]
        %v394 = vld [vmem:[%s384 + $0x20] sm:$0x7]
        %v395 = vld [vmem:[%s384 + $0x24] sm:$0xf]
        %v396 = vld [vmem:[%s384 + $0x28] sm:$0xf]
        %v397 = vld [vmem:[%s384 + $0x2c] sm:$0x7]
        %v398 = vld [vmem:[%s384 + $0x30] sm:$0xf]
        %v399 = vld [vmem:[%s384 + $0x34] sm:$0xf]
        %v400 = vld [vmem:[%s384 + $0x38] sm:$0x7]
        %v401 = vld [vmem:[%s384 + $0x3c] sm:$0xf]
        %v402 = vld [vmem:[%s384 + $0x40] sm:$0xf]
        %v403 = vld [vmem:[%s384 + $0x44] sm:$0x7]
        %v404 = vld [vmem:[%s384 + $0x48] sm:$0xf]
        %v405 = vld [vmem:[%s384 + $0x4c] sm:$0xf]
        %v406 = vld [vmem:[%s384 + $0x50] sm:$0x7]
        %v407 = vld [vmem:[%s384 + $0x54] sm:$0xf]
        %v408 = vld [vmem:[%s384 + $0x58] sm:$0xf]
        %v409 = vld [vmem:[%s384 + $0x5c] sm:$0x7]
        %v410 = vld [vmem:[%s384 + $0x60] sm:$0xf]
        %v411 = vld [vmem:[%s384 + $0x64] sm:$0xf]
        %v412 = vld [vmem:[%s384 + $0x68] sm:$0x7]
        %v413 = vld [vmem:[%s384 + $0x6c] sm:$0xf]
        %v414 = vld [vmem:[%s384 + $0x70] sm:$0xf]
        %v415 = vld [vmem:[%s384 + $0x74] sm:$0x7]
        %v416 = vld [vmem:[%s384 + $0x78] sm:$0xf]
        %v417 = vld [vmem:[%s384 + $0x7c] sm:$0xf]
        %v418 = vld [vmem:[%s384 + $0x80] sm:$0x7]
        %v419 = vld [vmem:[%s384 + $0x84] sm:$0xf]
        %v420 = vld [vmem:[%s384 + $0x88] sm:$0xf]
        %v421 = vld [vmem:[%s384 + $0x8c] sm:$0x7]
        %v422 = vld [vmem:[%s384 + $0x90] sm:$0xf]
        %v423 = vld [vmem:[%s384 + $0x94] sm:$0xf]
        %v424 = vld [vmem:[%s384 + $0x98] sm:$0x7]
        %v425 = vld [vmem:[%s384 + $0x9c] sm:$0xf]
        %v426 = vld [vmem:[%s384 + $0xa0] sm:$0xf]
        %v427 = vld [vmem:[%s384 + $0xa4] sm:$0x7]
        %v428 = vld [vmem:[%s384 + $0xa8] sm:$0xf]
        %v429 = vld [vmem:[%s384 + $0xac] sm:$0xf]
        %v430 = vld [vmem:[%s384 + $0xb0] sm:$0x7]
        %v431 = vld [vmem:[%s384 + $0xb4] sm:$0xf]
        %v432 = vld [vmem:[%s384 + $0xb8] sm:$0xf]
        %v433 = vld [vmem:[%s384 + $0xbc] sm:$0x7]
        %v434 = vld [vmem:[%s384 + $0xc0] sm:$0xf]
        %v435 = vld [vmem:[%s384 + $0xc4] sm:$0xf]
        %v436 = vld [vmem:[%s384 + $0xc8] sm:$0x7]
        %v437 = vld [vmem:[%s384 + $0xcc] sm:$0xf]
        %v438 = vld [vmem:[%s384 + $0xd0] sm:$0xf]
        %v439 = vld [vmem:[%s384 + $0xd4] sm:$0x7]
        %v440 = vld [vmem:[%s384 + $0xd8] sm:$0xf]
        %v441 = vld [vmem:[%s384 + $0xdc] sm:$0xf]
        %v442 = vld [vmem:[%s384 + $0xe0] sm:$0x7]
        %v443 = vld [vmem:[%s384 + $0xe4] sm:$0xf]
        %v444 = vld [vmem:[%s384 + $0xe8] sm:$0xf]
        %v445 = vld [vmem:[%s384 + $0xec] sm:$0x7]
        %v446 = vld [vmem:[%s384 + $0xf0] sm:$0xf]
        %v447 = vld [vmem:[%s384 + $0xf4] sm:$0xf]
        %v448 = vld [vmem:[%s384 + $0xf8] sm:$0x7]
        %v449 = vld [vmem:[%s384 + $0xfc] sm:$0xf]
        %v450 = vld [vmem:[%s384 + $0x100] sm:$0xf]
        %v451 = vld [vmem:[%s384 + $0x104] sm:$0x7]
        %vm452 = vsmask.f32 2304
        %vm453 = vsmask.f32 6416
        %vm454 = vmor %vm452, %vm453
        %v456 = vshrl.u32 %v395, 16
        %v458 = vrot.slane %v456, 5
        %v459 = vshll.u32 %v395, 16
        %v461 = vrot.slane %v459, 6
        %v462 = vor.u32 %v458, %v461
        %v463 = vrot.slane %v462, 4
        %v465 = vshrl.u32 %v396, 16
        %v467 = vrot.slane %v465, 5
        %v468 = vshll.u32 %v396, 16
        %v470 = vrot.slane %v468, 6
        %v471 = vor.u32 %v467, %v470
        %v472 = vsel %vm454, %v463, %v471
        %v473 = vrot.slane %v471, 4
        %v475 = vshrl.u32 %v397, 16
        %v477 = vrot.slane %v475, 5
        %v478 = vshll.u32 %v397, 16
        %v480 = vrot.slane %v478, 6
        %v481 = vor.u32 %v477, %v480
        %v482 = vsel %vm454, %v473, %v481
        %v484 = vshrl.u32 %v398, 16
        %v486 = vrot.slane %v484, 5
        %v487 = vshll.u32 %v398, 16
        %v489 = vrot.slane %v487, 6
        %v490 = vor.u32 %v486, %v489
        %v491 = vrot.slane %v490, 4
        %v493 = vshrl.u32 %v399, 16
        %v495 = vrot.slane %v493, 5
        %v496 = vshll.u32 %v399, 16
        %v498 = vrot.slane %v496, 6
        %v499 = vor.u32 %v495, %v498
        %v500 = vsel %vm454, %v491, %v499
        %v501 = vrot.slane %v499, 4
        %v503 = vshrl.u32 %v400, 16
        %v505 = vrot.slane %v503, 5
        %v506 = vshll.u32 %v400, 16
        %v508 = vrot.slane %v506, 6
        %v509 = vor.u32 %v505, %v508
        %v510 = vsel %vm454, %v501, %v509
        %v512 = vshrl.u32 %v401, 16
        %v514 = vrot.slane %v512, 5
        %v515 = vshll.u32 %v401, 16
        %v517 = vrot.slane %v515, 6
        %v518 = vor.u32 %v514, %v517
        %v519 = vrot.slane %v518, 4
        %v521 = vshrl.u32 %v402, 16
        %v523 = vrot.slane %v521, 5
        %v524 = vshll.u32 %v402, 16
        %v526 = vrot.slane %v524, 6
        %v527 = vor.u32 %v523, %v526
        %v528 = vsel %vm454, %v519, %v527
        %v529 = vrot.slane %v527, 4
        %v531 = vshrl.u32 %v403, 16
        %v533 = vrot.slane %v531, 5
        %v534 = vshll.u32 %v403, 16
        %v536 = vrot.slane %v534, 6
        %v537 = vor.u32 %v533, %v536
        %v538 = vsel %vm454, %v529, %v537
        %v540 = vshrl.u32 %v404, 16
        %v542 = vrot.slane %v540, 5
        %v543 = vshll.u32 %v404, 16
        %v545 = vrot.slane %v543, 6
        %v546 = vor.u32 %v542, %v545
        %v547 = vrot.slane %v546, 4
        %v549 = vshrl.u32 %v405, 16
        %v551 = vrot.slane %v549, 5
        %v552 = vshll.u32 %v405, 16
        %v554 = vrot.slane %v552, 6
        %v555 = vor.u32 %v551, %v554
        %v556 = vsel %vm454, %v547, %v555
        %v557 = vrot.slane %v555, 4
        %v559 = vshrl.u32 %v406, 16
        %v561 = vrot.slane %v559, 5
        %v562 = vshll.u32 %v406, 16
        %v564 = vrot.slane %v562, 6
        %v565 = vor.u32 %v561, %v564
        %v566 = vsel %vm454, %v557, %v565
        %v568 = vshrl.u32 %v407, 16
        %v570 = vrot.slane %v568, 5
        %v571 = vshll.u32 %v407, 16
        %v573 = vrot.slane %v571, 6
        %v574 = vor.u32 %v570, %v573
        %v575 = vrot.slane %v574, 4
        %v577 = vshrl.u32 %v408, 16
        %v579 = vrot.slane %v577, 5
        %v580 = vshll.u32 %v408, 16
        %v582 = vrot.slane %v580, 6
        %v583 = vor.u32 %v579, %v582
        %v584 = vsel %vm454, %v575, %v583
        %v585 = vrot.slane %v583, 4
        %v587 = vshrl.u32 %v409, 16
        %v589 = vrot.slane %v587, 5
        %v590 = vshll.u32 %v409, 16
        %v592 = vrot.slane %v590, 6
        %v593 = vor.u32 %v589, %v592
        %v594 = vsel %vm454, %v585, %v593
        %v596 = vshrl.u32 %v410, 16
        %v598 = vrot.slane %v596, 5
        %v599 = vshll.u32 %v410, 16
        %v601 = vrot.slane %v599, 6
        %v602 = vor.u32 %v598, %v601
        %v603 = vrot.slane %v602, 4
        %v605 = vshrl.u32 %v411, 16
        %v607 = vrot.slane %v605, 5
        %v608 = vshll.u32 %v411, 16
        %v610 = vrot.slane %v608, 6
        %v611 = vor.u32 %v607, %v610
        %v612 = vsel %vm454, %v603, %v611
        %v613 = vrot.slane %v611, 4
        %v615 = vshrl.u32 %v412, 16
        %v617 = vrot.slane %v615, 5
        %v618 = vshll.u32 %v412, 16
        %v620 = vrot.slane %v618, 6
        %v621 = vor.u32 %v617, %v620
        %v622 = vsel %vm454, %v613, %v621
        %v624 = vshrl.u32 %v413, 16
        %v626 = vrot.slane %v624, 5
        %v627 = vshll.u32 %v413, 16
        %v629 = vrot.slane %v627, 6
        %v630 = vor.u32 %v626, %v629
        %v631 = vrot.slane %v630, 4
        %v633 = vshrl.u32 %v414, 16
        %v635 = vrot.slane %v633, 5
        %v636 = vshll.u32 %v414, 16
        %v638 = vrot.slane %v636, 6
        %v639 = vor.u32 %v635, %v638
        %v640 = vsel %vm454, %v631, %v639
        %v641 = vrot.slane %v639, 4
        %v643 = vshrl.u32 %v415, 16
        %v645 = vrot.slane %v643, 5
        %v646 = vshll.u32 %v415, 16
        %v648 = vrot.slane %v646, 6
        %v649 = vor.u32 %v645, %v648
        %v650 = vsel %vm454, %v641, %v649
        %v652 = vshrl.u32 %v416, 16
        %v654 = vrot.slane %v652, 5
        %v655 = vshll.u32 %v416, 16
        %v657 = vrot.slane %v655, 6
        %v658 = vor.u32 %v654, %v657
        %v659 = vrot.slane %v658, 4
        %v661 = vshrl.u32 %v417, 16
        %v663 = vrot.slane %v661, 5
        %v664 = vshll.u32 %v417, 16
        %v666 = vrot.slane %v664, 6
        %v667 = vor.u32 %v663, %v666
        %v668 = vsel %vm454, %v659, %v667
        %v669 = vrot.slane %v667, 4
        %v671 = vshrl.u32 %v418, 16
        %v673 = vrot.slane %v671, 5
        %v674 = vshll.u32 %v418, 16
        %v676 = vrot.slane %v674, 6
        %v677 = vor.u32 %v673, %v676
        %v678 = vsel %vm454, %v669, %v677
        %v680 = vshrl.u32 %v419, 16
        %v682 = vrot.slane %v680, 5
        %v683 = vshll.u32 %v419, 16
        %v685 = vrot.slane %v683, 6
        %v686 = vor.u32 %v682, %v685
        %v687 = vrot.slane %v686, 4
        %v689 = vshrl.u32 %v420, 16
        %v691 = vrot.slane %v689, 5
        %v692 = vshll.u32 %v420, 16
        %v694 = vrot.slane %v692, 6
        %v695 = vor.u32 %v691, %v694
        %v696 = vsel %vm454, %v687, %v695
        %v697 = vrot.slane %v695, 4
        %v699 = vshrl.u32 %v421, 16
        %v701 = vrot.slane %v699, 5
        %v702 = vshll.u32 %v421, 16
        %v704 = vrot.slane %v702, 6
        %v705 = vor.u32 %v701, %v704
        %v706 = vsel %vm454, %v697, %v705
        %v708 = vshrl.u32 %v422, 16
        %v710 = vrot.slane %v708, 5
        %v711 = vshll.u32 %v422, 16
        %v713 = vrot.slane %v711, 6
        %v714 = vor.u32 %v710, %v713
        %v715 = vrot.slane %v714, 4
        %v717 = vshrl.u32 %v423, 16
        %v719 = vrot.slane %v717, 5
        %v720 = vshll.u32 %v423, 16
        %v722 = vrot.slane %v720, 6
        %v723 = vor.u32 %v719, %v722
        %v724 = vsel %vm454, %v715, %v723
        %v725 = vrot.slane %v723, 4
        %v727 = vshrl.u32 %v424, 16
        %v729 = vrot.slane %v727, 5
        %v730 = vshll.u32 %v424, 16
        %v732 = vrot.slane %v730, 6
        %v733 = vor.u32 %v729, %v732
        %v734 = vsel %vm454, %v725, %v733
        %v736 = vshrl.u32 %v425, 16
        %v738 = vrot.slane %v736, 5
        %v739 = vshll.u32 %v425, 16
        %v741 = vrot.slane %v739, 6
        %v742 = vor.u32 %v738, %v741
        %v743 = vrot.slane %v742, 4
        %v745 = vshrl.u32 %v426, 16
        %v747 = vrot.slane %v745, 5
        %v748 = vshll.u32 %v426, 16
        %v750 = vrot.slane %v748, 6
        %v751 = vor.u32 %v747, %v750
        %v752 = vsel %vm454, %v743, %v751
        %v753 = vrot.slane %v751, 4
        %v755 = vshrl.u32 %v427, 16
        %v757 = vrot.slane %v755, 5
        %v758 = vshll.u32 %v427, 16
        %v760 = vrot.slane %v758, 6
        %v761 = vor.u32 %v757, %v760
        %v762 = vsel %vm454, %v753, %v761
        %v764 = vshrl.u32 %v428, 16
        %v766 = vrot.slane %v764, 5
        %v767 = vshll.u32 %v428, 16
        %v769 = vrot.slane %v767, 6
        %v770 = vor.u32 %v766, %v769
        %v771 = vrot.slane %v770, 4
        %v773 = vshrl.u32 %v429, 16
        %v775 = vrot.slane %v773, 5
        %v776 = vshll.u32 %v429, 16
        %v778 = vrot.slane %v776, 6
        %v779 = vor.u32 %v775, %v778
        %v780 = vsel %vm454, %v771, %v779
        %v781 = vrot.slane %v779, 4
        %v783 = vshrl.u32 %v430, 16
        %v785 = vrot.slane %v783, 5
        %v786 = vshll.u32 %v430, 16
        %v788 = vrot.slane %v786, 6
        %v789 = vor.u32 %v785, %v788
        %v790 = vsel %vm454, %v781, %v789
        %v792 = vshrl.u32 %v431, 16
        %v794 = vrot.slane %v792, 5
        %v795 = vshll.u32 %v431, 16
        %v797 = vrot.slane %v795, 6
        %v798 = vor.u32 %v794, %v797
        %v799 = vrot.slane %v798, 4
        %v801 = vshrl.u32 %v432, 16
        %v803 = vrot.slane %v801, 5
        %v804 = vshll.u32 %v432, 16
        %v806 = vrot.slane %v804, 6
        %v807 = vor.u32 %v803, %v806
        %v808 = vsel %vm454, %v799, %v807
        %v809 = vrot.slane %v807, 4
        %v811 = vshrl.u32 %v433, 16
        %v813 = vrot.slane %v811, 5
        %v814 = vshll.u32 %v433, 16
        %v816 = vrot.slane %v814, 6
        %v817 = vor.u32 %v813, %v816
        %v818 = vsel %vm454, %v809, %v817
        %v820 = vshrl.u32 %v434, 16
        %v822 = vrot.slane %v820, 5
        %v823 = vshll.u32 %v434, 16
        %v825 = vrot.slane %v823, 6
        %v826 = vor.u32 %v822, %v825
        %v827 = vrot.slane %v826, 4
        %v829 = vshrl.u32 %v435, 16
        %v831 = vrot.slane %v829, 5
        %v832 = vshll.u32 %v435, 16
        %v834 = vrot.slane %v832, 6
        %v835 = vor.u32 %v831, %v834
        %v836 = vsel %vm454, %v827, %v835
        %v837 = vrot.slane %v835, 4
        %v839 = vshrl.u32 %v436, 16
        %v841 = vrot.slane %v839, 5
        %v842 = vshll.u32 %v436, 16
        %v844 = vrot.slane %v842, 6
        %v845 = vor.u32 %v841, %v844
        %v846 = vsel %vm454, %v837, %v845
        %v848 = vshrl.u32 %v437, 16
        %v850 = vrot.slane %v848, 5
        %v851 = vshll.u32 %v437, 16
        %v853 = vrot.slane %v851, 6
        %v854 = vor.u32 %v850, %v853
        %v855 = vrot.slane %v854, 4
        %v857 = vshrl.u32 %v438, 16
        %v859 = vrot.slane %v857, 5
        %v860 = vshll.u32 %v438, 16
        %v862 = vrot.slane %v860, 6
        %v863 = vor.u32 %v859, %v862
        %v864 = vsel %vm454, %v855, %v863
        %v865 = vrot.slane %v863, 4
        %v867 = vshrl.u32 %v439, 16
        %v869 = vrot.slane %v867, 5
        %v870 = vshll.u32 %v439, 16
        %v872 = vrot.slane %v870, 6
        %v873 = vor.u32 %v869, %v872
        %v874 = vsel %vm454, %v865, %v873
        %v876 = vshrl.u32 %v440, 16
        %v878 = vrot.slane %v876, 5
        %v879 = vshll.u32 %v440, 16
        %v881 = vrot.slane %v879, 6
        %v882 = vor.u32 %v878, %v881
        %v883 = vrot.slane %v882, 4
        %v885 = vshrl.u32 %v441, 16
        %v887 = vrot.slane %v885, 5
        %v888 = vshll.u32 %v441, 16
        %v890 = vrot.slane %v888, 6
        %v891 = vor.u32 %v887, %v890
        %v892 = vsel %vm454, %v883, %v891
        %v893 = vrot.slane %v891, 4
        %v895 = vshrl.u32 %v442, 16
        %v897 = vrot.slane %v895, 5
        %v898 = vshll.u32 %v442, 16
        %v900 = vrot.slane %v898, 6
        %v901 = vor.u32 %v897, %v900
        %v902 = vsel %vm454, %v893, %v901
        %v935 = vld [vmem:[%s1] sm:$0x3]
        %v936 = vunpack.c.l.b16 %v472
        %v937 = vunpack.c.l.b16 %v482
        %v938 = vunpack.c.l.b16 %v500
        %v939 = vunpack.c.l.b16 %v510
        %v940 = vunpack.c.l.b16 %v528
        %v941 = vunpack.c.l.b16 %v538
        %v942 = vunpack.c.l.b16 %v556
        %v943 = vunpack.c.l.b16 %v566
        %v944 = vunpack.c.l.b16 %v584
        %v945 = vunpack.c.l.b16 %v594
        %v946 = vunpack.c.l.b16 %v612
        %v947 = vunpack.c.l.b16 %v622
        %v948 = vunpack.c.l.b16 %v640
        %v949 = vunpack.c.l.b16 %v650
        %v950 = vunpack.c.l.b16 %v668
        %v951 = vunpack.c.l.b16 %v678
        %v952 = vunpack.c.l.b16 %v696
        %v953 = vunpack.c.l.b16 %v706
        %v954 = vunpack.c.l.b16 %v724
        %v955 = vunpack.c.l.b16 %v734
        %v956 = vunpack.c.l.b16 %v752
        %v957 = vunpack.c.l.b16 %v762
        %v958 = vunpack.c.l.b16 %v780
        %v959 = vunpack.c.l.b16 %v790
        %v960 = vunpack.c.l.b16 %v808
        %v961 = vunpack.c.l.b16 %v818
        %v962 = vunpack.c.l.b16 %v836
        %v963 = vunpack.c.l.b16 %v846
        %v964 = vunpack.c.l.b16 %v864
        %v965 = vunpack.c.l.b16 %v874
        %v966 = vunpack.c.l.b16 %v892
        %v967 = vunpack.c.l.b16 %v902
        %v968 = vpack.c.b16 %v937, %v936
        %v969 = vpack.c.b16 %v939, %v938
        %v970 = vpack.c.b16 %v941, %v940
        %v971 = vpack.c.b16 %v943, %v942
        %v972 = vpack.c.b16 %v945, %v944
        %v973 = vpack.c.b16 %v947, %v946
        %v974 = vpack.c.b16 %v949, %v948
        %v975 = vpack.c.b16 %v951, %v950
        %v976 = vpack.c.b16 %v953, %v952
        %v977 = vpack.c.b16 %v955, %v954
        %v978 = vpack.c.b16 %v957, %v956
        %v979 = vpack.c.b16 %v959, %v958
        %v980 = vpack.c.b16 %v961, %v960
        %v981 = vpack.c.b16 %v963, %v962
        %v982 = vpack.c.b16 %v965, %v964
        %v983 = vpack.c.b16 %v967, %v966
        %vm984 = vcmask 31744
        %v986 = vsel %vm984, %v968, 0
        %v989 = vsel %vm984, %v969, 0
        %v992 = vsel %vm984, %v970, 0
        %v995 = vsel %vm984, %v971, 0
        %v998 = vsel %vm984, %v972, 0
        %v1001 = vsel %vm984, %v973, 0
        %v1004 = vsel %vm984, %v974, 0
        %v1007 = vsel %vm984, %v975, 0
        %v1010 = vsel %vm984, %v976, 0
        %v1013 = vsel %vm984, %v977, 0
        %v1016 = vsel %vm984, %v978, 0
        %v1019 = vsel %vm984, %v979, 0
        %v1022 = vsel %vm984, %v980, 0
        %v1025 = vsel %vm984, %v981, 0
        %v1028 = vsel %vm984, %v982, 0
        %v1031 = vsel %vm984, %v983, 0
        %vm1033 = vcmask 1041408
        %v1035 = vsel %vm1033, %v935, 0
        %1037 = vmatprep.subr.bf16.mxu0 0
        %1038 = vmatpush1.bf16.msra.mxu0 %v1035
        %1039 = vmatprep.subr.bf16.mxu0 0
        %1040 = vmatpush1.bf16.msra.mxu0 0
        %1041 = vmatprep.subr.bf16.mxu0 0
        %1042 = vmatpush1.bf16.msra.mxu0 0
        %1043 = vmatprep.subr.bf16.mxu0 0
        %1044 = vmatpush1.bf16.msra.mxu0 0
        %1045 = vmatprep.subr.bf16.mxu0 0
        %1046 = vmatpush1.bf16.msra.mxu0 0
        %1047 = vmatprep.subr.bf16.mxu0 0
        %1048 = vmatpush1.bf16.msra.mxu0 0
        %1049 = vmatprep.subr.bf16.mxu0 0
        %1050 = vmatpush1.bf16.msra.mxu0 0
        %1051 = vmatprep.subr.bf16.mxu0 0
        %1052 = vmatpush1.bf16.msra.mxu0 0
        %1053 = vmatprep.subr.bf16.mxu0 0
        %1054 = vmatpush1.bf16.msra.mxu0 0
        %1055 = vmatprep.subr.bf16.mxu0 0
        %1056 = vmatpush1.bf16.msra.mxu0 0
        %1057 = vmatprep.subr.bf16.mxu0 0
        %1058 = vmatpush1.bf16.msra.mxu0 0
        %1059 = vmatprep.subr.bf16.mxu0 0
        %1060 = vmatpush1.bf16.msra.mxu0 0
        %1061 = vmatprep.subr.bf16.mxu0 0
        %1062 = vmatpush1.bf16.msra.mxu0 0
        %1063 = vmatprep.subr.bf16.mxu0 0
        %1064 = vmatpush1.bf16.msra.mxu0 0
        %1065 = vmatprep.subr.bf16.mxu0 0
        %1066 = vmatpush1.bf16.msra.mxu0 0
        %1067 = vmatprep.subr.bf16.mxu0 0
        %1068 = vmatpush1.bf16.msra.mxu0 0
        %1069 = vmatprep.mubr.bf16.mxu0 0
        %1070 = vmatmul.mubr.bf16.gmra.mrb[0].mxu0 %v986
        %v1071 = vpop.f32.mrb[0].mxu0
        %v1072 = vadd.f32 0.0, %v1071
        %v1073 = vpop.f32.mrb[0].mxu0
        %v1074 = vpop.f32.mrb[0].mxu0
        %v1075 = vadd.f32 0.0, %v1074
        %v1076 = vpop.f32.mrb[0].mxu0
        %1077 = vmatprep.mubr.bf16.mxu0 0
        %1078 = vmatmul.mubr.bf16.gmra.mrb[0].mxu0 %v989
        %v1079 = vpop.f32.mrb[0].mxu0
        %v1080 = vadd.f32 0.0, %v1079
        %v1081 = vpop.f32.mrb[0].mxu0
        %v1082 = vpop.f32.mrb[0].mxu0
        %v1083 = vadd.f32 0.0, %v1082
        %v1084 = vpop.f32.mrb[0].mxu0
        %1085 = vmatprep.mubr.bf16.mxu0 0
        %1086 = vmatmul.mubr.bf16.gmra.mrb[0].mxu0 %v992
        %v1087 = vpop.f32.mrb[0].mxu0
        %v1088 = vadd.f32 0.0, %v1087
        %v1089 = vpop.f32.mrb[0].mxu0
        %v1090 = vpop.f32.mrb[0].mxu0
        %v1091 = vadd.f32 0.0, %v1090
        %v1092 = vpop.f32.mrb[0].mxu0
        %1093 = vmatprep.mubr.bf16.mxu0 0
        %1094 = vmatmul.mubr.bf16.gmra.mrb[0].mxu0 %v995
        %v1095 = vpop.f32.mrb[0].mxu0
        %v1096 = vadd.f32 0.0, %v1095
        %v1097 = vpop.f32.mrb[0].mxu0
        %v1098 = vpop.f32.mrb[0].mxu0
        %v1099 = vadd.f32 0.0, %v1098
        %v1100 = vpop.f32.mrb[0].mxu0
        %1101 = vmatprep.mubr.bf16.mxu0 0
        %1102 = vmatmul.mubr.bf16.gmra.mrb[0].mxu0 %v998
        %v1103 = vpop.f32.mrb[0].mxu0
        %v1104 = vadd.f32 0.0, %v1103
        %v1105 = vpop.f32.mrb[0].mxu0
        %v1106 = vpop.f32.mrb[0].mxu0
        %v1107 = vadd.f32 0.0, %v1106
        %v1108 = vpop.f32.mrb[0].mxu0
        %1109 = vmatprep.mubr.bf16.mxu0 0
        %1110 = vmatmul.mubr.bf16.gmra.mrb[0].mxu0 %v1001
        %v1111 = vpop.f32.mrb[0].mxu0
        %v1112 = vadd.f32 0.0, %v1111
        %v1113 = vpop.f32.mrb[0].mxu0
        %v1114 = vpop.f32.mrb[0].mxu0
        %v1115 = vadd.f32 0.0, %v1114
        %v1116 = vpop.f32.mrb[0].mxu0
        %1117 = vmatprep.mubr.bf16.mxu0 0
        %1118 = vmatmul.mubr.bf16.gmra.mrb[0].mxu0 %v1004
        %v1119 = vpop.f32.mrb[0].mxu0
        %v1120 = vadd.f32 0.0, %v1119
        %v1121 = vpop.f32.mrb[0].mxu0
        %v1122 = vpop.f32.mrb[0].mxu0
        %v1123 = vadd.f32 0.0, %v1122
        %v1124 = vpop.f32.mrb[0].mxu0
        %1125 = vmatprep.mubr.bf16.mxu0 0
        %1126 = vmatmul.mubr.bf16.gmra.mrb[0].mxu0 %v1007
        %v1127 = vpop.f32.mrb[0].mxu0
        %v1128 = vadd.f32 0.0, %v1127
        %v1129 = vpop.f32.mrb[0].mxu0
        %v1130 = vpop.f32.mrb[0].mxu0
        %v1131 = vadd.f32 0.0, %v1130
        %v1132 = vpop.f32.mrb[0].mxu0
        %1133 = vmatprep.mubr.bf16.mxu0 0
        %1134 = vmatmul.mubr.bf16.gmra.mrb[0].mxu0 %v1010
        %v1135 = vpop.f32.mrb[0].mxu0
        %v1136 = vadd.f32 0.0, %v1135
        %v1137 = vpop.f32.mrb[0].mxu0
        %v1138 = vpop.f32.mrb[0].mxu0
        %v1139 = vadd.f32 0.0, %v1138
        %v1140 = vpop.f32.mrb[0].mxu0
        %1141 = vmatprep.mubr.bf16.mxu0 0
        %1142 = vmatmul.mubr.bf16.gmra.mrb[0].mxu0 %v1013
        %v1143 = vpop.f32.mrb[0].mxu0
        %v1144 = vadd.f32 0.0, %v1143
        %v1145 = vpop.f32.mrb[0].mxu0
        %v1146 = vpop.f32.mrb[0].mxu0
        %v1147 = vadd.f32 0.0, %v1146
        %v1148 = vpop.f32.mrb[0].mxu0
        %1149 = vmatprep.mubr.bf16.mxu0 0
        %1150 = vmatmul.mubr.bf16.gmra.mrb[0].mxu0 %v1016
        %v1151 = vpop.f32.mrb[0].mxu0
        %v1152 = vadd.f32 0.0, %v1151
        %v1153 = vpop.f32.mrb[0].mxu0
        %v1154 = vpop.f32.mrb[0].mxu0
        %v1155 = vadd.f32 0.0, %v1154
        %v1156 = vpop.f32.mrb[0].mxu0
        %1157 = vmatprep.mubr.bf16.mxu0 0
        %1158 = vmatmul.mubr.bf16.gmra.mrb[0].mxu0 %v1019
        %v1159 = vpop.f32.mrb[0].mxu0
        %v1160 = vadd.f32 0.0, %v1159
        %v1161 = vpop.f32.mrb[0].mxu0
        %v1162 = vpop.f32.mrb[0].mxu0
        %v1163 = vadd.f32 0.0, %v1162
        %v1164 = vpop.f32.mrb[0].mxu0
        %1165 = vmatprep.mubr.bf16.mxu0 0
        %1166 = vmatmul.mubr.bf16.gmra.mrb[0].mxu0 %v1022
        %v1167 = vpop.f32.mrb[0].mxu0
        %v1168 = vadd.f32 0.0, %v1167
        %v1169 = vpop.f32.mrb[0].mxu0
        %v1170 = vpop.f32.mrb[0].mxu0
        %v1171 = vadd.f32 0.0, %v1170
        %v1172 = vpop.f32.mrb[0].mxu0
        %1173 = vmatprep.mubr.bf16.mxu0 0
        %1174 = vmatmul.mubr.bf16.gmra.mrb[0].mxu0 %v1025
        %v1175 = vpop.f32.mrb[0].mxu0
        %v1176 = vadd.f32 0.0, %v1175
        %v1177 = vpop.f32.mrb[0].mxu0
        %v1178 = vpop.f32.mrb[0].mxu0
        %v1179 = vadd.f32 0.0, %v1178
        %v1180 = vpop.f32.mrb[0].mxu0
        %1181 = vmatprep.mubr.bf16.mxu0 0
        %1182 = vmatmul.mubr.bf16.gmra.mrb[0].mxu0 %v1028
        %v1183 = vpop.f32.mrb[0].mxu0
        %v1184 = vadd.f32 0.0, %v1183
        %v1185 = vpop.f32.mrb[0].mxu0
        %v1186 = vpop.f32.mrb[0].mxu0
        %v1187 = vadd.f32 0.0, %v1186
        %v1188 = vpop.f32.mrb[0].mxu0
        %1189 = vmatprep.mubr.bf16.mxu0 0
        %1190 = vmatmul.mubr.bf16.gmra.mrb[0].mxu0 %v1031
        %v1191 = vpop.f32.mrb[0].mxu0
        %v1192 = vadd.f32 0.0, %v1191
        %v1193 = vpop.f32.mrb[0].mxu0
        %v1194 = vpop.f32.mrb[0].mxu0
        %v1195 = vadd.f32 0.0, %v1194
        %v1196 = vpop.f32.mrb[0].mxu0
        %1197 = vdwg.mxu0
        %vm1246 = vcmask 1042432
        %vm1247 = vcmask 1046532
        %vm1248 = vmor %vm1246, %vm1247
        %v1249 = vrot.slane %v392, 5
        %v1250 = vrot.slane %v1249, 4
        %v1251 = vrot.slane %v393, 5
        %v1252 = vsel %vm1248, %v1250, %v1251
        %v1253 = vrot.slane %v1251, 4
        %v1254 = vrot.slane %v394, 5
        %v1255 = vsel %vm1248, %v1253, %v1254
        %v1256 = vrot.slane %v395, 5
        %v1257 = vrot.slane %v1256, 4
        %v1258 = vrot.slane %v396, 5
        %v1259 = vsel %vm1248, %v1257, %v1258
        %v1260 = vrot.slane %v1258, 4
        %v1261 = vrot.slane %v397, 5
        %v1262 = vsel %vm1248, %v1260, %v1261
        %v1263 = vrot.slane %v398, 5
        %v1264 = vrot.slane %v1263, 4
        %v1265 = vrot.slane %v399, 5
        %v1266 = vsel %vm1248, %v1264, %v1265
        %v1267 = vrot.slane %v1265, 4
        %v1268 = vrot.slane %v400, 5
        %v1269 = vsel %vm1248, %v1267, %v1268
        %v1270 = vrot.slane %v401, 5
        %v1271 = vrot.slane %v1270, 4
        %v1272 = vrot.slane %v402, 5
        %v1273 = vsel %vm1248, %v1271, %v1272
        %v1274 = vrot.slane %v1272, 4
        %v1275 = vrot.slane %v403, 5
        %v1276 = vsel %vm1248, %v1274, %v1275
        %v1277 = vrot.slane %v404, 5
        %v1278 = vrot.slane %v1277, 4
        %v1279 = vrot.slane %v405, 5
        %v1280 = vsel %vm1248, %v1278, %v1279
        %v1281 = vrot.slane %v1279, 4
        %v1282 = vrot.slane %v406, 5
        %v1283 = vsel %vm1248, %v1281, %v1282
        %v1284 = vrot.slane %v407, 5
        %v1285 = vrot.slane %v1284, 4
        %v1286 = vrot.slane %v408, 5
        %v1287 = vsel %vm1248, %v1285, %v1286
        %v1288 = vrot.slane %v1286, 4
        %v1289 = vrot.slane %v409, 5
        %v1290 = vsel %vm1248, %v1288, %v1289
        %v1291 = vrot.slane %v410, 5
        %v1292 = vrot.slane %v1291, 4
        %v1293 = vrot.slane %v411, 5
        %v1294 = vsel %vm1248, %v1292, %v1293
        %v1295 = vrot.slane %v1293, 4
        %v1296 = vrot.slane %v412, 5
        %v1297 = vsel %vm1248, %v1295, %v1296
        %v1298 = vrot.slane %v413, 5
        %v1299 = vrot.slane %v1298, 4
        %v1300 = vrot.slane %v414, 5
        %v1301 = vsel %vm1248, %v1299, %v1300
        %v1302 = vrot.slane %v1300, 4
        %v1303 = vrot.slane %v415, 5
        %v1304 = vsel %vm1248, %v1302, %v1303
        %v1305 = vrot.slane %v416, 5
        %v1306 = vrot.slane %v1305, 4
        %v1307 = vrot.slane %v417, 5
        %v1308 = vsel %vm1248, %v1306, %v1307
        %v1309 = vrot.slane %v1307, 4
        %v1310 = vrot.slane %v418, 5
        %v1311 = vsel %vm1248, %v1309, %v1310
        %v1312 = vrot.slane %v419, 5
        %v1313 = vrot.slane %v1312, 4
        %v1314 = vrot.slane %v420, 5
        %v1315 = vsel %vm1248, %v1313, %v1314
        %v1316 = vrot.slane %v1314, 4
        %v1317 = vrot.slane %v421, 5
        %v1318 = vsel %vm1248, %v1316, %v1317
        %v1319 = vrot.slane %v422, 5
        %v1320 = vrot.slane %v1319, 4
        %v1321 = vrot.slane %v423, 5
        %v1322 = vsel %vm1248, %v1320, %v1321
        %v1323 = vrot.slane %v1321, 4
        %v1324 = vrot.slane %v424, 5
        %v1325 = vsel %vm1248, %v1323, %v1324
        %v1326 = vrot.slane %v425, 5
        %v1327 = vrot.slane %v1326, 4
        %v1328 = vrot.slane %v426, 5
        %v1329 = vsel %vm1248, %v1327, %v1328
        %v1330 = vrot.slane %v1328, 4
        %v1331 = vrot.slane %v427, 5
        %v1332 = vsel %vm1248, %v1330, %v1331
        %v1333 = vrot.slane %v428, 5
        %v1334 = vrot.slane %v1333, 4
        %v1335 = vrot.slane %v429, 5
        %v1336 = vsel %vm1248, %v1334, %v1335
        %v1337 = vrot.slane %v1335, 4
        %v1338 = vrot.slane %v430, 5
        %v1339 = vsel %vm1248, %v1337, %v1338
        %v1340 = vrot.slane %v431, 5
        %v1341 = vrot.slane %v1340, 4
        %v1342 = vrot.slane %v432, 5
        %v1343 = vsel %vm1248, %v1341, %v1342
        %v1344 = vrot.slane %v1342, 4
        %v1345 = vrot.slane %v433, 5
        %v1346 = vsel %vm1248, %v1344, %v1345
        %v1347 = vrot.slane %v434, 5
        %v1348 = vrot.slane %v1347, 4
        %v1349 = vrot.slane %v435, 5
        %v1350 = vsel %vm1248, %v1348, %v1349
        %v1351 = vrot.slane %v1349, 4
        %v1352 = vrot.slane %v436, 5
        %v1353 = vsel %vm1248, %v1351, %v1352
        %v1354 = vrot.slane %v437, 5
        %v1355 = vrot.slane %v1354, 4
        %v1356 = vrot.slane %v438, 5
        %v1357 = vsel %vm1248, %v1355, %v1356
        %v1358 = vrot.slane %v1356, 4
        %v1359 = vrot.slane %v439, 5
        %v1360 = vsel %vm1248, %v1358, %v1359
        %v1362 = vshrl.u32 %v392, 16
        %v1364 = vrot.slane %v1362, 5
        %v1365 = vshll.u32 %v392, 16
        %v1367 = vrot.slane %v1365, 6
        %v1368 = vor.u32 %v1364, %v1367
        %v1369 = vrot.slane %v1368, 4
        %v1371 = vshrl.u32 %v393, 16
        %v1373 = vrot.slane %v1371, 5
        %v1374 = vshll.u32 %v393, 16
        %v1376 = vrot.slane %v1374, 6
        %v1377 = vor.u32 %v1373, %v1376
        %v1378 = vsel %vm454, %v1369, %v1377
        %v1379 = vrot.slane %v1377, 4
        %v1381 = vshrl.u32 %v394, 16
        %v1383 = vrot.slane %v1381, 5
        %v1384 = vshll.u32 %v394, 16
        %v1386 = vrot.slane %v1384, 6
        %v1387 = vor.u32 %v1383, %v1386
        %v1388 = vsel %vm454, %v1379, %v1387
        %vm1389 = vcmask 1041408
        %vm1390 = vcmask 1045508
        %vm1391 = vmor %vm1389, %vm1390
        %v1392 = vrot.slane %v392, 6
        %v1393 = vrot.slane %v1392, 4
        %v1394 = vrot.slane %v393, 6
        %v1395 = vsel %vm1391, %v1393, %v1394
        %v1396 = vrot.slane %v1394, 4
        %v1397 = vrot.slane %v394, 6
        %v1398 = vsel %vm1391, %v1396, %v1397
        %v1399 = vrot.slane %v395, 6
        %v1400 = vrot.slane %v1399, 4
        %v1401 = vrot.slane %v396, 6
        %v1402 = vsel %vm1391, %v1400, %v1401
        %v1403 = vrot.slane %v1401, 4
        %v1404 = vrot.slane %v397, 6
        %v1405 = vsel %vm1391, %v1403, %v1404
        %v1406 = vrot.slane %v398, 6
        %v1407 = vrot.slane %v1406, 4
        %v1408 = vrot.slane %v399, 6
        %v1409 = vsel %vm1391, %v1407, %v1408
        %v1410 = vrot.slane %v1408, 4
        %v1411 = vrot.slane %v400, 6
        %v1412 = vsel %vm1391, %v1410, %v1411
        %v1413 = vrot.slane %v401, 6
        %v1414 = vrot.slane %v1413, 4
        %v1415 = vrot.slane %v402, 6
        %v1416 = vsel %vm1391, %v1414, %v1415
        %v1417 = vrot.slane %v1415, 4
        %v1418 = vrot.slane %v403, 6
        %v1419 = vsel %vm1391, %v1417, %v1418
        %v1420 = vrot.slane %v404, 6
        %v1421 = vrot.slane %v1420, 4
        %v1422 = vrot.slane %v405, 6
        %v1423 = vsel %vm1391, %v1421, %v1422
        %v1424 = vrot.slane %v1422, 4
        %v1425 = vrot.slane %v406, 6
        %v1426 = vsel %vm1391, %v1424, %v1425
        %v1427 = vrot.slane %v407, 6
        %v1428 = vrot.slane %v1427, 4
        %v1429 = vrot.slane %v408, 6
        %v1430 = vsel %vm1391, %v1428, %v1429
        %v1431 = vrot.slane %v1429, 4
        %v1432 = vrot.slane %v409, 6
        %v1433 = vsel %vm1391, %v1431, %v1432
        %v1434 = vrot.slane %v410, 6
        %v1435 = vrot.slane %v1434, 4
        %v1436 = vrot.slane %v411, 6
        %v1437 = vsel %vm1391, %v1435, %v1436
        %v1438 = vrot.slane %v1436, 4
        %v1439 = vrot.slane %v412, 6
        %v1440 = vsel %vm1391, %v1438, %v1439
        %v1441 = vrot.slane %v413, 6
        %v1442 = vrot.slane %v1441, 4
        %v1443 = vrot.slane %v414, 6
        %v1444 = vsel %vm1391, %v1442, %v1443
        %v1445 = vrot.slane %v1443, 4
        %v1446 = vrot.slane %v415, 6
        %v1447 = vsel %vm1391, %v1445, %v1446
        %v1448 = vrot.slane %v416, 6
        %v1449 = vrot.slane %v1448, 4
        %v1450 = vrot.slane %v417, 6
        %v1451 = vsel %vm1391, %v1449, %v1450
        %v1452 = vrot.slane %v1450, 4
        %v1453 = vrot.slane %v418, 6
        %v1454 = vsel %vm1391, %v1452, %v1453
        %v1455 = vrot.slane %v419, 6
        %v1456 = vrot.slane %v1455, 4
        %v1457 = vrot.slane %v420, 6
        %v1458 = vsel %vm1391, %v1456, %v1457
        %v1459 = vrot.slane %v1457, 4
        %v1460 = vrot.slane %v421, 6
        %v1461 = vsel %vm1391, %v1459, %v1460
        %v1462 = vrot.slane %v422, 6
        %v1463 = vrot.slane %v1462, 4
        %v1464 = vrot.slane %v423, 6
        %v1465 = vsel %vm1391, %v1463, %v1464
        %v1466 = vrot.slane %v1464, 4
        %v1467 = vrot.slane %v424, 6
        %v1468 = vsel %vm1391, %v1466, %v1467
        %v1469 = vrot.slane %v425, 6
        %v1470 = vrot.slane %v1469, 4
        %v1471 = vrot.slane %v426, 6
        %v1472 = vsel %vm1391, %v1470, %v1471
        %v1473 = vrot.slane %v1471, 4
        %v1474 = vrot.slane %v427, 6
        %v1475 = vsel %vm1391, %v1473, %v1474
        %v1476 = vrot.slane %v428, 6
        %v1477 = vrot.slane %v1476, 4
        %v1478 = vrot.slane %v429, 6
        %v1479 = vsel %vm1391, %v1477, %v1478
        %v1480 = vrot.slane %v1478, 4
        %v1481 = vrot.slane %v430, 6
        %v1482 = vsel %vm1391, %v1480, %v1481
        %v1483 = vrot.slane %v431, 6
        %v1484 = vrot.slane %v1483, 4
        %v1485 = vrot.slane %v432, 6
        %v1486 = vsel %vm1391, %v1484, %v1485
        %v1487 = vrot.slane %v1485, 4
        %v1488 = vrot.slane %v433, 6
        %v1489 = vsel %vm1391, %v1487, %v1488
        %v1490 = vrot.slane %v434, 6
        %v1491 = vrot.slane %v1490, 4
        %v1492 = vrot.slane %v435, 6
        %v1493 = vsel %vm1391, %v1491, %v1492
        %v1494 = vrot.slane %v1492, 4
        %v1495 = vrot.slane %v436, 6
        %v1496 = vsel %vm1391, %v1494, %v1495
        %v1497 = vrot.slane %v437, 6
        %v1498 = vrot.slane %v1497, 4
        %v1499 = vrot.slane %v438, 6
        %v1500 = vsel %vm1391, %v1498, %v1499
        %v1501 = vrot.slane %v1499, 4
        %v1502 = vrot.slane %v439, 6
        %v1503 = vsel %vm1391, %v1501, %v1502
        %v1507 = vrot.slane %v440, 5
        %v1508 = vrot.slane %v1507, 4
        %v1509 = vrot.slane %v441, 5
        %v1510 = vsel %vm1248, %v1508, %v1509
        %v1511 = vrot.slane %v1509, 4
        %v1512 = vrot.slane %v442, 5
        %v1513 = vsel %vm1248, %v1511, %v1512
        %v1514 = vrot.slane %v440, 6
        %v1515 = vrot.slane %v1514, 4
        %v1516 = vrot.slane %v441, 6
        %v1517 = vsel %vm1391, %v1515, %v1516
        %v1518 = vrot.slane %v1516, 4
        %v1519 = vrot.slane %v442, 6
        %v1520 = vsel %vm1391, %v1518, %v1519
        %v1524 = vrot.slane %v443, 5
        %v1525 = vrot.slane %v1524, 4
        %v1526 = vrot.slane %v444, 5
        %v1527 = vsel %vm1248, %v1525, %v1526
        %v1528 = vrot.slane %v1526, 4
        %v1529 = vrot.slane %v445, 5
        %v1530 = vsel %vm1248, %v1528, %v1529
        %v1532 = vshrl.u32 %v443, 16
        %v1534 = vrot.slane %v1532, 5
        %v1535 = vshll.u32 %v443, 16
        %v1537 = vrot.slane %v1535, 6
        %v1538 = vor.u32 %v1534, %v1537
        %v1539 = vrot.slane %v1538, 4
        %v1541 = vshrl.u32 %v444, 16
        %v1543 = vrot.slane %v1541, 5
        %v1544 = vshll.u32 %v444, 16
        %v1546 = vrot.slane %v1544, 6
        %v1547 = vor.u32 %v1543, %v1546
        %v1548 = vsel %vm454, %v1539, %v1547
        %v1549 = vrot.slane %v1547, 4
        %v1551 = vshrl.u32 %v445, 16
        %v1553 = vrot.slane %v1551, 5
        %v1554 = vshll.u32 %v445, 16
        %v1556 = vrot.slane %v1554, 6
        %v1557 = vor.u32 %v1553, %v1556
        %v1558 = vsel %vm454, %v1549, %v1557
        %v1559 = vrot.slane %v443, 6
        %v1560 = vrot.slane %v1559, 4
        %v1561 = vrot.slane %v444, 6
        %v1562 = vsel %vm1391, %v1560, %v1561
        %v1563 = vrot.slane %v1561, 4
        %v1564 = vrot.slane %v445, 6
        %v1565 = vsel %vm1391, %v1563, %v1564
        %v1566 = vunpack.c.l.b16 %v1252
        %v1567 = vunpack.c.l.b16 %v1255
        %v1568 = vunpack.c.l.b16 %v1259
        %v1569 = vunpack.c.l.b16 %v1262
        %v1570 = vunpack.c.l.b16 %v1266
        %v1571 = vunpack.c.l.b16 %v1269
        %v1572 = vunpack.c.l.b16 %v1273
        %v1573 = vunpack.c.l.b16 %v1276
        %v1574 = vunpack.c.l.b16 %v1280
        %v1575 = vunpack.c.l.b16 %v1283
        %v1576 = vunpack.c.l.b16 %v1287
        %v1577 = vunpack.c.l.b16 %v1290
        %v1578 = vunpack.c.l.b16 %v1294
        %v1579 = vunpack.c.l.b16 %v1297
        %v1580 = vunpack.c.l.b16 %v1301
        %v1581 = vunpack.c.l.b16 %v1304
        %v1582 = vunpack.c.l.b16 %v1308
        %v1583 = vunpack.c.l.b16 %v1311
        %v1584 = vunpack.c.l.b16 %v1315
        %v1585 = vunpack.c.l.b16 %v1318
        %v1586 = vunpack.c.l.b16 %v1322
        %v1587 = vunpack.c.l.b16 %v1325
        %v1588 = vunpack.c.l.b16 %v1329
        %v1589 = vunpack.c.l.b16 %v1332
        %v1590 = vunpack.c.l.b16 %v1336
        %v1591 = vunpack.c.l.b16 %v1339
        %v1592 = vunpack.c.l.b16 %v1343
        %v1593 = vunpack.c.l.b16 %v1346
        %v1594 = vunpack.c.l.b16 %v1350
        %v1595 = vunpack.c.l.b16 %v1353
        %v1596 = vunpack.c.l.b16 %v1357
        %v1597 = vunpack.c.l.b16 %v1360
        %v1598 = vpack.c.b16 %v1567, %v1566
        %v1599 = vpack.c.b16 %v1569, %v1568
        %v1600 = vpack.c.b16 %v1571, %v1570
        %v1601 = vpack.c.b16 %v1573, %v1572
        %v1602 = vpack.c.b16 %v1575, %v1574
        %v1603 = vpack.c.b16 %v1577, %v1576
        %v1604 = vpack.c.b16 %v1579, %v1578
        %v1605 = vpack.c.b16 %v1581, %v1580
        %v1606 = vpack.c.b16 %v1583, %v1582
        %v1607 = vpack.c.b16 %v1585, %v1584
        %v1608 = vpack.c.b16 %v1587, %v1586
        %v1609 = vpack.c.b16 %v1589, %v1588
        %v1610 = vpack.c.b16 %v1591, %v1590
        %v1611 = vpack.c.b16 %v1593, %v1592
        %v1612 = vpack.c.b16 %v1595, %v1594
        %v1613 = vpack.c.b16 %v1597, %v1596
        %v1614 = vunpack.c.l.b16 %v1378
        %v1615 = vunpack.c.l.b16 %v1388
        %v1616 = vpack.c.b16 %v1615, %v1614
        %1617 = vrot.lane.b32.xlu0 %v1616, 4
        %v1618 = vpop.permute.xlu0 %1617
        %1619 = vrot.lane.b32.xlu0 %v968, 4
        %v1620 = vpop.permute.xlu0 %1619
        %1621 = vrot.lane.b32.xlu0 %v969, 4
        %v1622 = vpop.permute.xlu0 %1621
        %1623 = vrot.lane.b32.xlu0 %v970, 4
        %v1624 = vpop.permute.xlu0 %1623
        %1625 = vrot.lane.b32.xlu0 %v971, 4
        %v1626 = vpop.permute.xlu0 %1625
        %1627 = vrot.lane.b32.xlu0 %v972, 4
        %v1628 = vpop.permute.xlu0 %1627
        %1629 = vrot.lane.b32.xlu0 %v973, 4
        %v1630 = vpop.permute.xlu0 %1629
        %1631 = vrot.lane.b32.xlu0 %v974, 4
        %v1632 = vpop.permute.xlu0 %1631
        %1633 = vrot.lane.b32.xlu0 %v975, 4
        %v1634 = vpop.permute.xlu0 %1633
        %1635 = vrot.lane.b32.xlu0 %v976, 4
        %v1636 = vpop.permute.xlu0 %1635
        %1637 = vrot.lane.b32.xlu0 %v977, 4
        %v1638 = vpop.permute.xlu0 %1637
        %1639 = vrot.lane.b32.xlu0 %v978, 4
        %v1640 = vpop.permute.xlu0 %1639
        %1641 = vrot.lane.b32.xlu0 %v979, 4
        %v1642 = vpop.permute.xlu0 %1641
        %1643 = vrot.lane.b32.xlu0 %v980, 4
        %v1644 = vpop.permute.xlu0 %1643
        %1645 = vrot.lane.b32.xlu0 %v981, 4
        %v1646 = vpop.permute.xlu0 %1645
        %1647 = vrot.lane.b32.xlu0 %v982, 4
        %v1648 = vpop.permute.xlu0 %1647
        %v1649 = vunpack.c.l.b16 %v1395
        %v1650 = vunpack.c.l.b16 %v1398
        %v1651 = vunpack.c.l.b16 %v1402
        %v1652 = vunpack.c.l.b16 %v1405
        %v1653 = vunpack.c.l.b16 %v1409
        %v1654 = vunpack.c.l.b16 %v1412
        %v1655 = vunpack.c.l.b16 %v1416
        %v1656 = vunpack.c.l.b16 %v1419
        %v1657 = vunpack.c.l.b16 %v1423
        %v1658 = vunpack.c.l.b16 %v1426
        %v1659 = vunpack.c.l.b16 %v1430
        %v1660 = vunpack.c.l.b16 %v1433
        %v1661 = vunpack.c.l.b16 %v1437
        %v1662 = vunpack.c.l.b16 %v1440
        %v1663 = vunpack.c.l.b16 %v1444
        %v1664 = vunpack.c.l.b16 %v1447
        %v1665 = vunpack.c.l.b16 %v1451
        %v1666 = vunpack.c.l.b16 %v1454
        %v1667 = vunpack.c.l.b16 %v1458
        %v1668 = vunpack.c.l.b16 %v1461
        %v1669 = vunpack.c.l.b16 %v1465
        %v1670 = vunpack.c.l.b16 %v1468
        %v1671 = vunpack.c.l.b16 %v1472
        %v1672 = vunpack.c.l.b16 %v1475
        %v1673 = vunpack.c.l.b16 %v1479
        %v1674 = vunpack.c.l.b16 %v1482
        %v1675 = vunpack.c.l.b16 %v1486
        %v1676 = vunpack.c.l.b16 %v1489
        %v1677 = vunpack.c.l.b16 %v1493
        %v1678 = vunpack.c.l.b16 %v1496
        %v1679 = vunpack.c.l.b16 %v1500
        %v1680 = vunpack.c.l.b16 %v1503
        %v1681 = vpack.c.b16 %v1650, %v1649
        %v1682 = vpack.c.b16 %v1652, %v1651
        %v1683 = vpack.c.b16 %v1654, %v1653
        %v1684 = vpack.c.b16 %v1656, %v1655
        %v1685 = vpack.c.b16 %v1658, %v1657
        %v1686 = vpack.c.b16 %v1660, %v1659
        %v1687 = vpack.c.b16 %v1662, %v1661
        %v1688 = vpack.c.b16 %v1664, %v1663
        %v1689 = vpack.c.b16 %v1666, %v1665
        %v1690 = vpack.c.b16 %v1668, %v1667
        %v1691 = vpack.c.b16 %v1670, %v1669
        %v1692 = vpack.c.b16 %v1672, %v1671
        %v1693 = vpack.c.b16 %v1674, %v1673
        %v1694 = vpack.c.b16 %v1676, %v1675
        %v1695 = vpack.c.b16 %v1678, %v1677
        %v1696 = vpack.c.b16 %v1680, %v1679
        %1697 = vrot.lane.b32.xlu0 %v1681, 8
        %v1698 = vpop.permute.xlu0 %1697
        %1699 = vrot.lane.b32.xlu0 %v1682, 8
        %v1700 = vpop.permute.xlu0 %1699
        %1701 = vrot.lane.b32.xlu0 %v1683, 8
        %v1702 = vpop.permute.xlu0 %1701
        %1703 = vrot.lane.b32.xlu0 %v1684, 8
        %v1704 = vpop.permute.xlu0 %1703
        %1705 = vrot.lane.b32.xlu0 %v1685, 8
        %v1706 = vpop.permute.xlu0 %1705
        %1707 = vrot.lane.b32.xlu0 %v1686, 8
        %v1708 = vpop.permute.xlu0 %1707
        %1709 = vrot.lane.b32.xlu0 %v1687, 8
        %v1710 = vpop.permute.xlu0 %1709
        %1711 = vrot.lane.b32.xlu0 %v1688, 8
        %v1712 = vpop.permute.xlu0 %1711
        %1713 = vrot.lane.b32.xlu0 %v1689, 8
        %v1714 = vpop.permute.xlu0 %1713
        %1715 = vrot.lane.b32.xlu0 %v1690, 8
        %v1716 = vpop.permute.xlu0 %1715
        %1717 = vrot.lane.b32.xlu0 %v1691, 8
        %v1718 = vpop.permute.xlu0 %1717
        %1719 = vrot.lane.b32.xlu0 %v1692, 8
        %v1720 = vpop.permute.xlu0 %1719
        %1721 = vrot.lane.b32.xlu0 %v1693, 8
        %v1722 = vpop.permute.xlu0 %1721
        %1723 = vrot.lane.b32.xlu0 %v1694, 8
        %v1724 = vpop.permute.xlu0 %1723
        %1725 = vrot.lane.b32.xlu0 %v1695, 8
        %v1726 = vpop.permute.xlu0 %1725
        %1727 = vrot.lane.b32.xlu0 %v1696, 8
        %v1728 = vpop.permute.xlu0 %1727
        %v1729 = vunpack.c.l.b16 %v1510
        %v1730 = vunpack.c.l.b16 %v1513
        %v1731 = vpack.c.b16 %v1730, %v1729
        %1732 = vrot.lane.b32.xlu0 %v1599, 12
        %v1733 = vpop.permute.xlu0 %1732
        %1734 = vrot.lane.b32.xlu0 %v1600, 12
        %v1735 = vpop.permute.xlu0 %1734
        %1736 = vrot.lane.b32.xlu0 %v1601, 12
        %v1737 = vpop.permute.xlu0 %1736
        %1738 = vrot.lane.b32.xlu0 %v1602, 12
        %v1739 = vpop.permute.xlu0 %1738
        %1740 = vrot.lane.b32.xlu0 %v1603, 12
        %v1741 = vpop.permute.xlu0 %1740
        %1742 = vrot.lane.b32.xlu0 %v1604, 12
        %v1743 = vpop.permute.xlu0 %1742
        %1744 = vrot.lane.b32.xlu0 %v1605, 12
        %v1745 = vpop.permute.xlu0 %1744
        %1746 = vrot.lane.b32.xlu0 %v1606, 12
        %v1747 = vpop.permute.xlu0 %1746
        %1748 = vrot.lane.b32.xlu0 %v1607, 12
        %v1749 = vpop.permute.xlu0 %1748
        %1750 = vrot.lane.b32.xlu0 %v1608, 12
        %v1751 = vpop.permute.xlu0 %1750
        %1752 = vrot.lane.b32.xlu0 %v1609, 12
        %v1753 = vpop.permute.xlu0 %1752
        %1754 = vrot.lane.b32.xlu0 %v1610, 12
        %v1755 = vpop.permute.xlu0 %1754
        %1756 = vrot.lane.b32.xlu0 %v1611, 12
        %v1757 = vpop.permute.xlu0 %1756
        %1758 = vrot.lane.b32.xlu0 %v1612, 12
        %v1759 = vpop.permute.xlu0 %1758
        %1760 = vrot.lane.b32.xlu0 %v1613, 12
        %v1761 = vpop.permute.xlu0 %1760
        %1762 = vrot.lane.b32.xlu0 %v1731, 12
        %v1763 = vpop.permute.xlu0 %1762
        %1764 = vrot.lane.b32.xlu0 %v968, 16
        %v1765 = vpop.permute.xlu0 %1764
        %1766 = vrot.lane.b32.xlu0 %v969, 16
        %v1767 = vpop.permute.xlu0 %1766
        %1768 = vrot.lane.b32.xlu0 %v970, 16
        %v1769 = vpop.permute.xlu0 %1768
        %1770 = vrot.lane.b32.xlu0 %v971, 16
        %v1771 = vpop.permute.xlu0 %1770
        %1772 = vrot.lane.b32.xlu0 %v972, 16
        %v1773 = vpop.permute.xlu0 %1772
        %1774 = vrot.lane.b32.xlu0 %v973, 16
        %v1775 = vpop.permute.xlu0 %1774
        %1776 = vrot.lane.b32.xlu0 %v974, 16
        %v1777 = vpop.permute.xlu0 %1776
        %1778 = vrot.lane.b32.xlu0 %v975, 16
        %v1779 = vpop.permute.xlu0 %1778
        %1780 = vrot.lane.b32.xlu0 %v976, 16
        %v1781 = vpop.permute.xlu0 %1780
        %1782 = vrot.lane.b32.xlu0 %v977, 16
        %v1783 = vpop.permute.xlu0 %1782
        %1784 = vrot.lane.b32.xlu0 %v978, 16
        %v1785 = vpop.permute.xlu0 %1784
        %1786 = vrot.lane.b32.xlu0 %v979, 16
        %v1787 = vpop.permute.xlu0 %1786
        %1788 = vrot.lane.b32.xlu0 %v980, 16
        %v1789 = vpop.permute.xlu0 %1788
        %1790 = vrot.lane.b32.xlu0 %v981, 16
        %v1791 = vpop.permute.xlu0 %1790
        %1792 = vrot.lane.b32.xlu0 %v982, 16
        %v1793 = vpop.permute.xlu0 %1792
        %1794 = vrot.lane.b32.xlu0 %v983, 16
        %v1795 = vpop.permute.xlu0 %1794
        %v1796 = vunpack.c.l.b16 %v1517
        %v1797 = vunpack.c.l.b16 %v1520
        %v1798 = vpack.c.b16 %v1797, %v1796
        %1799 = vrot.lane.b32.xlu0 %v1682, 20
        %v1800 = vpop.permute.xlu0 %1799
        %1801 = vrot.lane.b32.xlu0 %v1683, 20
        %v1802 = vpop.permute.xlu0 %1801
        %1803 = vrot.lane.b32.xlu0 %v1684, 20
        %v1804 = vpop.permute.xlu0 %1803
        %1805 = vrot.lane.b32.xlu0 %v1685, 20
        %v1806 = vpop.permute.xlu0 %1805
        %1807 = vrot.lane.b32.xlu0 %v1686, 20
        %v1808 = vpop.permute.xlu0 %1807
        %1809 = vrot.lane.b32.xlu0 %v1687, 20
        %v1810 = vpop.permute.xlu0 %1809
        %1811 = vrot.lane.b32.xlu0 %v1688, 20
        %v1812 = vpop.permute.xlu0 %1811
        %1813 = vrot.lane.b32.xlu0 %v1689, 20
        %v1814 = vpop.permute.xlu0 %1813
        %1815 = vrot.lane.b32.xlu0 %v1690, 20
        %v1816 = vpop.permute.xlu0 %1815
        %1817 = vrot.lane.b32.xlu0 %v1691, 20
        %v1818 = vpop.permute.xlu0 %1817
        %1819 = vrot.lane.b32.xlu0 %v1692, 20
        %v1820 = vpop.permute.xlu0 %1819
        %1821 = vrot.lane.b32.xlu0 %v1693, 20
        %v1822 = vpop.permute.xlu0 %1821
        %1823 = vrot.lane.b32.xlu0 %v1694, 20
        %v1824 = vpop.permute.xlu0 %1823
        %1825 = vrot.lane.b32.xlu0 %v1695, 20
        %v1826 = vpop.permute.xlu0 %1825
        %1827 = vrot.lane.b32.xlu0 %v1696, 20
        %v1828 = vpop.permute.xlu0 %1827
        %1829 = vrot.lane.b32.xlu0 %v1798, 20
        %v1830 = vpop.permute.xlu0 %1829
        %v1831 = vunpack.c.l.b16 %v1527
        %v1832 = vunpack.c.l.b16 %v1530
        %v1833 = vpack.c.b16 %v1832, %v1831
        %1834 = vrot.lane.b32.xlu0 %v1600, 24
        %v1835 = vpop.permute.xlu0 %1834
        %1836 = vrot.lane.b32.xlu0 %v1601, 24
        %v1837 = vpop.permute.xlu0 %1836
        %1838 = vrot.lane.b32.xlu0 %v1602, 24
        %v1839 = vpop.permute.xlu0 %1838
        %1840 = vrot.lane.b32.xlu0 %v1603, 24
        %v1841 = vpop.permute.xlu0 %1840
        %1842 = vrot.lane.b32.xlu0 %v1604, 24
        %v1843 = vpop.permute.xlu0 %1842
        %1844 = vrot.lane.b32.xlu0 %v1605, 24
        %v1845 = vpop.permute.xlu0 %1844
        %1846 = vrot.lane.b32.xlu0 %v1606, 24
        %v1847 = vpop.permute.xlu0 %1846
        %1848 = vrot.lane.b32.xlu0 %v1607, 24
        %v1849 = vpop.permute.xlu0 %1848
        %1850 = vrot.lane.b32.xlu0 %v1608, 24
        %v1851 = vpop.permute.xlu0 %1850
        %1852 = vrot.lane.b32.xlu0 %v1609, 24
        %v1853 = vpop.permute.xlu0 %1852
        %1854 = vrot.lane.b32.xlu0 %v1610, 24
        %v1855 = vpop.permute.xlu0 %1854
        %1856 = vrot.lane.b32.xlu0 %v1611, 24
        %v1857 = vpop.permute.xlu0 %1856
        %1858 = vrot.lane.b32.xlu0 %v1612, 24
        %v1859 = vpop.permute.xlu0 %1858
        %1860 = vrot.lane.b32.xlu0 %v1613, 24
        %v1861 = vpop.permute.xlu0 %1860
        %1862 = vrot.lane.b32.xlu0 %v1731, 24
        %v1863 = vpop.permute.xlu0 %1862
        %1864 = vrot.lane.b32.xlu0 %v1833, 24
        %v1865 = vpop.permute.xlu0 %1864
        %v1866 = vunpack.c.l.b16 %v1548
        %v1867 = vunpack.c.l.b16 %v1558
        %v1868 = vpack.c.b16 %v1867, %v1866
        %1869 = vrot.lane.b32.xlu0 %v969, 28
        %v1870 = vpop.permute.xlu0 %1869
        %1871 = vrot.lane.b32.xlu0 %v970, 28
        %v1872 = vpop.permute.xlu0 %1871
        %1873 = vrot.lane.b32.xlu0 %v971, 28
        %v1874 = vpop.permute.xlu0 %1873
        %1875 = vrot.lane.b32.xlu0 %v972, 28
        %v1876 = vpop.permute.xlu0 %1875
        %1877 = vrot.lane.b32.xlu0 %v973, 28
        %v1878 = vpop.permute.xlu0 %1877
        %1879 = vrot.lane.b32.xlu0 %v974, 28
        %v1880 = vpop.permute.xlu0 %1879
        %1881 = vrot.lane.b32.xlu0 %v975, 28
        %v1882 = vpop.permute.xlu0 %1881
        %1883 = vrot.lane.b32.xlu0 %v976, 28
        %v1884 = vpop.permute.xlu0 %1883
        %1885 = vrot.lane.b32.xlu0 %v977, 28
        %v1886 = vpop.permute.xlu0 %1885
        %1887 = vrot.lane.b32.xlu0 %v978, 28
        %v1888 = vpop.permute.xlu0 %1887
        %1889 = vrot.lane.b32.xlu0 %v979, 28
        %v1890 = vpop.permute.xlu0 %1889
        %1891 = vrot.lane.b32.xlu0 %v980, 28
        %v1892 = vpop.permute.xlu0 %1891
        %1893 = vrot.lane.b32.xlu0 %v981, 28
        %v1894 = vpop.permute.xlu0 %1893
        %1895 = vrot.lane.b32.xlu0 %v982, 28
        %v1896 = vpop.permute.xlu0 %1895
        %1897 = vrot.lane.b32.xlu0 %v983, 28
        %v1898 = vpop.permute.xlu0 %1897
        %1899 = vrot.lane.b32.xlu0 %v1868, 28
        %v1900 = vpop.permute.xlu0 %1899
        %v1901 = vunpack.c.l.b16 %v1562
        %v1902 = vunpack.c.l.b16 %v1565
        %v1903 = vpack.c.b16 %v1902, %v1901
        %1904 = vrot.lane.b32.xlu0 %v1683, 32
        %v1905 = vpop.permute.xlu0 %1904
        %1906 = vrot.lane.b32.xlu0 %v1684, 32
        %v1907 = vpop.permute.xlu0 %1906
        %1908 = vrot.lane.b32.xlu0 %v1685, 32
        %v1909 = vpop.permute.xlu0 %1908
        %1910 = vrot.lane.b32.xlu0 %v1686, 32
        %v1911 = vpop.permute.xlu0 %1910
        %1912 = vrot.lane.b32.xlu0 %v1687, 32
        %v1913 = vpop.permute.xlu0 %1912
        %1914 = vrot.lane.b32.xlu0 %v1688, 32
        %v1915 = vpop.permute.xlu0 %1914
        %1916 = vrot.lane.b32.xlu0 %v1689, 32
        %v1917 = vpop.permute.xlu0 %1916
        %1918 = vrot.lane.b32.xlu0 %v1690, 32
        %v1919 = vpop.permute.xlu0 %1918
        %1920 = vrot.lane.b32.xlu0 %v1691, 32
        %v1921 = vpop.permute.xlu0 %1920
        %1922 = vrot.lane.b32.xlu0 %v1692, 32
        %v1923 = vpop.permute.xlu0 %1922
        %1924 = vrot.lane.b32.xlu0 %v1693, 32
        %v1925 = vpop.permute.xlu0 %1924
        %1926 = vrot.lane.b32.xlu0 %v1694, 32
        %v1927 = vpop.permute.xlu0 %1926
        %1928 = vrot.lane.b32.xlu0 %v1695, 32
        %v1929 = vpop.permute.xlu0 %1928
        %1930 = vrot.lane.b32.xlu0 %v1696, 32
        %v1931 = vpop.permute.xlu0 %1930
        %1932 = vrot.lane.b32.xlu0 %v1798, 32
        %v1933 = vpop.permute.xlu0 %1932
        %1934 = vrot.lane.b32.xlu0 %v1903, 32
        %v1935 = vpop.permute.xlu0 %1934
        %v1938 = vsel %vm984, %v1598, %v1618
        %v1941 = vsel %vm984, %v1599, %v1620
        %v1944 = vsel %vm984, %v1600, %v1622
        %v1947 = vsel %vm984, %v1601, %v1624
        %v1950 = vsel %vm984, %v1602, %v1626
        %v1953 = vsel %vm984, %v1603, %v1628
        %v1956 = vsel %vm984, %v1604, %v1630
        %v1959 = vsel %vm984, %v1605, %v1632
        %v1962 = vsel %vm984, %v1606, %v1634
        %v1965 = vsel %vm984, %v1607, %v1636
        %v1968 = vsel %vm984, %v1608, %v1638
        %v1971 = vsel %vm984, %v1609, %v1640
        %v1974 = vsel %vm984, %v1610, %v1642
        %v1977 = vsel %vm984, %v1611, %v1644
        %v1980 = vsel %vm984, %v1612, %v1646
        %v1983 = vsel %vm984, %v1613, %v1648
        %vm1984 = vcmask 64512
        %v1986 = vsel %vm1984, %v1938, %v1698
        %v1988 = vsel %vm1984, %v1941, %v1700
        %v1990 = vsel %vm1984, %v1944, %v1702
        %v1992 = vsel %vm1984, %v1947, %v1704
        %v1994 = vsel %vm1984, %v1950, %v1706
        %v1996 = vsel %vm1984, %v1953, %v1708
        %v1998 = vsel %vm1984, %v1956, %v1710
        %v2000 = vsel %vm1984, %v1959, %v1712
        %v2002 = vsel %vm1984, %v1962, %v1714
        %v2004 = vsel %vm1984, %v1965, %v1716
        %v2006 = vsel %vm1984, %v1968, %v1718
        %v2008 = vsel %vm1984, %v1971, %v1720
        %v2010 = vsel %vm1984, %v1974, %v1722
        %v2012 = vsel %vm1984, %v1977, %v1724
        %v2014 = vsel %vm1984, %v1980, %v1726
        %v2016 = vsel %vm1984, %v1983, %v1728
        %vm2017 = vcmask 97280
        %v2019 = vsel %vm2017, %v1986, %v1733
        %v2021 = vsel %vm2017, %v1988, %v1735
        %v2023 = vsel %vm2017, %v1990, %v1737
        %v2025 = vsel %vm2017, %v1992, %v1739
        %v2027 = vsel %vm2017, %v1994, %v1741
        %v2029 = vsel %vm2017, %v1996, %v1743
        %v2031 = vsel %vm2017, %v1998, %v1745
        %v2033 = vsel %vm2017, %v2000, %v1747
        %v2035 = vsel %vm2017, %v2002, %v1749
        %v2037 = vsel %vm2017, %v2004, %v1751
        %v2039 = vsel %vm2017, %v2006, %v1753
        %v2041 = vsel %vm2017, %v2008, %v1755
        %v2043 = vsel %vm2017, %v2010, %v1757
        %v2045 = vsel %vm2017, %v2012, %v1759
        %v2047 = vsel %vm2017, %v2014, %v1761
        %v2049 = vsel %vm2017, %v2016, %v1763
        %vm2050 = vcmask 130048
        %v2052 = vsel %vm2050, %v2019, %v1765
        %v2054 = vsel %vm2050, %v2021, %v1767
        %v2056 = vsel %vm2050, %v2023, %v1769
        %v2058 = vsel %vm2050, %v2025, %v1771
        %v2060 = vsel %vm2050, %v2027, %v1773
        %v2062 = vsel %vm2050, %v2029, %v1775
        %v2064 = vsel %vm2050, %v2031, %v1777
        %v2066 = vsel %vm2050, %v2033, %v1779
        %v2068 = vsel %vm2050, %v2035, %v1781
        %v2070 = vsel %vm2050, %v2037, %v1783
        %v2072 = vsel %vm2050, %v2039, %v1785
        %v2074 = vsel %vm2050, %v2041, %v1787
        %v2076 = vsel %vm2050, %v2043, %v1789
        %v2078 = vsel %vm2050, %v2045, %v1791
        %v2080 = vsel %vm2050, %v2047, %v1793
        %v2082 = vsel %vm2050, %v2049, %v1795
        %vm2083 = vcmask 162816
        %v2085 = vsel %vm2083, %v2052, %v1800
        %v2087 = vsel %vm2083, %v2054, %v1802
        %v2089 = vsel %vm2083, %v2056, %v1804
        %v2091 = vsel %vm2083, %v2058, %v1806
        %v2093 = vsel %vm2083, %v2060, %v1808
        %v2095 = vsel %vm2083, %v2062, %v1810
        %v2097 = vsel %vm2083, %v2064, %v1812
        %v2099 = vsel %vm2083, %v2066, %v1814
        %v2101 = vsel %vm2083, %v2068, %v1816
        %v2103 = vsel %vm2083, %v2070, %v1818
        %v2105 = vsel %vm2083, %v2072, %v1820
        %v2107 = vsel %vm2083, %v2074, %v1822
        %v2109 = vsel %vm2083, %v2076, %v1824
        %v2111 = vsel %vm2083, %v2078, %v1826
        %v2113 = vsel %vm2083, %v2080, %v1828
        %v2115 = vsel %vm2083, %v2082, %v1830
        %vm2116 = vcmask 195584
        %v2118 = vsel %vm2116, %v2085, %v1835
        %v2120 = vsel %vm2116, %v2087, %v1837
        %v2122 = vsel %vm2116, %v2089, %v1839
        %v2124 = vsel %vm2116, %v2091, %v1841
        %v2126 = vsel %vm2116, %v2093, %v1843
        %v2128 = vsel %vm2116, %v2095, %v1845
        %v2130 = vsel %vm2116, %v2097, %v1847
        %v2132 = vsel %vm2116, %v2099, %v1849
        %v2134 = vsel %vm2116, %v2101, %v1851
        %v2136 = vsel %vm2116, %v2103, %v1853
        %v2138 = vsel %vm2116, %v2105, %v1855
        %v2140 = vsel %vm2116, %v2107, %v1857
        %v2142 = vsel %vm2116, %v2109, %v1859
        %v2144 = vsel %vm2116, %v2111, %v1861
        %v2146 = vsel %vm2116, %v2113, %v1863
        %v2148 = vsel %vm2116, %v2115, %v1865
        %vm2149 = vcmask 228352
        %v2151 = vsel %vm2149, %v2118, %v1870
        %v2153 = vsel %vm2149, %v2120, %v1872
        %v2155 = vsel %vm2149, %v2122, %v1874
        %v2157 = vsel %vm2149, %v2124, %v1876
        %v2159 = vsel %vm2149, %v2126, %v1878
        %v2161 = vsel %vm2149, %v2128, %v1880
        %v2163 = vsel %vm2149, %v2130, %v1882
        %v2165 = vsel %vm2149, %v2132, %v1884
        %v2167 = vsel %vm2149, %v2134, %v1886
        %v2169 = vsel %vm2149, %v2136, %v1888
        %v2171 = vsel %vm2149, %v2138, %v1890
        %v2173 = vsel %vm2149, %v2140, %v1892
        %v2175 = vsel %vm2149, %v2142, %v1894
        %v2177 = vsel %vm2149, %v2144, %v1896
        %v2179 = vsel %vm2149, %v2146, %v1898
        %v2181 = vsel %vm2149, %v2148, %v1900
        %vm2182 = vcmask 261120
        %v2184 = vsel %vm2182, %v2151, %v1905
        %v2186 = vsel %vm2182, %v2153, %v1907
        %v2188 = vsel %vm2182, %v2155, %v1909
        %v2190 = vsel %vm2182, %v2157, %v1911
        %v2192 = vsel %vm2182, %v2159, %v1913
        %v2194 = vsel %vm2182, %v2161, %v1915
        %v2196 = vsel %vm2182, %v2163, %v1917
        %v2198 = vsel %vm2182, %v2165, %v1919
        %v2200 = vsel %vm2182, %v2167, %v1921
        %v2202 = vsel %vm2182, %v2169, %v1923
        %v2204 = vsel %vm2182, %v2171, %v1925
        %v2206 = vsel %vm2182, %v2173, %v1927
        %v2208 = vsel %vm2182, %v2175, %v1929
        %v2210 = vsel %vm2182, %v2177, %v1931
        %v2212 = vsel %vm2182, %v2179, %v1933
        %v2214 = vsel %vm2182, %v2181, %v1935
        %v2215 = vld [vmem:[%s2] sm:$0xf]
        %v2216 = vld [vmem:[%s2 + $0x4] sm:$0xf]
        %v2217 = vld [vmem:[%s2 + $0x8] sm:$0xf]
        %v2218 = vld [vmem:[%s2 + $0xc] sm:$0xf]
        %v2219 = vld [vmem:[%s2 + $0x10] sm:$0x3]
        %v2225 = vunpack.c.l.b16 %v2215
        %v2226 = vunpack.c.l.b16 %v2216
        %v2227 = vunpack.c.l.b16 %v2217
        %v2228 = vunpack.c.l.b16 %v2218
        %v2229 = vunpack.c.l.b16 %v2219
        %v2230 = vpack.c.b16 %v2226, %v2225
        %v2231 = vpack.c.b16 %v2228, %v2227
        %v2232 = vpack.c.b16 %v2229, %v2229
        %vm2235 = vcmask 293888
        %v2236 = vsel %vm2235, %v2184, 0
        %v2238 = vsel %vm2235, %v2186, 0
        %v2240 = vsel %vm2235, %v2188, 0
        %v2242 = vsel %vm2235, %v2190, 0
        %v2244 = vsel %vm2235, %v2192, 0
        %v2246 = vsel %vm2235, %v2194, 0
        %v2248 = vsel %vm2235, %v2196, 0
        %v2250 = vsel %vm2235, %v2198, 0
        %v2252 = vsel %vm2235, %v2200, 0
        %v2254 = vsel %vm2235, %v2202, 0
        %v2256 = vsel %vm2235, %v2204, 0
        %v2258 = vsel %vm2235, %v2206, 0
        %v2260 = vsel %vm2235, %v2208, 0
        %v2262 = vsel %vm2235, %v2210, 0
        %v2264 = vsel %vm2235, %v2212, 0
        %v2266 = vsel %vm2235, %v2214, 0
        %v2269 = vsel %vm1033, %v2232, 0
        %2271 = vmatprep.subr.bf16.mxu0 0
        %2272 = vmatpush1.bf16.msra.mxu0 %v2230
        %2273 = vmatprep.subr.bf16.mxu0 0
        %2274 = vmatpush1.bf16.msra.mxu0 %v2231
        %2275 = vmatprep.subr.bf16.mxu0 0
        %2276 = vmatpush1.bf16.msra.mxu0 %v2269
        %2277 = vmatprep.subr.bf16.mxu0 0
        %2278 = vmatpush1.bf16.msra.mxu0 0
        %2279 = vmatprep.subr.bf16.mxu0 0
        %2280 = vmatpush1.bf16.msra.mxu0 0
        %2281 = vmatprep.subr.bf16.mxu0 0
        %2282 = vmatpush1.bf16.msra.mxu0 0
        %2283 = vmatprep.subr.bf16.mxu0 0
        %2284 = vmatpush1.bf16.msra.mxu0 0
        %2285 = vmatprep.subr.bf16.mxu0 0
        %2286 = vmatpush1.bf16.msra.mxu0 0
        %2287 = vmatprep.subr.bf16.mxu0 0
        %2288 = vmatpush1.bf16.msra.mxu0 0
        %2289 = vmatprep.subr.bf16.mxu0 0
        %2290 = vmatpush1.bf16.msra.mxu0 0
        %2291 = vmatprep.subr.bf16.mxu0 0
        %2292 = vmatpush1.bf16.msra.mxu0 0
        %2293 = vmatprep.subr.bf16.mxu0 0
        %2294 = vmatpush1.bf16.msra.mxu0 0
        %2295 = vmatprep.subr.bf16.mxu0 0
        %2296 = vmatpush1.bf16.msra.mxu0 0
        %2297 = vmatprep.subr.bf16.mxu0 0
        %2298 = vmatpush1.bf16.msra.mxu0 0
        %2299 = vmatprep.subr.bf16.mxu0 0
        %2300 = vmatpush1.bf16.msra.mxu0 0
        %2301 = vmatprep.subr.bf16.mxu0 0
        %2302 = vmatpush1.bf16.msra.mxu0 0
        %2303 = vmatprep.mubr.bf16.mxu0 0
        %2304 = vmatmul.mubr.bf16.gmra.mrb[0].mxu0 %v2236
        %v2305 = vpop.f32.mrb[0].mxu0
        %v2306 = vadd.f32 0.0, %v2305
        %v2307 = vpop.f32.mrb[0].mxu0
        %v2308 = vpop.f32.mrb[0].mxu0
        %v2309 = vadd.f32 0.0, %v2308
        %v2310 = vpop.f32.mrb[0].mxu0
        %2311 = vmatprep.mubr.bf16.mxu0 0
        %2312 = vmatmul.mubr.bf16.gmra.mrb[0].mxu0 %v2238
        %v2313 = vpop.f32.mrb[0].mxu0
        %v2314 = vadd.f32 0.0, %v2313
        %v2315 = vpop.f32.mrb[0].mxu0
        %v2316 = vpop.f32.mrb[0].mxu0
        %v2317 = vadd.f32 0.0, %v2316
        %v2318 = vpop.f32.mrb[0].mxu0
        %2319 = vmatprep.mubr.bf16.mxu0 0
        %2320 = vmatmul.mubr.bf16.gmra.mrb[0].mxu0 %v2240
        %v2321 = vpop.f32.mrb[0].mxu0
        %v2322 = vadd.f32 0.0, %v2321
        %v2323 = vpop.f32.mrb[0].mxu0
        %v2324 = vpop.f32.mrb[0].mxu0
        %v2325 = vadd.f32 0.0, %v2324
        %v2326 = vpop.f32.mrb[0].mxu0
        %2327 = vmatprep.mubr.bf16.mxu0 0
        %2328 = vmatmul.mubr.bf16.gmra.mrb[0].mxu0 %v2242
        %v2329 = vpop.f32.mrb[0].mxu0
        %v2330 = vadd.f32 0.0, %v2329
        %v2331 = vpop.f32.mrb[0].mxu0
        %v2332 = vpop.f32.mrb[0].mxu0
        %v2333 = vadd.f32 0.0, %v2332
        %v2334 = vpop.f32.mrb[0].mxu0
        %2335 = vmatprep.mubr.bf16.mxu0 0
        %2336 = vmatmul.mubr.bf16.gmra.mrb[0].mxu0 %v2244
        %v2337 = vpop.f32.mrb[0].mxu0
        %v2338 = vadd.f32 0.0, %v2337
        %v2339 = vpop.f32.mrb[0].mxu0
        %v2340 = vpop.f32.mrb[0].mxu0
        %v2341 = vadd.f32 0.0, %v2340
        %v2342 = vpop.f32.mrb[0].mxu0
        %2343 = vmatprep.mubr.bf16.mxu0 0
        %2344 = vmatmul.mubr.bf16.gmra.mrb[0].mxu0 %v2246
        %v2345 = vpop.f32.mrb[0].mxu0
        %v2346 = vadd.f32 0.0, %v2345
        %v2347 = vpop.f32.mrb[0].mxu0
        %v2348 = vpop.f32.mrb[0].mxu0
        %v2349 = vadd.f32 0.0, %v2348
        %v2350 = vpop.f32.mrb[0].mxu0
        %2351 = vmatprep.mubr.bf16.mxu0 0
        %2352 = vmatmul.mubr.bf16.gmra.mrb[0].mxu0 %v2248
        %v2353 = vpop.f32.mrb[0].mxu0
        %v2354 = vadd.f32 0.0, %v2353
        %v2355 = vpop.f32.mrb[0].mxu0
        %v2356 = vpop.f32.mrb[0].mxu0
        %v2357 = vadd.f32 0.0, %v2356
        %v2358 = vpop.f32.mrb[0].mxu0
        %2359 = vmatprep.mubr.bf16.mxu0 0
        %2360 = vmatmul.mubr.bf16.gmra.mrb[0].mxu0 %v2250
        %v2361 = vpop.f32.mrb[0].mxu0
        %v2362 = vadd.f32 0.0, %v2361
        %v2363 = vpop.f32.mrb[0].mxu0
        %v2364 = vpop.f32.mrb[0].mxu0
        %v2365 = vadd.f32 0.0, %v2364
        %v2366 = vpop.f32.mrb[0].mxu0
        %2367 = vmatprep.mubr.bf16.mxu0 0
        %2368 = vmatmul.mubr.bf16.gmra.mrb[0].mxu0 %v2252
        %v2369 = vpop.f32.mrb[0].mxu0
        %v2370 = vadd.f32 0.0, %v2369
        %v2371 = vpop.f32.mrb[0].mxu0
        %v2372 = vpop.f32.mrb[0].mxu0
        %v2373 = vadd.f32 0.0, %v2372
        %v2374 = vpop.f32.mrb[0].mxu0
        %2375 = vmatprep.mubr.bf16.mxu0 0
        %2376 = vmatmul.mubr.bf16.gmra.mrb[0].mxu0 %v2254
        %v2377 = vpop.f32.mrb[0].mxu0
        %v2378 = vadd.f32 0.0, %v2377
        %v2379 = vpop.f32.mrb[0].mxu0
        %v2380 = vpop.f32.mrb[0].mxu0
        %v2381 = vadd.f32 0.0, %v2380
        %v2382 = vpop.f32.mrb[0].mxu0
        %2383 = vmatprep.mubr.bf16.mxu0 0
        %2384 = vmatmul.mubr.bf16.gmra.mrb[0].mxu0 %v2256
        %v2385 = vpop.f32.mrb[0].mxu0
        %v2386 = vadd.f32 0.0, %v2385
        %v2387 = vpop.f32.mrb[0].mxu0
        %v2388 = vpop.f32.mrb[0].mxu0
        %v2389 = vadd.f32 0.0, %v2388
        %v2390 = vpop.f32.mrb[0].mxu0
        %2391 = vmatprep.mubr.bf16.mxu0 0
        %2392 = vmatmul.mubr.bf16.gmra.mrb[0].mxu0 %v2258
        %v2393 = vpop.f32.mrb[0].mxu0
        %v2394 = vadd.f32 0.0, %v2393
        %v2395 = vpop.f32.mrb[0].mxu0
        %v2396 = vpop.f32.mrb[0].mxu0
        %v2397 = vadd.f32 0.0, %v2396
        %v2398 = vpop.f32.mrb[0].mxu0
        %2399 = vmatprep.mubr.bf16.mxu0 0
        %2400 = vmatmul.mubr.bf16.gmra.mrb[0].mxu0 %v2260
        %v2401 = vpop.f32.mrb[0].mxu0
        %v2402 = vadd.f32 0.0, %v2401
        %v2403 = vpop.f32.mrb[0].mxu0
        %v2404 = vpop.f32.mrb[0].mxu0
        %v2405 = vadd.f32 0.0, %v2404
        %v2406 = vpop.f32.mrb[0].mxu0
        %2407 = vmatprep.mubr.bf16.mxu0 0
        %2408 = vmatmul.mubr.bf16.gmra.mrb[0].mxu0 %v2262
        %v2409 = vpop.f32.mrb[0].mxu0
        %v2410 = vadd.f32 0.0, %v2409
        %v2411 = vpop.f32.mrb[0].mxu0
        %v2412 = vpop.f32.mrb[0].mxu0
        %v2413 = vadd.f32 0.0, %v2412
        %v2414 = vpop.f32.mrb[0].mxu0
        %2415 = vmatprep.mubr.bf16.mxu0 0
        %2416 = vmatmul.mubr.bf16.gmra.mrb[0].mxu0 %v2264
        %v2417 = vpop.f32.mrb[0].mxu0
        %v2418 = vadd.f32 0.0, %v2417
        %v2419 = vpop.f32.mrb[0].mxu0
        %v2420 = vpop.f32.mrb[0].mxu0
        %v2421 = vadd.f32 0.0, %v2420
        %v2422 = vpop.f32.mrb[0].mxu0
        %2423 = vmatprep.mubr.bf16.mxu0 0
        %2424 = vmatmul.mubr.bf16.gmra.mrb[0].mxu0 %v2266
        %v2425 = vpop.f32.mrb[0].mxu0
        %v2426 = vadd.f32 0.0, %v2425
        %v2427 = vpop.f32.mrb[0].mxu0
        %v2428 = vpop.f32.mrb[0].mxu0
        %v2429 = vadd.f32 0.0, %v2428
        %v2430 = vpop.f32.mrb[0].mxu0
        %2431 = vdwg.mxu0
        %vm2432 = vsmask.f32 3328
        %vm2433 = vsmask.f32 7440
        %vm2434 = vmor %vm2432, %vm2433
        %v2436 = vshrl.u32 %v389, 16
        %v2438 = vrot.slane %v2436, 4
        %v2439 = vshll.u32 %v389, 16
        %v2441 = vrot.slane %v2439, 5
        %v2442 = vor.u32 %v2438, %v2441
        %v2443 = vrot.slane %v2442, 4
        %v2445 = vshll.u32 %v390, 16
        %v2447 = vrot.slane %v2445, 5
        %v2448 = vsel %vm2434, %v2443, %v2447
        %v2449 = vshrl.u32 %v390, 16
        %v2451 = vrot.slane %v2449, 4
        %v2452 = vor.u32 %v2451, %v2447
        %v2453 = vrot.slane %v2452, 4
        %v2455 = vshll.u32 %v391, 16
        %v2457 = vrot.slane %v2455, 5
        %v2458 = vsel %vm2434, %v2453, %v2457
        %v2459 = vrot.slane %v1362, 4
        %v2460 = vrot.slane %v1365, 5
        %v2461 = vor.u32 %v2459, %v2460
        %v2462 = vrot.slane %v2461, 4
        %v2463 = vrot.slane %v1374, 5
        %v2464 = vsel %vm2434, %v2462, %v2463
        %v2465 = vrot.slane %v1371, 4
        %v2466 = vor.u32 %v2465, %v2463
        %v2467 = vrot.slane %v2466, 4
        %v2468 = vrot.slane %v1384, 5
        %v2469 = vsel %vm2434, %v2467, %v2468
        %v2470 = vrot.slane %v456, 4
        %v2471 = vrot.slane %v459, 5
        %v2472 = vor.u32 %v2470, %v2471
        %v2473 = vrot.slane %v2472, 4
        %v2474 = vrot.slane %v468, 5
        %v2475 = vsel %vm2434, %v2473, %v2474
        %v2476 = vrot.slane %v465, 4
        %v2477 = vor.u32 %v2476, %v2474
        %v2478 = vrot.slane %v2477, 4
        %v2479 = vrot.slane %v478, 5
        %v2480 = vsel %vm2434, %v2478, %v2479
        %v2481 = vrot.slane %v484, 4
        %v2482 = vrot.slane %v487, 5
        %v2483 = vor.u32 %v2481, %v2482
        %v2484 = vrot.slane %v2483, 4
        %v2485 = vrot.slane %v496, 5
        %v2486 = vsel %vm2434, %v2484, %v2485
        %v2487 = vrot.slane %v493, 4
        %v2488 = vor.u32 %v2487, %v2485
        %v2489 = vrot.slane %v2488, 4
        %v2490 = vrot.slane %v506, 5
        %v2491 = vsel %vm2434, %v2489, %v2490
        %v2492 = vrot.slane %v512, 4
        %v2493 = vrot.slane %v515, 5
        %v2494 = vor.u32 %v2492, %v2493
        %v2495 = vrot.slane %v2494, 4
        %v2496 = vrot.slane %v524, 5
        %v2497 = vsel %vm2434, %v2495, %v2496
        %v2498 = vrot.slane %v521, 4
        %v2499 = vor.u32 %v2498, %v2496
        %v2500 = vrot.slane %v2499, 4
        %v2501 = vrot.slane %v534, 5
        %v2502 = vsel %vm2434, %v2500, %v2501
        %v2503 = vrot.slane %v540, 4
        %v2504 = vrot.slane %v543, 5
        %v2505 = vor.u32 %v2503, %v2504
        %v2506 = vrot.slane %v2505, 4
        %v2507 = vrot.slane %v552, 5
        %v2508 = vsel %vm2434, %v2506, %v2507
        %v2509 = vrot.slane %v549, 4
        %v2510 = vor.u32 %v2509, %v2507
        %v2511 = vrot.slane %v2510, 4
        %v2512 = vrot.slane %v562, 5
        %v2513 = vsel %vm2434, %v2511, %v2512
        %v2514 = vrot.slane %v568, 4
        %v2515 = vrot.slane %v571, 5
        %v2516 = vor.u32 %v2514, %v2515
        %v2517 = vrot.slane %v2516, 4
        %v2518 = vrot.slane %v580, 5
        %v2519 = vsel %vm2434, %v2517, %v2518
        %v2520 = vrot.slane %v577, 4
        %v2521 = vor.u32 %v2520, %v2518
        %v2522 = vrot.slane %v2521, 4
        %v2523 = vrot.slane %v590, 5
        %v2524 = vsel %vm2434, %v2522, %v2523
        %v2525 = vrot.slane %v596, 4
        %v2526 = vrot.slane %v599, 5
        %v2527 = vor.u32 %v2525, %v2526
        %v2528 = vrot.slane %v2527, 4
        %v2529 = vrot.slane %v608, 5
        %v2530 = vsel %vm2434, %v2528, %v2529
        %v2531 = vrot.slane %v605, 4
        %v2532 = vor.u32 %v2531, %v2529
        %v2533 = vrot.slane %v2532, 4
        %v2534 = vrot.slane %v618, 5
        %v2535 = vsel %vm2434, %v2533, %v2534
        %v2536 = vrot.slane %v624, 4
        %v2537 = vrot.slane %v627, 5
        %v2538 = vor.u32 %v2536, %v2537
        %v2539 = vrot.slane %v2538, 4
        %v2540 = vrot.slane %v636, 5
        %v2541 = vsel %vm2434, %v2539, %v2540
        %v2542 = vrot.slane %v633, 4
        %v2543 = vor.u32 %v2542, %v2540
        %v2544 = vrot.slane %v2543, 4
        %v2545 = vrot.slane %v646, 5
        %v2546 = vsel %vm2434, %v2544, %v2545
        %v2547 = vrot.slane %v652, 4
        %v2548 = vrot.slane %v655, 5
        %v2549 = vor.u32 %v2547, %v2548
        %v2550 = vrot.slane %v2549, 4
        %v2551 = vrot.slane %v664, 5
        %v2552 = vsel %vm2434, %v2550, %v2551
        %v2553 = vrot.slane %v661, 4
        %v2554 = vor.u32 %v2553, %v2551
        %v2555 = vrot.slane %v2554, 4
        %v2556 = vrot.slane %v674, 5
        %v2557 = vsel %vm2434, %v2555, %v2556
        %v2558 = vrot.slane %v680, 4
        %v2559 = vrot.slane %v683, 5
        %v2560 = vor.u32 %v2558, %v2559
        %v2561 = vrot.slane %v2560, 4
        %v2562 = vrot.slane %v692, 5
        %v2563 = vsel %vm2434, %v2561, %v2562
        %v2564 = vrot.slane %v689, 4
        %v2565 = vor.u32 %v2564, %v2562
        %v2566 = vrot.slane %v2565, 4
        %v2567 = vrot.slane %v702, 5
        %v2568 = vsel %vm2434, %v2566, %v2567
        %v2569 = vrot.slane %v708, 4
        %v2570 = vrot.slane %v711, 5
        %v2571 = vor.u32 %v2569, %v2570
        %v2572 = vrot.slane %v2571, 4
        %v2573 = vrot.slane %v720, 5
        %v2574 = vsel %vm2434, %v2572, %v2573
        %v2575 = vrot.slane %v717, 4
        %v2576 = vor.u32 %v2575, %v2573
        %v2577 = vrot.slane %v2576, 4
        %v2578 = vrot.slane %v730, 5
        %v2579 = vsel %vm2434, %v2577, %v2578
        %v2580 = vrot.slane %v736, 4
        %v2581 = vrot.slane %v739, 5
        %v2582 = vor.u32 %v2580, %v2581
        %v2583 = vrot.slane %v2582, 4
        %v2584 = vrot.slane %v748, 5
        %v2585 = vsel %vm2434, %v2583, %v2584
        %v2586 = vrot.slane %v745, 4
        %v2587 = vor.u32 %v2586, %v2584
        %v2588 = vrot.slane %v2587, 4
        %v2589 = vrot.slane %v758, 5
        %v2590 = vsel %vm2434, %v2588, %v2589
        %v2591 = vrot.slane %v764, 4
        %v2592 = vrot.slane %v767, 5
        %v2593 = vor.u32 %v2591, %v2592
        %v2594 = vrot.slane %v2593, 4
        %v2595 = vrot.slane %v776, 5
        %v2596 = vsel %vm2434, %v2594, %v2595
        %v2597 = vrot.slane %v773, 4
        %v2598 = vor.u32 %v2597, %v2595
        %v2599 = vrot.slane %v2598, 4
        %v2600 = vrot.slane %v786, 5
        %v2601 = vsel %vm2434, %v2599, %v2600
        %v2602 = vrot.slane %v792, 4
        %v2603 = vrot.slane %v795, 5
        %v2604 = vor.u32 %v2602, %v2603
        %v2605 = vrot.slane %v2604, 4
        %v2606 = vrot.slane %v804, 5
        %v2607 = vsel %vm2434, %v2605, %v2606
        %v2608 = vrot.slane %v801, 4
        %v2609 = vor.u32 %v2608, %v2606
        %v2610 = vrot.slane %v2609, 4
        %v2611 = vrot.slane %v814, 5
        %v2612 = vsel %vm2434, %v2610, %v2611
        %v2613 = vrot.slane %v820, 4
        %v2614 = vrot.slane %v823, 5
        %v2615 = vor.u32 %v2613, %v2614
        %v2616 = vrot.slane %v2615, 4
        %v2617 = vrot.slane %v832, 5
        %v2618 = vsel %vm2434, %v2616, %v2617
        %v2619 = vrot.slane %v829, 4
        %v2620 = vor.u32 %v2619, %v2617
        %v2621 = vrot.slane %v2620, 4
        %v2622 = vrot.slane %v842, 5
        %v2623 = vsel %vm2434, %v2621, %v2622
        %v2624 = vrot.slane %v2436, 5
        %v2625 = vrot.slane %v2439, 6
        %v2626 = vor.u32 %v2624, %v2625
        %v2627 = vrot.slane %v2626, 4
        %v2628 = vrot.slane %v2449, 5
        %v2629 = vrot.slane %v2445, 6
        %v2630 = vor.u32 %v2628, %v2629
        %v2631 = vsel %vm454, %v2627, %v2630
        %v2632 = vrot.slane %v2630, 4
        %v2633 = vshrl.u32 %v391, 16
        %v2635 = vrot.slane %v2633, 5
        %v2636 = vrot.slane %v2455, 6
        %v2637 = vor.u32 %v2635, %v2636
        %v2638 = vsel %vm454, %v2632, %v2637
        %vm2639 = vsmask.f32 1280
        %vm2640 = vsmask.f32 5392
        %vm2641 = vmor %vm2639, %vm2640
        %v2642 = vrot.slane %v2436, 6
        %v2643 = vrot.slane %v2439, 7
        %v2644 = vor.u32 %v2642, %v2643
        %v2645 = vrot.slane %v2644, 4
        %v2646 = vrot.slane %v2449, 6
        %v2647 = vrot.slane %v2445, 7
        %v2648 = vor.u32 %v2646, %v2647
        %v2649 = vsel %vm2641, %v2645, %v2648
        %v2650 = vrot.slane %v2648, 4
        %v2651 = vrot.slane %v2633, 6
        %v2652 = vrot.slane %v2455, 7
        %v2653 = vor.u32 %v2651, %v2652
        %v2654 = vsel %vm2641, %v2650, %v2653
        %v2655 = vrot.slane %v1362, 6
        %v2656 = vrot.slane %v1365, 7
        %v2657 = vor.u32 %v2655, %v2656
        %v2658 = vrot.slane %v2657, 4
        %v2659 = vrot.slane %v1371, 6
        %v2660 = vrot.slane %v1374, 7
        %v2661 = vor.u32 %v2659, %v2660
        %v2662 = vsel %vm2641, %v2658, %v2661
        %v2663 = vrot.slane %v2661, 4
        %v2664 = vrot.slane %v1381, 6
        %v2665 = vrot.slane %v1384, 7
        %v2666 = vor.u32 %v2664, %v2665
        %v2667 = vsel %vm2641, %v2663, %v2666
        %v2668 = vrot.slane %v456, 6
        %v2669 = vrot.slane %v459, 7
        %v2670 = vor.u32 %v2668, %v2669
        %v2671 = vrot.slane %v2670, 4
        %v2672 = vrot.slane %v465, 6
        %v2673 = vrot.slane %v468, 7
        %v2674 = vor.u32 %v2672, %v2673
        %v2675 = vsel %vm2641, %v2671, %v2674
        %v2676 = vrot.slane %v2674, 4
        %v2677 = vrot.slane %v475, 6
        %v2678 = vrot.slane %v478, 7
        %v2679 = vor.u32 %v2677, %v2678
        %v2680 = vsel %vm2641, %v2676, %v2679
        %v2681 = vrot.slane %v484, 6
        %v2682 = vrot.slane %v487, 7
        %v2683 = vor.u32 %v2681, %v2682
        %v2684 = vrot.slane %v2683, 4
        %v2685 = vrot.slane %v493, 6
        %v2686 = vrot.slane %v496, 7
        %v2687 = vor.u32 %v2685, %v2686
        %v2688 = vsel %vm2641, %v2684, %v2687
        %v2689 = vrot.slane %v2687, 4
        %v2690 = vrot.slane %v503, 6
        %v2691 = vrot.slane %v506, 7
        %v2692 = vor.u32 %v2690, %v2691
        %v2693 = vsel %vm2641, %v2689, %v2692
        %v2694 = vrot.slane %v512, 6
        %v2695 = vrot.slane %v515, 7
        %v2696 = vor.u32 %v2694, %v2695
        %v2697 = vrot.slane %v2696, 4
        %v2698 = vrot.slane %v521, 6
        %v2699 = vrot.slane %v524, 7
        %v2700 = vor.u32 %v2698, %v2699
        %v2701 = vsel %vm2641, %v2697, %v2700
        %v2702 = vrot.slane %v2700, 4
        %v2703 = vrot.slane %v531, 6
        %v2704 = vrot.slane %v534, 7
        %v2705 = vor.u32 %v2703, %v2704
        %v2706 = vsel %vm2641, %v2702, %v2705
        %v2707 = vrot.slane %v540, 6
        %v2708 = vrot.slane %v543, 7
        %v2709 = vor.u32 %v2707, %v2708
        %v2710 = vrot.slane %v2709, 4
        %v2711 = vrot.slane %v549, 6
        %v2712 = vrot.slane %v552, 7
        %v2713 = vor.u32 %v2711, %v2712
        %v2714 = vsel %vm2641, %v2710, %v2713
        %v2715 = vrot.slane %v2713, 4
        %v2716 = vrot.slane %v559, 6
        %v2717 = vrot.slane %v562, 7
        %v2718 = vor.u32 %v2716, %v2717
        %v2719 = vsel %vm2641, %v2715, %v2718
        %v2720 = vrot.slane %v568, 6
        %v2721 = vrot.slane %v571, 7
        %v2722 = vor.u32 %v2720, %v2721
        %v2723 = vrot.slane %v2722, 4
        %v2724 = vrot.slane %v577, 6
        %v2725 = vrot.slane %v580, 7
        %v2726 = vor.u32 %v2724, %v2725
        %v2727 = vsel %vm2641, %v2723, %v2726
        %v2728 = vrot.slane %v2726, 4
        %v2729 = vrot.slane %v587, 6
        %v2730 = vrot.slane %v590, 7
        %v2731 = vor.u32 %v2729, %v2730
        %v2732 = vsel %vm2641, %v2728, %v2731
        %v2733 = vrot.slane %v596, 6
        %v2734 = vrot.slane %v599, 7
        %v2735 = vor.u32 %v2733, %v2734
        %v2736 = vrot.slane %v2735, 4
        %v2737 = vrot.slane %v605, 6
        %v2738 = vrot.slane %v608, 7
        %v2739 = vor.u32 %v2737, %v2738
        %v2740 = vsel %vm2641, %v2736, %v2739
        %v2741 = vrot.slane %v2739, 4
        %v2742 = vrot.slane %v615, 6
        %v2743 = vrot.slane %v618, 7
        %v2744 = vor.u32 %v2742, %v2743
        %v2745 = vsel %vm2641, %v2741, %v2744
        %v2746 = vrot.slane %v624, 6
        %v2747 = vrot.slane %v627, 7
        %v2748 = vor.u32 %v2746, %v2747
        %v2749 = vrot.slane %v2748, 4
        %v2750 = vrot.slane %v633, 6
        %v2751 = vrot.slane %v636, 7
        %v2752 = vor.u32 %v2750, %v2751
        %v2753 = vsel %vm2641, %v2749, %v2752
        %v2754 = vrot.slane %v2752, 4
        %v2755 = vrot.slane %v643, 6
        %v2756 = vrot.slane %v646, 7
        %v2757 = vor.u32 %v2755, %v2756
        %v2758 = vsel %vm2641, %v2754, %v2757
        %v2759 = vrot.slane %v652, 6
        %v2760 = vrot.slane %v655, 7
        %v2761 = vor.u32 %v2759, %v2760
        %v2762 = vrot.slane %v2761, 4
        %v2763 = vrot.slane %v661, 6
        %v2764 = vrot.slane %v664, 7
        %v2765 = vor.u32 %v2763, %v2764
        %v2766 = vsel %vm2641, %v2762, %v2765
        %v2767 = vrot.slane %v2765, 4
        %v2768 = vrot.slane %v671, 6
        %v2769 = vrot.slane %v674, 7
        %v2770 = vor.u32 %v2768, %v2769
        %v2771 = vsel %vm2641, %v2767, %v2770
        %v2772 = vrot.slane %v680, 6
        %v2773 = vrot.slane %v683, 7
        %v2774 = vor.u32 %v2772, %v2773
        %v2775 = vrot.slane %v2774, 4
        %v2776 = vrot.slane %v689, 6
        %v2777 = vrot.slane %v692, 7
        %v2778 = vor.u32 %v2776, %v2777
        %v2779 = vsel %vm2641, %v2775, %v2778
        %v2780 = vrot.slane %v2778, 4
        %v2781 = vrot.slane %v699, 6
        %v2782 = vrot.slane %v702, 7
        %v2783 = vor.u32 %v2781, %v2782
        %v2784 = vsel %vm2641, %v2780, %v2783
        %v2785 = vrot.slane %v708, 6
        %v2786 = vrot.slane %v711, 7
        %v2787 = vor.u32 %v2785, %v2786
        %v2788 = vrot.slane %v2787, 4
        %v2789 = vrot.slane %v717, 6
        %v2790 = vrot.slane %v720, 7
        %v2791 = vor.u32 %v2789, %v2790
        %v2792 = vsel %vm2641, %v2788, %v2791
        %v2793 = vrot.slane %v2791, 4
        %v2794 = vrot.slane %v727, 6
        %v2795 = vrot.slane %v730, 7
        %v2796 = vor.u32 %v2794, %v2795
        %v2797 = vsel %vm2641, %v2793, %v2796
        %v2798 = vrot.slane %v736, 6
        %v2799 = vrot.slane %v739, 7
        %v2800 = vor.u32 %v2798, %v2799
        %v2801 = vrot.slane %v2800, 4
        %v2802 = vrot.slane %v745, 6
        %v2803 = vrot.slane %v748, 7
        %v2804 = vor.u32 %v2802, %v2803
        %v2805 = vsel %vm2641, %v2801, %v2804
        %v2806 = vrot.slane %v2804, 4
        %v2807 = vrot.slane %v755, 6
        %v2808 = vrot.slane %v758, 7
        %v2809 = vor.u32 %v2807, %v2808
        %v2810 = vsel %vm2641, %v2806, %v2809
        %v2811 = vrot.slane %v764, 6
        %v2812 = vrot.slane %v767, 7
        %v2813 = vor.u32 %v2811, %v2812
        %v2814 = vrot.slane %v2813, 4
        %v2815 = vrot.slane %v773, 6
        %v2816 = vrot.slane %v776, 7
        %v2817 = vor.u32 %v2815, %v2816
        %v2818 = vsel %vm2641, %v2814, %v2817
        %v2819 = vrot.slane %v2817, 4
        %v2820 = vrot.slane %v783, 6
        %v2821 = vrot.slane %v786, 7
        %v2822 = vor.u32 %v2820, %v2821
        %v2823 = vsel %vm2641, %v2819, %v2822
        %v2824 = vrot.slane %v792, 6
        %v2825 = vrot.slane %v795, 7
        %v2826 = vor.u32 %v2824, %v2825
        %v2827 = vrot.slane %v2826, 4
        %v2828 = vrot.slane %v801, 6
        %v2829 = vrot.slane %v804, 7
        %v2830 = vor.u32 %v2828, %v2829
        %v2831 = vsel %vm2641, %v2827, %v2830
        %v2832 = vrot.slane %v2830, 4
        %v2833 = vrot.slane %v811, 6
        %v2834 = vrot.slane %v814, 7
        %v2835 = vor.u32 %v2833, %v2834
        %v2836 = vsel %vm2641, %v2832, %v2835
        %v2837 = vrot.slane %v820, 6
        %v2838 = vrot.slane %v823, 7
        %v2839 = vor.u32 %v2837, %v2838
        %v2840 = vrot.slane %v2839, 4
        %v2841 = vrot.slane %v829, 6
        %v2842 = vrot.slane %v832, 7
        %v2843 = vor.u32 %v2841, %v2842
        %v2844 = vsel %vm2641, %v2840, %v2843
        %v2845 = vrot.slane %v2843, 4
        %v2846 = vrot.slane %v839, 6
        %v2847 = vrot.slane %v842, 7
        %v2848 = vor.u32 %v2846, %v2847
        %v2849 = vsel %vm2641, %v2845, %v2848
        %v2850 = vrot.slane %v848, 4
        %v2851 = vrot.slane %v851, 5
        %v2852 = vor.u32 %v2850, %v2851
        %v2853 = vrot.slane %v2852, 4
        %v2854 = vrot.slane %v860, 5
        %v2855 = vsel %vm2434, %v2853, %v2854
        %v2856 = vrot.slane %v857, 4
        %v2857 = vor.u32 %v2856, %v2854
        %v2858 = vrot.slane %v2857, 4
        %v2859 = vrot.slane %v870, 5
        %v2860 = vsel %vm2434, %v2858, %v2859
        %v2861 = vrot.slane %v876, 4
        %v2862 = vrot.slane %v879, 5
        %v2863 = vor.u32 %v2861, %v2862
        %v2864 = vrot.slane %v2863, 4
        %v2865 = vrot.slane %v888, 5
        %v2866 = vsel %vm2434, %v2864, %v2865
        %v2867 = vrot.slane %v885, 4
        %v2868 = vor.u32 %v2867, %v2865
        %v2869 = vrot.slane %v2868, 4
        %v2870 = vrot.slane %v898, 5
        %v2871 = vsel %vm2434, %v2869, %v2870
        %v2872 = vrot.slane %v848, 6
        %v2873 = vrot.slane %v851, 7
        %v2874 = vor.u32 %v2872, %v2873
        %v2875 = vrot.slane %v2874, 4
        %v2876 = vrot.slane %v857, 6
        %v2877 = vrot.slane %v860, 7
        %v2878 = vor.u32 %v2876, %v2877
        %v2879 = vsel %vm2641, %v2875, %v2878
        %v2880 = vrot.slane %v2878, 4
        %v2881 = vrot.slane %v867, 6
        %v2882 = vrot.slane %v870, 7
        %v2883 = vor.u32 %v2881, %v2882
        %v2884 = vsel %vm2641, %v2880, %v2883
        %v2885 = vrot.slane %v876, 6
        %v2886 = vrot.slane %v879, 7
        %v2887 = vor.u32 %v2885, %v2886
        %v2888 = vrot.slane %v2887, 4
        %v2889 = vrot.slane %v885, 6
        %v2890 = vrot.slane %v888, 7
        %v2891 = vor.u32 %v2889, %v2890
        %v2892 = vsel %vm2641, %v2888, %v2891
        %v2893 = vrot.slane %v2891, 4
        %v2894 = vrot.slane %v895, 6
        %v2895 = vrot.slane %v898, 7
        %v2896 = vor.u32 %v2894, %v2895
        %v2897 = vsel %vm2641, %v2893, %v2896
        %v2898 = vrot.slane %v1532, 4
        %v2899 = vrot.slane %v1535, 5
        %v2900 = vor.u32 %v2898, %v2899
        %v2901 = vrot.slane %v2900, 4
        %v2902 = vrot.slane %v1544, 5
        %v2903 = vsel %vm2434, %v2901, %v2902
        %v2904 = vrot.slane %v1541, 4
        %v2905 = vor.u32 %v2904, %v2902
        %v2906 = vrot.slane %v2905, 4
        %v2907 = vrot.slane %v1554, 5
        %v2908 = vsel %vm2434, %v2906, %v2907
        %v2910 = vshrl.u32 %v446, 16
        %v2912 = vrot.slane %v2910, 4
        %v2913 = vshll.u32 %v446, 16
        %v2915 = vrot.slane %v2913, 5
        %v2916 = vor.u32 %v2912, %v2915
        %v2917 = vrot.slane %v2916, 4
        %v2919 = vshll.u32 %v447, 16
        %v2921 = vrot.slane %v2919, 5
        %v2922 = vsel %vm2434, %v2917, %v2921
        %v2923 = vshrl.u32 %v447, 16
        %v2925 = vrot.slane %v2923, 4
        %v2926 = vor.u32 %v2925, %v2921
        %v2927 = vrot.slane %v2926, 4
        %v2929 = vshll.u32 %v448, 16
        %v2931 = vrot.slane %v2929, 5
        %v2932 = vsel %vm2434, %v2927, %v2931
        %v2933 = vrot.slane %v2910, 5
        %v2934 = vrot.slane %v2913, 6
        %v2935 = vor.u32 %v2933, %v2934
        %v2936 = vrot.slane %v2935, 4
        %v2937 = vrot.slane %v2923, 5
        %v2938 = vrot.slane %v2919, 6
        %v2939 = vor.u32 %v2937, %v2938
        %v2940 = vsel %vm454, %v2936, %v2939
        %v2941 = vrot.slane %v2939, 4
        %v2942 = vshrl.u32 %v448, 16
        %v2944 = vrot.slane %v2942, 5
        %v2945 = vrot.slane %v2929, 6
        %v2946 = vor.u32 %v2944, %v2945
        %v2947 = vsel %vm454, %v2941, %v2946
        %v2948 = vrot.slane %v1532, 6
        %v2949 = vrot.slane %v1535, 7
        %v2950 = vor.u32 %v2948, %v2949
        %v2951 = vrot.slane %v2950, 4
        %v2952 = vrot.slane %v1541, 6
        %v2953 = vrot.slane %v1544, 7
        %v2954 = vor.u32 %v2952, %v2953
        %v2955 = vsel %vm2641, %v2951, %v2954
        %v2956 = vrot.slane %v2954, 4
        %v2957 = vrot.slane %v1551, 6
        %v2958 = vrot.slane %v1554, 7
        %v2959 = vor.u32 %v2957, %v2958
        %v2960 = vsel %vm2641, %v2956, %v2959
        %v2961 = vrot.slane %v2910, 6
        %v2962 = vrot.slane %v2913, 7
        %v2963 = vor.u32 %v2961, %v2962
        %v2964 = vrot.slane %v2963, 4
        %v2965 = vrot.slane %v2923, 6
        %v2966 = vrot.slane %v2919, 7
        %v2967 = vor.u32 %v2965, %v2966
        %v2968 = vsel %vm2641, %v2964, %v2967
        %v2969 = vrot.slane %v2967, 4
        %v2970 = vrot.slane %v2942, 6
        %v2971 = vrot.slane %v2929, 7
        %v2972 = vor.u32 %v2970, %v2971
        %v2973 = vsel %vm2641, %v2969, %v2972
        %v2974 = vunpack.c.l.b16 %v2448
        %v2975 = vunpack.c.l.b16 %v2458
        %v2976 = vunpack.c.l.b16 %v2464
        %v2977 = vunpack.c.l.b16 %v2469
        %v2978 = vunpack.c.l.b16 %v2475
        %v2979 = vunpack.c.l.b16 %v2480
        %v2980 = vunpack.c.l.b16 %v2486
        %v2981 = vunpack.c.l.b16 %v2491
        %v2982 = vunpack.c.l.b16 %v2497
        %v2983 = vunpack.c.l.b16 %v2502
        %v2984 = vunpack.c.l.b16 %v2508
        %v2985 = vunpack.c.l.b16 %v2513
        %v2986 = vunpack.c.l.b16 %v2519
        %v2987 = vunpack.c.l.b16 %v2524
        %v2988 = vunpack.c.l.b16 %v2530
        %v2989 = vunpack.c.l.b16 %v2535
        %v2990 = vunpack.c.l.b16 %v2541
        %v2991 = vunpack.c.l.b16 %v2546
        %v2992 = vunpack.c.l.b16 %v2552
        %v2993 = vunpack.c.l.b16 %v2557
        %v2994 = vunpack.c.l.b16 %v2563
        %v2995 = vunpack.c.l.b16 %v2568
        %v2996 = vunpack.c.l.b16 %v2574
        %v2997 = vunpack.c.l.b16 %v2579
        %v2998 = vunpack.c.l.b16 %v2585
        %v2999 = vunpack.c.l.b16 %v2590
        %v3000 = vunpack.c.l.b16 %v2596
        %v3001 = vunpack.c.l.b16 %v2601
        %v3002 = vunpack.c.l.b16 %v2607
        %v3003 = vunpack.c.l.b16 %v2612
        %v3004 = vunpack.c.l.b16 %v2618
        %v3005 = vunpack.c.l.b16 %v2623
        %v3006 = vpack.c.b16 %v2975, %v2974
        %v3007 = vpack.c.b16 %v2977, %v2976
        %v3008 = vpack.c.b16 %v2979, %v2978
        %v3009 = vpack.c.b16 %v2981, %v2980
        %v3010 = vpack.c.b16 %v2983, %v2982
        %v3011 = vpack.c.b16 %v2985, %v2984
        %v3012 = vpack.c.b16 %v2987, %v2986
        %v3013 = vpack.c.b16 %v2989, %v2988
        %v3014 = vpack.c.b16 %v2991, %v2990
        %v3015 = vpack.c.b16 %v2993, %v2992
        %v3016 = vpack.c.b16 %v2995, %v2994
        %v3017 = vpack.c.b16 %v2997, %v2996
        %v3018 = vpack.c.b16 %v2999, %v2998
        %v3019 = vpack.c.b16 %v3001, %v3000
        %v3020 = vpack.c.b16 %v3003, %v3002
        %v3021 = vpack.c.b16 %v3005, %v3004
        %v3022 = vunpack.c.l.b16 %v2631
        %v3023 = vunpack.c.l.b16 %v2638
        %v3024 = vpack.c.b16 %v3023, %v3022
        %3025 = vrot.lane.b32.xlu0 %v3024, 4
        %v3026 = vpop.permute.xlu0 %3025
        %v3027 = vunpack.c.l.b16 %v2649
        %v3028 = vunpack.c.l.b16 %v2654
        %v3029 = vunpack.c.l.b16 %v2662
        %v3030 = vunpack.c.l.b16 %v2667
        %v3031 = vunpack.c.l.b16 %v2675
        %v3032 = vunpack.c.l.b16 %v2680
        %v3033 = vunpack.c.l.b16 %v2688
        %v3034 = vunpack.c.l.b16 %v2693
        %v3035 = vunpack.c.l.b16 %v2701
        %v3036 = vunpack.c.l.b16 %v2706
        %v3037 = vunpack.c.l.b16 %v2714
        %v3038 = vunpack.c.l.b16 %v2719
        %v3039 = vunpack.c.l.b16 %v2727
        %v3040 = vunpack.c.l.b16 %v2732
        %v3041 = vunpack.c.l.b16 %v2740
        %v3042 = vunpack.c.l.b16 %v2745
        %v3043 = vunpack.c.l.b16 %v2753
        %v3044 = vunpack.c.l.b16 %v2758
        %v3045 = vunpack.c.l.b16 %v2766
        %v3046 = vunpack.c.l.b16 %v2771
        %v3047 = vunpack.c.l.b16 %v2779
        %v3048 = vunpack.c.l.b16 %v2784
        %v3049 = vunpack.c.l.b16 %v2792
        %v3050 = vunpack.c.l.b16 %v2797
        %v3051 = vunpack.c.l.b16 %v2805
        %v3052 = vunpack.c.l.b16 %v2810
        %v3053 = vunpack.c.l.b16 %v2818
        %v3054 = vunpack.c.l.b16 %v2823
        %v3055 = vunpack.c.l.b16 %v2831
        %v3056 = vunpack.c.l.b16 %v2836
        %v3057 = vunpack.c.l.b16 %v2844
        %v3058 = vunpack.c.l.b16 %v2849
        %v3059 = vpack.c.b16 %v3028, %v3027
        %v3060 = vpack.c.b16 %v3030, %v3029
        %v3061 = vpack.c.b16 %v3032, %v3031
        %v3062 = vpack.c.b16 %v3034, %v3033
        %v3063 = vpack.c.b16 %v3036, %v3035
        %v3064 = vpack.c.b16 %v3038, %v3037
        %v3065 = vpack.c.b16 %v3040, %v3039
        %v3066 = vpack.c.b16 %v3042, %v3041
        %v3067 = vpack.c.b16 %v3044, %v3043
        %v3068 = vpack.c.b16 %v3046, %v3045
        %v3069 = vpack.c.b16 %v3048, %v3047
        %v3070 = vpack.c.b16 %v3050, %v3049
        %v3071 = vpack.c.b16 %v3052, %v3051
        %v3072 = vpack.c.b16 %v3054, %v3053
        %v3073 = vpack.c.b16 %v3056, %v3055
        %v3074 = vpack.c.b16 %v3058, %v3057
        %3075 = vrot.lane.b32.xlu0 %v3059, 8
        %v3076 = vpop.permute.xlu0 %3075
        %3077 = vrot.lane.b32.xlu0 %v3060, 8
        %v3078 = vpop.permute.xlu0 %3077
        %3079 = vrot.lane.b32.xlu0 %v3061, 8
        %v3080 = vpop.permute.xlu0 %3079
        %3081 = vrot.lane.b32.xlu0 %v3062, 8
        %v3082 = vpop.permute.xlu0 %3081
        %3083 = vrot.lane.b32.xlu0 %v3063, 8
        %v3084 = vpop.permute.xlu0 %3083
        %3085 = vrot.lane.b32.xlu0 %v3064, 8
        %v3086 = vpop.permute.xlu0 %3085
        %3087 = vrot.lane.b32.xlu0 %v3065, 8
        %v3088 = vpop.permute.xlu0 %3087
        %3089 = vrot.lane.b32.xlu0 %v3066, 8
        %v3090 = vpop.permute.xlu0 %3089
        %3091 = vrot.lane.b32.xlu0 %v3067, 8
        %v3092 = vpop.permute.xlu0 %3091
        %3093 = vrot.lane.b32.xlu0 %v3068, 8
        %v3094 = vpop.permute.xlu0 %3093
        %3095 = vrot.lane.b32.xlu0 %v3069, 8
        %v3096 = vpop.permute.xlu0 %3095
        %3097 = vrot.lane.b32.xlu0 %v3070, 8
        %v3098 = vpop.permute.xlu0 %3097
        %3099 = vrot.lane.b32.xlu0 %v3071, 8
        %v3100 = vpop.permute.xlu0 %3099
        %3101 = vrot.lane.b32.xlu0 %v3072, 8
        %v3102 = vpop.permute.xlu0 %3101
        %3103 = vrot.lane.b32.xlu0 %v3073, 8
        %v3104 = vpop.permute.xlu0 %3103
        %3105 = vrot.lane.b32.xlu0 %v3074, 8
        %v3106 = vpop.permute.xlu0 %3105
        %v3107 = vunpack.c.l.b16 %v2855
        %v3108 = vunpack.c.l.b16 %v2860
        %v3109 = vunpack.c.l.b16 %v2866
        %v3110 = vunpack.c.l.b16 %v2871
        %v3111 = vpack.c.b16 %v3108, %v3107
        %v3112 = vpack.c.b16 %v3110, %v3109
        %3113 = vrot.lane.b32.xlu0 %v3008, 12
        %v3114 = vpop.permute.xlu0 %3113
        %3115 = vrot.lane.b32.xlu0 %v3009, 12
        %v3116 = vpop.permute.xlu0 %3115
        %3117 = vrot.lane.b32.xlu0 %v3010, 12
        %v3118 = vpop.permute.xlu0 %3117
        %3119 = vrot.lane.b32.xlu0 %v3011, 12
        %v3120 = vpop.permute.xlu0 %3119
        %3121 = vrot.lane.b32.xlu0 %v3012, 12
        %v3122 = vpop.permute.xlu0 %3121
        %3123 = vrot.lane.b32.xlu0 %v3013, 12
        %v3124 = vpop.permute.xlu0 %3123
        %3125 = vrot.lane.b32.xlu0 %v3014, 12
        %v3126 = vpop.permute.xlu0 %3125
        %3127 = vrot.lane.b32.xlu0 %v3015, 12
        %v3128 = vpop.permute.xlu0 %3127
        %3129 = vrot.lane.b32.xlu0 %v3016, 12
        %v3130 = vpop.permute.xlu0 %3129
        %3131 = vrot.lane.b32.xlu0 %v3017, 12
        %v3132 = vpop.permute.xlu0 %3131
        %3133 = vrot.lane.b32.xlu0 %v3018, 12
        %v3134 = vpop.permute.xlu0 %3133
        %3135 = vrot.lane.b32.xlu0 %v3019, 12
        %v3136 = vpop.permute.xlu0 %3135
        %3137 = vrot.lane.b32.xlu0 %v3020, 12
        %v3138 = vpop.permute.xlu0 %3137
        %3139 = vrot.lane.b32.xlu0 %v3021, 12
        %v3140 = vpop.permute.xlu0 %3139
        %3141 = vrot.lane.b32.xlu0 %v3111, 12
        %v3142 = vpop.permute.xlu0 %3141
        %3143 = vrot.lane.b32.xlu0 %v3112, 12
        %v3144 = vpop.permute.xlu0 %3143
        %v3145 = vunpack.c.l.b16 %v2879
        %v3146 = vunpack.c.l.b16 %v2884
        %v3147 = vunpack.c.l.b16 %v2892
        %v3148 = vunpack.c.l.b16 %v2897
        %v3149 = vpack.c.b16 %v3146, %v3145
        %v3150 = vpack.c.b16 %v3148, %v3147
        %3151 = vrot.lane.b32.xlu0 %v3061, 20
        %v3152 = vpop.permute.xlu0 %3151
        %3153 = vrot.lane.b32.xlu0 %v3062, 20
        %v3154 = vpop.permute.xlu0 %3153
        %3155 = vrot.lane.b32.xlu0 %v3063, 20
        %v3156 = vpop.permute.xlu0 %3155
        %3157 = vrot.lane.b32.xlu0 %v3064, 20
        %v3158 = vpop.permute.xlu0 %3157
        %3159 = vrot.lane.b32.xlu0 %v3065, 20
        %v3160 = vpop.permute.xlu0 %3159
        %3161 = vrot.lane.b32.xlu0 %v3066, 20
        %v3162 = vpop.permute.xlu0 %3161
        %3163 = vrot.lane.b32.xlu0 %v3067, 20
        %v3164 = vpop.permute.xlu0 %3163
        %3165 = vrot.lane.b32.xlu0 %v3068, 20
        %v3166 = vpop.permute.xlu0 %3165
        %3167 = vrot.lane.b32.xlu0 %v3069, 20
        %v3168 = vpop.permute.xlu0 %3167
        %3169 = vrot.lane.b32.xlu0 %v3070, 20
        %v3170 = vpop.permute.xlu0 %3169
        %3171 = vrot.lane.b32.xlu0 %v3071, 20
        %v3172 = vpop.permute.xlu0 %3171
        %3173 = vrot.lane.b32.xlu0 %v3072, 20
        %v3174 = vpop.permute.xlu0 %3173
        %3175 = vrot.lane.b32.xlu0 %v3073, 20
        %v3176 = vpop.permute.xlu0 %3175
        %3177 = vrot.lane.b32.xlu0 %v3074, 20
        %v3178 = vpop.permute.xlu0 %3177
        %3179 = vrot.lane.b32.xlu0 %v3149, 20
        %v3180 = vpop.permute.xlu0 %3179
        %3181 = vrot.lane.b32.xlu0 %v3150, 20
        %v3182 = vpop.permute.xlu0 %3181
        %v3183 = vunpack.c.l.b16 %v2903
        %v3184 = vunpack.c.l.b16 %v2908
        %v3185 = vunpack.c.l.b16 %v2922
        %v3186 = vunpack.c.l.b16 %v2932
        %v3187 = vpack.c.b16 %v3184, %v3183
        %v3188 = vpack.c.b16 %v3186, %v3185
        %3189 = vrot.lane.b32.xlu0 %v3010, 24
        %v3190 = vpop.permute.xlu0 %3189
        %3191 = vrot.lane.b32.xlu0 %v3011, 24
        %v3192 = vpop.permute.xlu0 %3191
        %3193 = vrot.lane.b32.xlu0 %v3012, 24
        %v3194 = vpop.permute.xlu0 %3193
        %3195 = vrot.lane.b32.xlu0 %v3013, 24
        %v3196 = vpop.permute.xlu0 %3195
        %3197 = vrot.lane.b32.xlu0 %v3014, 24
        %v3198 = vpop.permute.xlu0 %3197
        %3199 = vrot.lane.b32.xlu0 %v3015, 24
        %v3200 = vpop.permute.xlu0 %3199
        %3201 = vrot.lane.b32.xlu0 %v3016, 24
        %v3202 = vpop.permute.xlu0 %3201
        %3203 = vrot.lane.b32.xlu0 %v3017, 24
        %v3204 = vpop.permute.xlu0 %3203
        %3205 = vrot.lane.b32.xlu0 %v3018, 24
        %v3206 = vpop.permute.xlu0 %3205
        %3207 = vrot.lane.b32.xlu0 %v3019, 24
        %v3208 = vpop.permute.xlu0 %3207
        %3209 = vrot.lane.b32.xlu0 %v3020, 24
        %v3210 = vpop.permute.xlu0 %3209
        %3211 = vrot.lane.b32.xlu0 %v3021, 24
        %v3212 = vpop.permute.xlu0 %3211
        %3213 = vrot.lane.b32.xlu0 %v3111, 24
        %v3214 = vpop.permute.xlu0 %3213
        %3215 = vrot.lane.b32.xlu0 %v3112, 24
        %v3216 = vpop.permute.xlu0 %3215
        %3217 = vrot.lane.b32.xlu0 %v3187, 24
        %v3218 = vpop.permute.xlu0 %3217
        %3219 = vrot.lane.b32.xlu0 %v3188, 24
        %v3220 = vpop.permute.xlu0 %3219
        %v3221 = vunpack.c.l.b16 %v2940
        %v3222 = vunpack.c.l.b16 %v2947
        %v3223 = vpack.c.b16 %v3222, %v3221
        %3224 = vrot.lane.b32.xlu0 %v3223, 28
        %v3225 = vpop.permute.xlu0 %3224
        %v3226 = vunpack.c.l.b16 %v2955
        %v3227 = vunpack.c.l.b16 %v2960
        %v3228 = vunpack.c.l.b16 %v2968
        %v3229 = vunpack.c.l.b16 %v2973
        %v3230 = vpack.c.b16 %v3227, %v3226
        %v3231 = vpack.c.b16 %v3229, %v3228
        %3232 = vrot.lane.b32.xlu0 %v3063, 32
        %v3233 = vpop.permute.xlu0 %3232
        %3234 = vrot.lane.b32.xlu0 %v3064, 32
        %v3235 = vpop.permute.xlu0 %3234
        %3236 = vrot.lane.b32.xlu0 %v3065, 32
        %v3237 = vpop.permute.xlu0 %3236
        %3238 = vrot.lane.b32.xlu0 %v3066, 32
        %v3239 = vpop.permute.xlu0 %3238
        %3240 = vrot.lane.b32.xlu0 %v3067, 32
        %v3241 = vpop.permute.xlu0 %3240
        %3242 = vrot.lane.b32.xlu0 %v3068, 32
        %v3243 = vpop.permute.xlu0 %3242
        %3244 = vrot.lane.b32.xlu0 %v3069, 32
        %v3245 = vpop.permute.xlu0 %3244
        %3246 = vrot.lane.b32.xlu0 %v3070, 32
        %v3247 = vpop.permute.xlu0 %3246
        %3248 = vrot.lane.b32.xlu0 %v3071, 32
        %v3249 = vpop.permute.xlu0 %3248
        %3250 = vrot.lane.b32.xlu0 %v3072, 32
        %v3251 = vpop.permute.xlu0 %3250
        %3252 = vrot.lane.b32.xlu0 %v3073, 32
        %v3253 = vpop.permute.xlu0 %3252
        %3254 = vrot.lane.b32.xlu0 %v3074, 32
        %v3255 = vpop.permute.xlu0 %3254
        %3256 = vrot.lane.b32.xlu0 %v3149, 32
        %v3257 = vpop.permute.xlu0 %3256
        %3258 = vrot.lane.b32.xlu0 %v3150, 32
        %v3259 = vpop.permute.xlu0 %3258
        %3260 = vrot.lane.b32.xlu0 %v3230, 32
        %v3261 = vpop.permute.xlu0 %3260
        %3262 = vrot.lane.b32.xlu0 %v3231, 32
        %v3263 = vpop.permute.xlu0 %3262
        %v3266 = vsel %vm984, %v3006, %v3026
        %v3268 = vsel %vm984, %v3007, %v1618
        %v3270 = vsel %vm984, %v3008, %v1620
        %v3272 = vsel %vm984, %v3009, %v1622
        %v3274 = vsel %vm984, %v3010, %v1624
        %v3276 = vsel %vm984, %v3011, %v1626
        %v3278 = vsel %vm984, %v3012, %v1628
        %v3280 = vsel %vm984, %v3013, %v1630
        %v3282 = vsel %vm984, %v3014, %v1632
        %v3284 = vsel %vm984, %v3015, %v1634
        %v3286 = vsel %vm984, %v3016, %v1636
        %v3288 = vsel %vm984, %v3017, %v1638
        %v3290 = vsel %vm984, %v3018, %v1640
        %v3292 = vsel %vm984, %v3019, %v1642
        %v3294 = vsel %vm984, %v3020, %v1644
        %v3296 = vsel %vm984, %v3021, %v1646
        %v3298 = vsel %vm1984, %v3266, %v3076
        %v3300 = vsel %vm1984, %v3268, %v3078
        %v3302 = vsel %vm1984, %v3270, %v3080
        %v3304 = vsel %vm1984, %v3272, %v3082
        %v3306 = vsel %vm1984, %v3274, %v3084
        %v3308 = vsel %vm1984, %v3276, %v3086
        %v3310 = vsel %vm1984, %v3278, %v3088
        %v3312 = vsel %vm1984, %v3280, %v3090
        %v3314 = vsel %vm1984, %v3282, %v3092
        %v3316 = vsel %vm1984, %v3284, %v3094
        %v3318 = vsel %vm1984, %v3286, %v3096
        %v3320 = vsel %vm1984, %v3288, %v3098
        %v3322 = vsel %vm1984, %v3290, %v3100
        %v3324 = vsel %vm1984, %v3292, %v3102
        %v3326 = vsel %vm1984, %v3294, %v3104
        %v3328 = vsel %vm1984, %v3296, %v3106
        %v3330 = vsel %vm2017, %v3298, %v3114
        %v3332 = vsel %vm2017, %v3300, %v3116
        %v3334 = vsel %vm2017, %v3302, %v3118
        %v3336 = vsel %vm2017, %v3304, %v3120
        %v3338 = vsel %vm2017, %v3306, %v3122
        %v3340 = vsel %vm2017, %v3308, %v3124
        %v3342 = vsel %vm2017, %v3310, %v3126
        %v3344 = vsel %vm2017, %v3312, %v3128
        %v3346 = vsel %vm2017, %v3314, %v3130
        %v3348 = vsel %vm2017, %v3316, %v3132
        %v3350 = vsel %vm2017, %v3318, %v3134
        %v3352 = vsel %vm2017, %v3320, %v3136
        %v3354 = vsel %vm2017, %v3322, %v3138
        %v3356 = vsel %vm2017, %v3324, %v3140
        %v3358 = vsel %vm2017, %v3326, %v3142
        %v3360 = vsel %vm2017, %v3328, %v3144
        %v3361 = vsel %vm2050, %v3330, %v1765
        %v3362 = vsel %vm2050, %v3332, %v1767
        %v3363 = vsel %vm2050, %v3334, %v1769
        %v3364 = vsel %vm2050, %v3336, %v1771
        %v3365 = vsel %vm2050, %v3338, %v1773
        %v3366 = vsel %vm2050, %v3340, %v1775
        %v3367 = vsel %vm2050, %v3342, %v1777
        %v3368 = vsel %vm2050, %v3344, %v1779
        %v3369 = vsel %vm2050, %v3346, %v1781
        %v3370 = vsel %vm2050, %v3348, %v1783
        %v3371 = vsel %vm2050, %v3350, %v1785
        %v3372 = vsel %vm2050, %v3352, %v1787
        %v3373 = vsel %vm2050, %v3354, %v1789
        %v3374 = vsel %vm2050, %v3356, %v1791
        %v3375 = vsel %vm2050, %v3358, %v1793
        %v3376 = vsel %vm2050, %v3360, %v1795
        %v3378 = vsel %vm2083, %v3361, %v3152
        %v3380 = vsel %vm2083, %v3362, %v3154
        %v3382 = vsel %vm2083, %v3363, %v3156
        %v3384 = vsel %vm2083, %v3364, %v3158
        %v3386 = vsel %vm2083, %v3365, %v3160
        %v3388 = vsel %vm2083, %v3366, %v3162
        %v3390 = vsel %vm2083, %v3367, %v3164
        %v3392 = vsel %vm2083, %v3368, %v3166
        %v3394 = vsel %vm2083, %v3369, %v3168
        %v3396 = vsel %vm2083, %v3370, %v3170
        %v3398 = vsel %vm2083, %v3371, %v3172
        %v3400 = vsel %vm2083, %v3372, %v3174
        %v3402 = vsel %vm2083, %v3373, %v3176
        %v3404 = vsel %vm2083, %v3374, %v3178
        %v3406 = vsel %vm2083, %v3375, %v3180
        %v3408 = vsel %vm2083, %v3376, %v3182
        %v3410 = vsel %vm2116, %v3378, %v3190
        %v3412 = vsel %vm2116, %v3380, %v3192
        %v3414 = vsel %vm2116, %v3382, %v3194
        %v3416 = vsel %vm2116, %v3384, %v3196
        %v3418 = vsel %vm2116, %v3386, %v3198
        %v3420 = vsel %vm2116, %v3388, %v3200
        %v3422 = vsel %vm2116, %v3390, %v3202
        %v3424 = vsel %vm2116, %v3392, %v3204
        %v3426 = vsel %vm2116, %v3394, %v3206
        %v3428 = vsel %vm2116, %v3396, %v3208
        %v3430 = vsel %vm2116, %v3398, %v3210
        %v3432 = vsel %vm2116, %v3400, %v3212
        %v3434 = vsel %vm2116, %v3402, %v3214
        %v3436 = vsel %vm2116, %v3404, %v3216
        %v3438 = vsel %vm2116, %v3406, %v3218
        %v3440 = vsel %vm2116, %v3408, %v3220
        %v3441 = vsel %vm2149, %v3410, %v1872
        %v3442 = vsel %vm2149, %v3412, %v1874
        %v3443 = vsel %vm2149, %v3414, %v1876
        %v3444 = vsel %vm2149, %v3416, %v1878
        %v3445 = vsel %vm2149, %v3418, %v1880
        %v3446 = vsel %vm2149, %v3420, %v1882
        %v3447 = vsel %vm2149, %v3422, %v1884
        %v3448 = vsel %vm2149, %v3424, %v1886
        %v3449 = vsel %vm2149, %v3426, %v1888
        %v3450 = vsel %vm2149, %v3428, %v1890
        %v3451 = vsel %vm2149, %v3430, %v1892
        %v3452 = vsel %vm2149, %v3432, %v1894
        %v3453 = vsel %vm2149, %v3434, %v1896
        %v3454 = vsel %vm2149, %v3436, %v1898
        %v3455 = vsel %vm2149, %v3438, %v1900
        %v3457 = vsel %vm2149, %v3440, %v3225
        %v3459 = vsel %vm2182, %v3441, %v3233
        %v3461 = vsel %vm2182, %v3442, %v3235
        %v3463 = vsel %vm2182, %v3443, %v3237
        %v3465 = vsel %vm2182, %v3444, %v3239
        %v3467 = vsel %vm2182, %v3445, %v3241
        %v3469 = vsel %vm2182, %v3446, %v3243
        %v3471 = vsel %vm2182, %v3447, %v3245
        %v3473 = vsel %vm2182, %v3448, %v3247
        %v3475 = vsel %vm2182, %v3449, %v3249
        %v3477 = vsel %vm2182, %v3450, %v3251
        %v3479 = vsel %vm2182, %v3451, %v3253
        %v3481 = vsel %vm2182, %v3452, %v3255
        %v3483 = vsel %vm2182, %v3453, %v3257
        %v3485 = vsel %vm2182, %v3454, %v3259
        %v3487 = vsel %vm2182, %v3455, %v3261
        %v3489 = vsel %vm2182, %v3457, %v3263
        %v3490 = vld [vmem:[%s3] sm:$0xf]
        %v3491 = vld [vmem:[%s3 + $0x4] sm:$0xf]
        %v3492 = vld [vmem:[%s3 + $0x8] sm:$0xf]
        %v3493 = vld [vmem:[%s3 + $0xc] sm:$0xf]
        %v3494 = vld [vmem:[%s3 + $0x10] sm:$0x3]
        %v3500 = vunpack.c.l.b16 %v3490
        %v3501 = vunpack.c.l.b16 %v3491
        %v3502 = vunpack.c.l.b16 %v3492
        %v3503 = vunpack.c.l.b16 %v3493
        %v3504 = vunpack.c.l.b16 %v3494
        %v3505 = vpack.c.b16 %v3501, %v3500
        %v3506 = vpack.c.b16 %v3503, %v3502
        %v3507 = vpack.c.b16 %v3504, %v3504
        %v3510 = vsel %vm2235, %v3459, 0
        %v3512 = vsel %vm2235, %v3461, 0
        %v3514 = vsel %vm2235, %v3463, 0
        %v3516 = vsel %vm2235, %v3465, 0
        %v3518 = vsel %vm2235, %v3467, 0
        %v3520 = vsel %vm2235, %v3469, 0
        %v3522 = vsel %vm2235, %v3471, 0
        %v3524 = vsel %vm2235, %v3473, 0
        %v3526 = vsel %vm2235, %v3475, 0
        %v3528 = vsel %vm2235, %v3477, 0
        %v3530 = vsel %vm2235, %v3479, 0
        %v3532 = vsel %vm2235, %v3481, 0
        %v3534 = vsel %vm2235, %v3483, 0
        %v3536 = vsel %vm2235, %v3485, 0
        %v3538 = vsel %vm2235, %v3487, 0
        %v3540 = vsel %vm2235, %v3489, 0
        %v3543 = vsel %vm1033, %v3507, 0
        %3545 = vmatprep.subr.bf16.mxu0 0
        %3546 = vmatpush1.bf16.msra.mxu0 %v3505
        %3547 = vmatprep.subr.bf16.mxu0 0
        %3548 = vmatpush1.bf16.msra.mxu0 %v3506
        %3549 = vmatprep.subr.bf16.mxu0 0
        %3550 = vmatpush1.bf16.msra.mxu0 %v3543
        %3551 = vmatprep.subr.bf16.mxu0 0
        %3552 = vmatpush1.bf16.msra.mxu0 0
        %3553 = vmatprep.subr.bf16.mxu0 0
        %3554 = vmatpush1.bf16.msra.mxu0 0
        %3555 = vmatprep.subr.bf16.mxu0 0
        %3556 = vmatpush1.bf16.msra.mxu0 0
        %3557 = vmatprep.subr.bf16.mxu0 0
        %3558 = vmatpush1.bf16.msra.mxu0 0
        %3559 = vmatprep.subr.bf16.mxu0 0
        %3560 = vmatpush1.bf16.msra.mxu0 0
        %3561 = vmatprep.subr.bf16.mxu0 0
        %3562 = vmatpush1.bf16.msra.mxu0 0
        %3563 = vmatprep.subr.bf16.mxu0 0
        %3564 = vmatpush1.bf16.msra.mxu0 0
        %3565 = vmatprep.subr.bf16.mxu0 0
        %3566 = vmatpush1.bf16.msra.mxu0 0
        %3567 = vmatprep.subr.bf16.mxu0 0
        %3568 = vmatpush1.bf16.msra.mxu0 0
        %3569 = vmatprep.subr.bf16.mxu0 0
        %3570 = vmatpush1.bf16.msra.mxu0 0
        %3571 = vmatprep.subr.bf16.mxu0 0
        %3572 = vmatpush1.bf16.msra.mxu0 0
        %3573 = vmatprep.subr.bf16.mxu0 0
        %3574 = vmatpush1.bf16.msra.mxu0 0
        %3575 = vmatprep.subr.bf16.mxu0 0
        %3576 = vmatpush1.bf16.msra.mxu0 0
        %3577 = vmatprep.mubr.bf16.mxu0 0
        %3578 = vmatmul.mubr.bf16.gmra.mrb[0].mxu0 %v3510
        %v3579 = vpop.f32.mrb[0].mxu0
        %v3580 = vadd.f32 0.0, %v3579
        %v3581 = vpop.f32.mrb[0].mxu0
        %v3582 = vpop.f32.mrb[0].mxu0
        %v3583 = vadd.f32 0.0, %v3582
        %v3584 = vpop.f32.mrb[0].mxu0
        %3585 = vmatprep.mubr.bf16.mxu0 0
        %3586 = vmatmul.mubr.bf16.gmra.mrb[0].mxu0 %v3512
        %v3587 = vpop.f32.mrb[0].mxu0
        %v3588 = vadd.f32 0.0, %v3587
        %v3589 = vpop.f32.mrb[0].mxu0
        %v3590 = vpop.f32.mrb[0].mxu0
        %v3591 = vadd.f32 0.0, %v3590
        %v3592 = vpop.f32.mrb[0].mxu0
        %3593 = vmatprep.mubr.bf16.mxu0 0
        %3594 = vmatmul.mubr.bf16.gmra.mrb[0].mxu0 %v3514
        %v3595 = vpop.f32.mrb[0].mxu0
        %v3596 = vadd.f32 0.0, %v3595
        %v3597 = vpop.f32.mrb[0].mxu0
        %v3598 = vpop.f32.mrb[0].mxu0
        %v3599 = vadd.f32 0.0, %v3598
        %v3600 = vpop.f32.mrb[0].mxu0
        %3601 = vmatprep.mubr.bf16.mxu0 0
        %3602 = vmatmul.mubr.bf16.gmra.mrb[0].mxu0 %v3516
        %v3603 = vpop.f32.mrb[0].mxu0
        %v3604 = vadd.f32 0.0, %v3603
        %v3605 = vpop.f32.mrb[0].mxu0
        %v3606 = vpop.f32.mrb[0].mxu0
        %v3607 = vadd.f32 0.0, %v3606
        %v3608 = vpop.f32.mrb[0].mxu0
        %3609 = vmatprep.mubr.bf16.mxu0 0
        %3610 = vmatmul.mubr.bf16.gmra.mrb[0].mxu0 %v3518
        %v3611 = vpop.f32.mrb[0].mxu0
        %v3612 = vadd.f32 0.0, %v3611
        %v3613 = vpop.f32.mrb[0].mxu0
        %v3614 = vpop.f32.mrb[0].mxu0
        %v3615 = vadd.f32 0.0, %v3614
        %v3616 = vpop.f32.mrb[0].mxu0
        %3617 = vmatprep.mubr.bf16.mxu0 0
        %3618 = vmatmul.mubr.bf16.gmra.mrb[0].mxu0 %v3520
        %v3619 = vpop.f32.mrb[0].mxu0
        %v3620 = vadd.f32 0.0, %v3619
        %v3621 = vpop.f32.mrb[0].mxu0
        %v3622 = vpop.f32.mrb[0].mxu0
        %v3623 = vadd.f32 0.0, %v3622
        %v3624 = vpop.f32.mrb[0].mxu0
        %3625 = vmatprep.mubr.bf16.mxu0 0
        %3626 = vmatmul.mubr.bf16.gmra.mrb[0].mxu0 %v3522
        %v3627 = vpop.f32.mrb[0].mxu0
        %v3628 = vadd.f32 0.0, %v3627
        %v3629 = vpop.f32.mrb[0].mxu0
        %v3630 = vpop.f32.mrb[0].mxu0
        %v3631 = vadd.f32 0.0, %v3630
        %v3632 = vpop.f32.mrb[0].mxu0
        %3633 = vmatprep.mubr.bf16.mxu0 0
        %3634 = vmatmul.mubr.bf16.gmra.mrb[0].mxu0 %v3524
        %v3635 = vpop.f32.mrb[0].mxu0
        %v3636 = vadd.f32 0.0, %v3635
        %v3637 = vpop.f32.mrb[0].mxu0
        %v3638 = vpop.f32.mrb[0].mxu0
        %v3639 = vadd.f32 0.0, %v3638
        %v3640 = vpop.f32.mrb[0].mxu0
        %3641 = vmatprep.mubr.bf16.mxu0 0
        %3642 = vmatmul.mubr.bf16.gmra.mrb[0].mxu0 %v3526
        %v3643 = vpop.f32.mrb[0].mxu0
        %v3644 = vadd.f32 0.0, %v3643
        %v3645 = vpop.f32.mrb[0].mxu0
        %v3646 = vpop.f32.mrb[0].mxu0
        %v3647 = vadd.f32 0.0, %v3646
        %v3648 = vpop.f32.mrb[0].mxu0
        %3649 = vmatprep.mubr.bf16.mxu0 0
        %3650 = vmatmul.mubr.bf16.gmra.mrb[0].mxu0 %v3528
        %v3651 = vpop.f32.mrb[0].mxu0
        %v3652 = vadd.f32 0.0, %v3651
        %v3653 = vpop.f32.mrb[0].mxu0
        %v3654 = vpop.f32.mrb[0].mxu0
        %v3655 = vadd.f32 0.0, %v3654
        %v3656 = vpop.f32.mrb[0].mxu0
        %3657 = vmatprep.mubr.bf16.mxu0 0
        %3658 = vmatmul.mubr.bf16.gmra.mrb[0].mxu0 %v3530
        %v3659 = vpop.f32.mrb[0].mxu0
        %v3660 = vadd.f32 0.0, %v3659
        %v3661 = vpop.f32.mrb[0].mxu0
        %v3662 = vpop.f32.mrb[0].mxu0
        %v3663 = vadd.f32 0.0, %v3662
        %v3664 = vpop.f32.mrb[0].mxu0
        %3665 = vmatprep.mubr.bf16.mxu0 0
        %3666 = vmatmul.mubr.bf16.gmra.mrb[0].mxu0 %v3532
        %v3667 = vpop.f32.mrb[0].mxu0
        %v3668 = vadd.f32 0.0, %v3667
        %v3669 = vpop.f32.mrb[0].mxu0
        %v3670 = vpop.f32.mrb[0].mxu0
        %v3671 = vadd.f32 0.0, %v3670
        %v3672 = vpop.f32.mrb[0].mxu0
        %3673 = vmatprep.mubr.bf16.mxu0 0
        %3674 = vmatmul.mubr.bf16.gmra.mrb[0].mxu0 %v3534
        %v3675 = vpop.f32.mrb[0].mxu0
        %v3676 = vadd.f32 0.0, %v3675
        %v3677 = vpop.f32.mrb[0].mxu0
        %v3678 = vpop.f32.mrb[0].mxu0
        %v3679 = vadd.f32 0.0, %v3678
        %v3680 = vpop.f32.mrb[0].mxu0
        %3681 = vmatprep.mubr.bf16.mxu0 0
        %3682 = vmatmul.mubr.bf16.gmra.mrb[0].mxu0 %v3536
        %v3683 = vpop.f32.mrb[0].mxu0
        %v3684 = vadd.f32 0.0, %v3683
        %v3685 = vpop.f32.mrb[0].mxu0
        %v3686 = vpop.f32.mrb[0].mxu0
        %v3687 = vadd.f32 0.0, %v3686
        %v3688 = vpop.f32.mrb[0].mxu0
        %3689 = vmatprep.mubr.bf16.mxu0 0
        %3690 = vmatmul.mubr.bf16.gmra.mrb[0].mxu0 %v3538
        %v3691 = vpop.f32.mrb[0].mxu0
        %v3692 = vadd.f32 0.0, %v3691
        %v3693 = vpop.f32.mrb[0].mxu0
        %v3694 = vpop.f32.mrb[0].mxu0
        %v3695 = vadd.f32 0.0, %v3694
        %v3696 = vpop.f32.mrb[0].mxu0
        %3697 = vmatprep.mubr.bf16.mxu0 0
        %3698 = vmatmul.mubr.bf16.gmra.mrb[0].mxu0 %v3540
        %v3699 = vpop.f32.mrb[0].mxu0
        %v3700 = vadd.f32 0.0, %v3699
        %v3701 = vpop.f32.mrb[0].mxu0
        %v3702 = vpop.f32.mrb[0].mxu0
        %v3703 = vadd.f32 0.0, %v3702
        %v3704 = vpop.f32.mrb[0].mxu0
        %3705 = vdwg.mxu0
        %v3707 = vshrl.u32 %v386, 16
        %v3709 = vrot.slane %v3707, 5
        %v3710 = vshll.u32 %v386, 16
        %v3712 = vrot.slane %v3710, 6
        %v3713 = vor.u32 %v3709, %v3712
        %v3714 = vrot.slane %v3713, 4
        %v3716 = vshrl.u32 %v387, 16
        %v3718 = vrot.slane %v3716, 5
        %v3719 = vshll.u32 %v387, 16
        %v3721 = vrot.slane %v3719, 6
        %v3722 = vor.u32 %v3718, %v3721
        %v3723 = vsel %vm454, %v3714, %v3722
        %v3724 = vrot.slane %v3722, 4
        %v3726 = vshrl.u32 %v388, 16
        %v3728 = vrot.slane %v3726, 5
        %v3729 = vshll.u32 %v388, 16
        %v3731 = vrot.slane %v3729, 6
        %v3732 = vor.u32 %v3728, %v3731
        %v3733 = vsel %vm454, %v3724, %v3732
        %vm3740 = vcmask 1040384
        %vm3741 = vcmask 1044484
        %vm3742 = vmor %vm3740, %vm3741
        %v3743 = vrot.slane %v386, 7
        %v3744 = vrot.slane %v3743, 4
        %v3745 = vrot.slane %v387, 7
        %v3746 = vsel %vm3742, %v3744, %v3745
        %v3747 = vrot.slane %v3745, 4
        %v3748 = vrot.slane %v388, 7
        %v3749 = vsel %vm3742, %v3747, %v3748
        %v3750 = vrot.slane %v389, 7
        %v3751 = vrot.slane %v3750, 4
        %v3752 = vrot.slane %v390, 7
        %v3753 = vsel %vm3742, %v3751, %v3752
        %v3754 = vrot.slane %v3752, 4
        %v3755 = vrot.slane %v391, 7
        %v3756 = vsel %vm3742, %v3754, %v3755
        %v3757 = vrot.slane %v392, 7
        %v3758 = vrot.slane %v3757, 4
        %v3759 = vrot.slane %v393, 7
        %v3760 = vsel %vm3742, %v3758, %v3759
        %v3761 = vrot.slane %v3759, 4
        %v3762 = vrot.slane %v394, 7
        %v3763 = vsel %vm3742, %v3761, %v3762
        %v3764 = vrot.slane %v395, 7
        %v3765 = vrot.slane %v3764, 4
        %v3766 = vrot.slane %v396, 7
        %v3767 = vsel %vm3742, %v3765, %v3766
        %v3768 = vrot.slane %v3766, 4
        %v3769 = vrot.slane %v397, 7
        %v3770 = vsel %vm3742, %v3768, %v3769
        %v3771 = vrot.slane %v398, 7
        %v3772 = vrot.slane %v3771, 4
        %v3773 = vrot.slane %v399, 7
        %v3774 = vsel %vm3742, %v3772, %v3773
        %v3775 = vrot.slane %v3773, 4
        %v3776 = vrot.slane %v400, 7
        %v3777 = vsel %vm3742, %v3775, %v3776
        %v3778 = vrot.slane %v401, 7
        %v3779 = vrot.slane %v3778, 4
        %v3780 = vrot.slane %v402, 7
        %v3781 = vsel %vm3742, %v3779, %v3780
        %v3782 = vrot.slane %v3780, 4
        %v3783 = vrot.slane %v403, 7
        %v3784 = vsel %vm3742, %v3782, %v3783
        %v3785 = vrot.slane %v404, 7
        %v3786 = vrot.slane %v3785, 4
        %v3787 = vrot.slane %v405, 7
        %v3788 = vsel %vm3742, %v3786, %v3787
        %v3789 = vrot.slane %v3787, 4
        %v3790 = vrot.slane %v406, 7
        %v3791 = vsel %vm3742, %v3789, %v3790
        %v3792 = vrot.slane %v407, 7
        %v3793 = vrot.slane %v3792, 4
        %v3794 = vrot.slane %v408, 7
        %v3795 = vsel %vm3742, %v3793, %v3794
        %v3796 = vrot.slane %v3794, 4
        %v3797 = vrot.slane %v409, 7
        %v3798 = vsel %vm3742, %v3796, %v3797
        %v3799 = vrot.slane %v410, 7
        %v3800 = vrot.slane %v3799, 4
        %v3801 = vrot.slane %v411, 7
        %v3802 = vsel %vm3742, %v3800, %v3801
        %v3803 = vrot.slane %v3801, 4
        %v3804 = vrot.slane %v412, 7
        %v3805 = vsel %vm3742, %v3803, %v3804
        %v3806 = vrot.slane %v413, 7
        %v3807 = vrot.slane %v3806, 4
        %v3808 = vrot.slane %v414, 7
        %v3809 = vsel %vm3742, %v3807, %v3808
        %v3810 = vrot.slane %v3808, 4
        %v3811 = vrot.slane %v415, 7
        %v3812 = vsel %vm3742, %v3810, %v3811
        %v3813 = vrot.slane %v416, 7
        %v3814 = vrot.slane %v3813, 4
        %v3815 = vrot.slane %v417, 7
        %v3816 = vsel %vm3742, %v3814, %v3815
        %v3817 = vrot.slane %v3815, 4
        %v3818 = vrot.slane %v418, 7
        %v3819 = vsel %vm3742, %v3817, %v3818
        %v3820 = vrot.slane %v419, 7
        %v3821 = vrot.slane %v3820, 4
        %v3822 = vrot.slane %v420, 7
        %v3823 = vsel %vm3742, %v3821, %v3822
        %v3824 = vrot.slane %v3822, 4
        %v3825 = vrot.slane %v421, 7
        %v3826 = vsel %vm3742, %v3824, %v3825
        %v3827 = vrot.slane %v422, 7
        %v3828 = vrot.slane %v3827, 4
        %v3829 = vrot.slane %v423, 7
        %v3830 = vsel %vm3742, %v3828, %v3829
        %v3831 = vrot.slane %v3829, 4
        %v3832 = vrot.slane %v424, 7
        %v3833 = vsel %vm3742, %v3831, %v3832
        %v3834 = vrot.slane %v425, 7
        %v3835 = vrot.slane %v3834, 4
        %v3836 = vrot.slane %v426, 7
        %v3837 = vsel %vm3742, %v3835, %v3836
        %v3838 = vrot.slane %v3836, 4
        %v3839 = vrot.slane %v427, 7
        %v3840 = vsel %vm3742, %v3838, %v3839
        %v3841 = vrot.slane %v428, 7
        %v3842 = vrot.slane %v3841, 4
        %v3843 = vrot.slane %v429, 7
        %v3844 = vsel %vm3742, %v3842, %v3843
        %v3845 = vrot.slane %v3843, 4
        %v3846 = vrot.slane %v430, 7
        %v3847 = vsel %vm3742, %v3845, %v3846
        %v3848 = vrot.slane %v431, 7
        %v3849 = vrot.slane %v3848, 4
        %v3850 = vrot.slane %v432, 7
        %v3851 = vsel %vm3742, %v3849, %v3850
        %v3852 = vrot.slane %v3850, 4
        %v3853 = vrot.slane %v433, 7
        %v3854 = vsel %vm3742, %v3852, %v3853
        %v3855 = vrot.slane %v434, 7
        %v3856 = vrot.slane %v3855, 4
        %v3857 = vrot.slane %v435, 7
        %v3858 = vsel %vm3742, %v3856, %v3857
        %v3859 = vrot.slane %v3857, 4
        %v3860 = vrot.slane %v436, 7
        %v3861 = vsel %vm3742, %v3859, %v3860
        %v3862 = vrot.slane %v437, 7
        %v3863 = vrot.slane %v3862, 4
        %v3864 = vrot.slane %v438, 7
        %v3865 = vsel %vm3742, %v3863, %v3864
        %v3866 = vrot.slane %v3864, 4
        %v3867 = vrot.slane %v439, 7
        %v3868 = vsel %vm3742, %v3866, %v3867
        %v3869 = vrot.slane %v440, 7
        %v3870 = vrot.slane %v3869, 4
        %v3871 = vrot.slane %v441, 7
        %v3872 = vsel %vm3742, %v3870, %v3871
        %v3873 = vrot.slane %v3871, 4
        %v3874 = vrot.slane %v442, 7
        %v3875 = vsel %vm3742, %v3873, %v3874
        %v3877 = vshrl.u32 %v449, 16
        %v3879 = vrot.slane %v3877, 5
        %v3880 = vshll.u32 %v449, 16
        %v3882 = vrot.slane %v3880, 6
        %v3883 = vor.u32 %v3879, %v3882
        %v3884 = vrot.slane %v3883, 4
        %v3886 = vshrl.u32 %v450, 16
        %v3888 = vrot.slane %v3886, 5
        %v3889 = vshll.u32 %v450, 16
        %v3891 = vrot.slane %v3889, 6
        %v3892 = vor.u32 %v3888, %v3891
        %v3893 = vsel %vm454, %v3884, %v3892
        %v3894 = vrot.slane %v3892, 4
        %v3896 = vshrl.u32 %v451, 16
        %v3898 = vrot.slane %v3896, 5
        %v3899 = vshll.u32 %v451, 16
        %v3901 = vrot.slane %v3899, 6
        %v3902 = vor.u32 %v3898, %v3901
        %v3903 = vsel %vm454, %v3894, %v3902
        %v3910 = vrot.slane %v443, 7
        %v3911 = vrot.slane %v3910, 4
        %v3912 = vrot.slane %v444, 7
        %v3913 = vsel %vm3742, %v3911, %v3912
        %v3914 = vrot.slane %v3912, 4
        %v3915 = vrot.slane %v445, 7
        %v3916 = vsel %vm3742, %v3914, %v3915
        %v3917 = vrot.slane %v446, 7
        %v3918 = vrot.slane %v3917, 4
        %v3919 = vrot.slane %v447, 7
        %v3920 = vsel %vm3742, %v3918, %v3919
        %v3921 = vrot.slane %v3919, 4
        %v3922 = vrot.slane %v448, 7
        %v3923 = vsel %vm3742, %v3921, %v3922
        %v3924 = vrot.slane %v449, 7
        %v3925 = vrot.slane %v3924, 4
        %v3926 = vrot.slane %v450, 7
        %v3927 = vsel %vm3742, %v3925, %v3926
        %v3928 = vrot.slane %v3926, 4
        %v3929 = vrot.slane %v451, 7
        %v3930 = vsel %vm3742, %v3928, %v3929
        %v3931 = vunpack.c.l.b16 %v386
        %v3932 = vunpack.c.l.b16 %v387
        %v3933 = vunpack.c.l.b16 %v389
        %v3934 = vunpack.c.l.b16 %v390
        %v3935 = vunpack.c.l.b16 %v392
        %v3936 = vunpack.c.l.b16 %v393
        %v3937 = vunpack.c.l.b16 %v395
        %v3938 = vunpack.c.l.b16 %v396
        %v3939 = vunpack.c.l.b16 %v398
        %v3940 = vunpack.c.l.b16 %v399
        %v3941 = vunpack.c.l.b16 %v401
        %v3942 = vunpack.c.l.b16 %v402
        %v3943 = vunpack.c.l.b16 %v404
        %v3944 = vunpack.c.l.b16 %v405
        %v3945 = vunpack.c.l.b16 %v407
        %v3946 = vunpack.c.l.b16 %v408
        %v3947 = vunpack.c.l.b16 %v410
        %v3948 = vunpack.c.l.b16 %v411
        %v3949 = vunpack.c.l.b16 %v413
        %v3950 = vunpack.c.l.b16 %v414
        %v3951 = vunpack.c.l.b16 %v416
        %v3952 = vunpack.c.l.b16 %v417
        %v3953 = vunpack.c.l.b16 %v419
        %v3954 = vunpack.c.l.b16 %v420
        %v3955 = vunpack.c.l.b16 %v422
        %v3956 = vunpack.c.l.b16 %v423
        %v3957 = vunpack.c.l.b16 %v425
        %v3958 = vunpack.c.l.b16 %v426
        %v3959 = vunpack.c.l.b16 %v428
        %v3960 = vunpack.c.l.b16 %v429
        %v3961 = vunpack.c.l.b16 %v431
        %v3962 = vunpack.c.l.b16 %v432
        %v3963 = vpack.c.b16 %v3932, %v3931
        %v3964 = vpack.c.b16 %v3934, %v3933
        %v3965 = vpack.c.b16 %v3936, %v3935
        %v3966 = vpack.c.b16 %v3938, %v3937
        %v3967 = vpack.c.b16 %v3940, %v3939
        %v3968 = vpack.c.b16 %v3942, %v3941
        %v3969 = vpack.c.b16 %v3944, %v3943
        %v3970 = vpack.c.b16 %v3946, %v3945
        %v3971 = vpack.c.b16 %v3948, %v3947
        %v3972 = vpack.c.b16 %v3950, %v3949
        %v3973 = vpack.c.b16 %v3952, %v3951
        %v3974 = vpack.c.b16 %v3954, %v3953
        %v3975 = vpack.c.b16 %v3956, %v3955
        %v3976 = vpack.c.b16 %v3958, %v3957
        %v3977 = vpack.c.b16 %v3960, %v3959
        %v3978 = vpack.c.b16 %v3962, %v3961
        %v3979 = vunpack.c.l.b16 %v3723
        %v3980 = vunpack.c.l.b16 %v3733
        %v3981 = vpack.c.b16 %v3980, %v3979
        %3982 = vrot.lane.b32.xlu0 %v3981, 4
        %v3983 = vpop.permute.xlu0 %3982
        %v3984 = vunpack.c.l.b16 %v3746
        %v3985 = vunpack.c.l.b16 %v3749
        %v3986 = vunpack.c.l.b16 %v3753
        %v3987 = vunpack.c.l.b16 %v3756
        %v3988 = vunpack.c.l.b16 %v3760
        %v3989 = vunpack.c.l.b16 %v3763
        %v3990 = vunpack.c.l.b16 %v3767
        %v3991 = vunpack.c.l.b16 %v3770
        %v3992 = vunpack.c.l.b16 %v3774
        %v3993 = vunpack.c.l.b16 %v3777
        %v3994 = vunpack.c.l.b16 %v3781
        %v3995 = vunpack.c.l.b16 %v3784
        %v3996 = vunpack.c.l.b16 %v3788
        %v3997 = vunpack.c.l.b16 %v3791
        %v3998 = vunpack.c.l.b16 %v3795
        %v3999 = vunpack.c.l.b16 %v3798
        %v4000 = vunpack.c.l.b16 %v3802
        %v4001 = vunpack.c.l.b16 %v3805
        %v4002 = vunpack.c.l.b16 %v3809
        %v4003 = vunpack.c.l.b16 %v3812
        %v4004 = vunpack.c.l.b16 %v3816
        %v4005 = vunpack.c.l.b16 %v3819
        %v4006 = vunpack.c.l.b16 %v3823
        %v4007 = vunpack.c.l.b16 %v3826
        %v4008 = vunpack.c.l.b16 %v3830
        %v4009 = vunpack.c.l.b16 %v3833
        %v4010 = vunpack.c.l.b16 %v3837
        %v4011 = vunpack.c.l.b16 %v3840
        %v4012 = vunpack.c.l.b16 %v3844
        %v4013 = vunpack.c.l.b16 %v3847
        %v4014 = vunpack.c.l.b16 %v3851
        %v4015 = vunpack.c.l.b16 %v3854
        %v4016 = vpack.c.b16 %v3985, %v3984
        %v4017 = vpack.c.b16 %v3987, %v3986
        %v4018 = vpack.c.b16 %v3989, %v3988
        %v4019 = vpack.c.b16 %v3991, %v3990
        %v4020 = vpack.c.b16 %v3993, %v3992
        %v4021 = vpack.c.b16 %v3995, %v3994
        %v4022 = vpack.c.b16 %v3997, %v3996
        %v4023 = vpack.c.b16 %v3999, %v3998
        %v4024 = vpack.c.b16 %v4001, %v4000
        %v4025 = vpack.c.b16 %v4003, %v4002
        %v4026 = vpack.c.b16 %v4005, %v4004
        %v4027 = vpack.c.b16 %v4007, %v4006
        %v4028 = vpack.c.b16 %v4009, %v4008
        %v4029 = vpack.c.b16 %v4011, %v4010
        %v4030 = vpack.c.b16 %v4013, %v4012
        %v4031 = vpack.c.b16 %v4015, %v4014
        %4032 = vrot.lane.b32.xlu0 %v4016, 8
        %v4033 = vpop.permute.xlu0 %4032
        %4034 = vrot.lane.b32.xlu0 %v4017, 8
        %v4035 = vpop.permute.xlu0 %4034
        %4036 = vrot.lane.b32.xlu0 %v4018, 8
        %v4037 = vpop.permute.xlu0 %4036
        %4038 = vrot.lane.b32.xlu0 %v4019, 8
        %v4039 = vpop.permute.xlu0 %4038
        %4040 = vrot.lane.b32.xlu0 %v4020, 8
        %v4041 = vpop.permute.xlu0 %4040
        %4042 = vrot.lane.b32.xlu0 %v4021, 8
        %v4043 = vpop.permute.xlu0 %4042
        %4044 = vrot.lane.b32.xlu0 %v4022, 8
        %v4045 = vpop.permute.xlu0 %4044
        %4046 = vrot.lane.b32.xlu0 %v4023, 8
        %v4047 = vpop.permute.xlu0 %4046
        %4048 = vrot.lane.b32.xlu0 %v4024, 8
        %v4049 = vpop.permute.xlu0 %4048
        %4050 = vrot.lane.b32.xlu0 %v4025, 8
        %v4051 = vpop.permute.xlu0 %4050
        %4052 = vrot.lane.b32.xlu0 %v4026, 8
        %v4053 = vpop.permute.xlu0 %4052
        %4054 = vrot.lane.b32.xlu0 %v4027, 8
        %v4055 = vpop.permute.xlu0 %4054
        %4056 = vrot.lane.b32.xlu0 %v4028, 8
        %v4057 = vpop.permute.xlu0 %4056
        %4058 = vrot.lane.b32.xlu0 %v4029, 8
        %v4059 = vpop.permute.xlu0 %4058
        %4060 = vrot.lane.b32.xlu0 %v4030, 8
        %v4061 = vpop.permute.xlu0 %4060
        %4062 = vrot.lane.b32.xlu0 %v4031, 8
        %v4063 = vpop.permute.xlu0 %4062
        %v4064 = vunpack.c.l.b16 %v434
        %v4065 = vunpack.c.l.b16 %v435
        %v4066 = vunpack.c.l.b16 %v437
        %v4067 = vunpack.c.l.b16 %v438
        %v4068 = vunpack.c.l.b16 %v440
        %v4069 = vunpack.c.l.b16 %v441
        %v4070 = vpack.c.b16 %v4065, %v4064
        %v4071 = vpack.c.b16 %v4067, %v4066
        %v4072 = vpack.c.b16 %v4069, %v4068
        %4073 = vrot.lane.b32.xlu0 %v3966, 12
        %v4074 = vpop.permute.xlu0 %4073
        %4075 = vrot.lane.b32.xlu0 %v3967, 12
        %v4076 = vpop.permute.xlu0 %4075
        %4077 = vrot.lane.b32.xlu0 %v3968, 12
        %v4078 = vpop.permute.xlu0 %4077
        %4079 = vrot.lane.b32.xlu0 %v3969, 12
        %v4080 = vpop.permute.xlu0 %4079
        %4081 = vrot.lane.b32.xlu0 %v3970, 12
        %v4082 = vpop.permute.xlu0 %4081
        %4083 = vrot.lane.b32.xlu0 %v3971, 12
        %v4084 = vpop.permute.xlu0 %4083
        %4085 = vrot.lane.b32.xlu0 %v3972, 12
        %v4086 = vpop.permute.xlu0 %4085
        %4087 = vrot.lane.b32.xlu0 %v3973, 12
        %v4088 = vpop.permute.xlu0 %4087
        %4089 = vrot.lane.b32.xlu0 %v3974, 12
        %v4090 = vpop.permute.xlu0 %4089
        %4091 = vrot.lane.b32.xlu0 %v3975, 12
        %v4092 = vpop.permute.xlu0 %4091
        %4093 = vrot.lane.b32.xlu0 %v3976, 12
        %v4094 = vpop.permute.xlu0 %4093
        %4095 = vrot.lane.b32.xlu0 %v3977, 12
        %v4096 = vpop.permute.xlu0 %4095
        %4097 = vrot.lane.b32.xlu0 %v3978, 12
        %v4098 = vpop.permute.xlu0 %4097
        %4099 = vrot.lane.b32.xlu0 %v4070, 12
        %v4100 = vpop.permute.xlu0 %4099
        %4101 = vrot.lane.b32.xlu0 %v4071, 12
        %v4102 = vpop.permute.xlu0 %4101
        %4103 = vrot.lane.b32.xlu0 %v4072, 12
        %v4104 = vpop.permute.xlu0 %4103
        %v4105 = vunpack.c.l.b16 %v3858
        %v4106 = vunpack.c.l.b16 %v3861
        %v4107 = vunpack.c.l.b16 %v3865
        %v4108 = vunpack.c.l.b16 %v3868
        %v4109 = vunpack.c.l.b16 %v3872
        %v4110 = vunpack.c.l.b16 %v3875
        %v4111 = vpack.c.b16 %v4106, %v4105
        %v4112 = vpack.c.b16 %v4108, %v4107
        %v4113 = vpack.c.b16 %v4110, %v4109
        %4114 = vrot.lane.b32.xlu0 %v4019, 20
        %v4115 = vpop.permute.xlu0 %4114
        %4116 = vrot.lane.b32.xlu0 %v4020, 20
        %v4117 = vpop.permute.xlu0 %4116
        %4118 = vrot.lane.b32.xlu0 %v4021, 20
        %v4119 = vpop.permute.xlu0 %4118
        %4120 = vrot.lane.b32.xlu0 %v4022, 20
        %v4121 = vpop.permute.xlu0 %4120
        %4122 = vrot.lane.b32.xlu0 %v4023, 20
        %v4123 = vpop.permute.xlu0 %4122
        %4124 = vrot.lane.b32.xlu0 %v4024, 20
        %v4125 = vpop.permute.xlu0 %4124
        %4126 = vrot.lane.b32.xlu0 %v4025, 20
        %v4127 = vpop.permute.xlu0 %4126
        %4128 = vrot.lane.b32.xlu0 %v4026, 20
        %v4129 = vpop.permute.xlu0 %4128
        %4130 = vrot.lane.b32.xlu0 %v4027, 20
        %v4131 = vpop.permute.xlu0 %4130
        %4132 = vrot.lane.b32.xlu0 %v4028, 20
        %v4133 = vpop.permute.xlu0 %4132
        %4134 = vrot.lane.b32.xlu0 %v4029, 20
        %v4135 = vpop.permute.xlu0 %4134
        %4136 = vrot.lane.b32.xlu0 %v4030, 20
        %v4137 = vpop.permute.xlu0 %4136
        %4138 = vrot.lane.b32.xlu0 %v4031, 20
        %v4139 = vpop.permute.xlu0 %4138
        %4140 = vrot.lane.b32.xlu0 %v4111, 20
        %v4141 = vpop.permute.xlu0 %4140
        %4142 = vrot.lane.b32.xlu0 %v4112, 20
        %v4143 = vpop.permute.xlu0 %4142
        %4144 = vrot.lane.b32.xlu0 %v4113, 20
        %v4145 = vpop.permute.xlu0 %4144
        %v4146 = vunpack.c.l.b16 %v443
        %v4147 = vunpack.c.l.b16 %v444
        %v4148 = vunpack.c.l.b16 %v446
        %v4149 = vunpack.c.l.b16 %v447
        %v4150 = vunpack.c.l.b16 %v449
        %v4151 = vunpack.c.l.b16 %v450
        %v4152 = vpack.c.b16 %v4147, %v4146
        %v4153 = vpack.c.b16 %v4149, %v4148
        %v4154 = vpack.c.b16 %v4151, %v4150
        %4155 = vrot.lane.b32.xlu0 %v3969, 24
        %v4156 = vpop.permute.xlu0 %4155
        %4157 = vrot.lane.b32.xlu0 %v3970, 24
        %v4158 = vpop.permute.xlu0 %4157
        %4159 = vrot.lane.b32.xlu0 %v3971, 24
        %v4160 = vpop.permute.xlu0 %4159
        %4161 = vrot.lane.b32.xlu0 %v3972, 24
        %v4162 = vpop.permute.xlu0 %4161
        %4163 = vrot.lane.b32.xlu0 %v3973, 24
        %v4164 = vpop.permute.xlu0 %4163
        %4165 = vrot.lane.b32.xlu0 %v3974, 24
        %v4166 = vpop.permute.xlu0 %4165
        %4167 = vrot.lane.b32.xlu0 %v3975, 24
        %v4168 = vpop.permute.xlu0 %4167
        %4169 = vrot.lane.b32.xlu0 %v3976, 24
        %v4170 = vpop.permute.xlu0 %4169
        %4171 = vrot.lane.b32.xlu0 %v3977, 24
        %v4172 = vpop.permute.xlu0 %4171
        %4173 = vrot.lane.b32.xlu0 %v3978, 24
        %v4174 = vpop.permute.xlu0 %4173
        %4175 = vrot.lane.b32.xlu0 %v4070, 24
        %v4176 = vpop.permute.xlu0 %4175
        %4177 = vrot.lane.b32.xlu0 %v4071, 24
        %v4178 = vpop.permute.xlu0 %4177
        %4179 = vrot.lane.b32.xlu0 %v4072, 24
        %v4180 = vpop.permute.xlu0 %4179
        %4181 = vrot.lane.b32.xlu0 %v4152, 24
        %v4182 = vpop.permute.xlu0 %4181
        %4183 = vrot.lane.b32.xlu0 %v4153, 24
        %v4184 = vpop.permute.xlu0 %4183
        %4185 = vrot.lane.b32.xlu0 %v4154, 24
        %v4186 = vpop.permute.xlu0 %4185
        %v4187 = vunpack.c.l.b16 %v3893
        %v4188 = vunpack.c.l.b16 %v3903
        %v4189 = vpack.c.b16 %v4188, %v4187
        %4190 = vrot.lane.b32.xlu0 %v4189, 28
        %v4191 = vpop.permute.xlu0 %4190
        %v4192 = vunpack.c.l.b16 %v3913
        %v4193 = vunpack.c.l.b16 %v3916
        %v4194 = vunpack.c.l.b16 %v3920
        %v4195 = vunpack.c.l.b16 %v3923
        %v4196 = vunpack.c.l.b16 %v3927
        %v4197 = vunpack.c.l.b16 %v3930
        %v4198 = vpack.c.b16 %v4193, %v4192
        %v4199 = vpack.c.b16 %v4195, %v4194
        %v4200 = vpack.c.b16 %v4197, %v4196
        %4201 = vrot.lane.b32.xlu0 %v4022, 32
        %v4202 = vpop.permute.xlu0 %4201
        %4203 = vrot.lane.b32.xlu0 %v4023, 32
        %v4204 = vpop.permute.xlu0 %4203
        %4205 = vrot.lane.b32.xlu0 %v4024, 32
        %v4206 = vpop.permute.xlu0 %4205
        %4207 = vrot.lane.b32.xlu0 %v4025, 32
        %v4208 = vpop.permute.xlu0 %4207
        %4209 = vrot.lane.b32.xlu0 %v4026, 32
        %v4210 = vpop.permute.xlu0 %4209
        %4211 = vrot.lane.b32.xlu0 %v4027, 32
        %v4212 = vpop.permute.xlu0 %4211
        %4213 = vrot.lane.b32.xlu0 %v4028, 32
        %v4214 = vpop.permute.xlu0 %4213
        %4215 = vrot.lane.b32.xlu0 %v4029, 32
        %v4216 = vpop.permute.xlu0 %4215
        %4217 = vrot.lane.b32.xlu0 %v4030, 32
        %v4218 = vpop.permute.xlu0 %4217
        %4219 = vrot.lane.b32.xlu0 %v4031, 32
        %v4220 = vpop.permute.xlu0 %4219
        %4221 = vrot.lane.b32.xlu0 %v4111, 32
        %v4222 = vpop.permute.xlu0 %4221
        %4223 = vrot.lane.b32.xlu0 %v4112, 32
        %v4224 = vpop.permute.xlu0 %4223
        %4225 = vrot.lane.b32.xlu0 %v4113, 32
        %v4226 = vpop.permute.xlu0 %4225
        %4227 = vrot.lane.b32.xlu0 %v4198, 32
        %v4228 = vpop.permute.xlu0 %4227
        %4229 = vrot.lane.b32.xlu0 %v4199, 32
        %v4230 = vpop.permute.xlu0 %4229
        %4231 = vrot.lane.b32.xlu0 %v4200, 32
        %v4232 = vpop.permute.xlu0 %4231
        %v4235 = vsel %vm984, %v3963, %v3983
        %v4237 = vsel %vm984, %v3964, %v3026
        %v4239 = vsel %vm984, %v3965, %v1618
        %v4241 = vsel %vm984, %v3966, %v1620
        %v4243 = vsel %vm984, %v3967, %v1622
        %v4245 = vsel %vm984, %v3968, %v1624
        %v4247 = vsel %vm984, %v3969, %v1626
        %v4249 = vsel %vm984, %v3970, %v1628
        %v4251 = vsel %vm984, %v3971, %v1630
        %v4253 = vsel %vm984, %v3972, %v1632
        %v4255 = vsel %vm984, %v3973, %v1634
        %v4257 = vsel %vm984, %v3974, %v1636
        %v4259 = vsel %vm984, %v3975, %v1638
        %v4261 = vsel %vm984, %v3976, %v1640
        %v4263 = vsel %vm984, %v3977, %v1642
        %v4265 = vsel %vm984, %v3978, %v1644
        %v4267 = vsel %vm1984, %v4235, %v4033
        %v4269 = vsel %vm1984, %v4237, %v4035
        %v4271 = vsel %vm1984, %v4239, %v4037
        %v4273 = vsel %vm1984, %v4241, %v4039
        %v4275 = vsel %vm1984, %v4243, %v4041
        %v4277 = vsel %vm1984, %v4245, %v4043
        %v4279 = vsel %vm1984, %v4247, %v4045
        %v4281 = vsel %vm1984, %v4249, %v4047
        %v4283 = vsel %vm1984, %v4251, %v4049
        %v4285 = vsel %vm1984, %v4253, %v4051
        %v4287 = vsel %vm1984, %v4255, %v4053
        %v4289 = vsel %vm1984, %v4257, %v4055
        %v4291 = vsel %vm1984, %v4259, %v4057
        %v4293 = vsel %vm1984, %v4261, %v4059
        %v4295 = vsel %vm1984, %v4263, %v4061
        %v4297 = vsel %vm1984, %v4265, %v4063
        %v4299 = vsel %vm2017, %v4267, %v4074
        %v4301 = vsel %vm2017, %v4269, %v4076
        %v4303 = vsel %vm2017, %v4271, %v4078
        %v4305 = vsel %vm2017, %v4273, %v4080
        %v4307 = vsel %vm2017, %v4275, %v4082
        %v4309 = vsel %vm2017, %v4277, %v4084
        %v4311 = vsel %vm2017, %v4279, %v4086
        %v4313 = vsel %vm2017, %v4281, %v4088
        %v4315 = vsel %vm2017, %v4283, %v4090
        %v4317 = vsel %vm2017, %v4285, %v4092
        %v4319 = vsel %vm2017, %v4287, %v4094
        %v4321 = vsel %vm2017, %v4289, %v4096
        %v4323 = vsel %vm2017, %v4291, %v4098
        %v4325 = vsel %vm2017, %v4293, %v4100
        %v4327 = vsel %vm2017, %v4295, %v4102
        %v4329 = vsel %vm2017, %v4297, %v4104
        %v4330 = vsel %vm2050, %v4299, %v1765
        %v4331 = vsel %vm2050, %v4301, %v1767
        %v4332 = vsel %vm2050, %v4303, %v1769
        %v4333 = vsel %vm2050, %v4305, %v1771
        %v4334 = vsel %vm2050, %v4307, %v1773
        %v4335 = vsel %vm2050, %v4309, %v1775
        %v4336 = vsel %vm2050, %v4311, %v1777
        %v4337 = vsel %vm2050, %v4313, %v1779
        %v4338 = vsel %vm2050, %v4315, %v1781
        %v4339 = vsel %vm2050, %v4317, %v1783
        %v4340 = vsel %vm2050, %v4319, %v1785
        %v4341 = vsel %vm2050, %v4321, %v1787
        %v4342 = vsel %vm2050, %v4323, %v1789
        %v4343 = vsel %vm2050, %v4325, %v1791
        %v4344 = vsel %vm2050, %v4327, %v1793
        %v4345 = vsel %vm2050, %v4329, %v1795
        %v4347 = vsel %vm2083, %v4330, %v4115
        %v4349 = vsel %vm2083, %v4331, %v4117
        %v4351 = vsel %vm2083, %v4332, %v4119
        %v4353 = vsel %vm2083, %v4333, %v4121
        %v4355 = vsel %vm2083, %v4334, %v4123
        %v4357 = vsel %vm2083, %v4335, %v4125
        %v4359 = vsel %vm2083, %v4336, %v4127
        %v4361 = vsel %vm2083, %v4337, %v4129
        %v4363 = vsel %vm2083, %v4338, %v4131
        %v4365 = vsel %vm2083, %v4339, %v4133
        %v4367 = vsel %vm2083, %v4340, %v4135
        %v4369 = vsel %vm2083, %v4341, %v4137
        %v4371 = vsel %vm2083, %v4342, %v4139
        %v4373 = vsel %vm2083, %v4343, %v4141
        %v4375 = vsel %vm2083, %v4344, %v4143
        %v4377 = vsel %vm2083, %v4345, %v4145
        %v4379 = vsel %vm2116, %v4347, %v4156
        %v4381 = vsel %vm2116, %v4349, %v4158
        %v4383 = vsel %vm2116, %v4351, %v4160
        %v4385 = vsel %vm2116, %v4353, %v4162
        %v4387 = vsel %vm2116, %v4355, %v4164
        %v4389 = vsel %vm2116, %v4357, %v4166
        %v4391 = vsel %vm2116, %v4359, %v4168
        %v4393 = vsel %vm2116, %v4361, %v4170
        %v4395 = vsel %vm2116, %v4363, %v4172
        %v4397 = vsel %vm2116, %v4365, %v4174
        %v4399 = vsel %vm2116, %v4367, %v4176
        %v4401 = vsel %vm2116, %v4369, %v4178
        %v4403 = vsel %vm2116, %v4371, %v4180
        %v4405 = vsel %vm2116, %v4373, %v4182
        %v4407 = vsel %vm2116, %v4375, %v4184
        %v4409 = vsel %vm2116, %v4377, %v4186
        %v4410 = vsel %vm2149, %v4379, %v1874
        %v4411 = vsel %vm2149, %v4381, %v1876
        %v4412 = vsel %vm2149, %v4383, %v1878
        %v4413 = vsel %vm2149, %v4385, %v1880
        %v4414 = vsel %vm2149, %v4387, %v1882
        %v4415 = vsel %vm2149, %v4389, %v1884
        %v4416 = vsel %vm2149, %v4391, %v1886
        %v4417 = vsel %vm2149, %v4393, %v1888
        %v4418 = vsel %vm2149, %v4395, %v1890
        %v4419 = vsel %vm2149, %v4397, %v1892
        %v4420 = vsel %vm2149, %v4399, %v1894
        %v4421 = vsel %vm2149, %v4401, %v1896
        %v4422 = vsel %vm2149, %v4403, %v1898
        %v4423 = vsel %vm2149, %v4405, %v1900
        %v4424 = vsel %vm2149, %v4407, %v3225
        %v4426 = vsel %vm2149, %v4409, %v4191
        %v4428 = vsel %vm2182, %v4410, %v4202
        %v4430 = vsel %vm2182, %v4411, %v4204
        %v4432 = vsel %vm2182, %v4412, %v4206
        %v4434 = vsel %vm2182, %v4413, %v4208
        %v4436 = vsel %vm2182, %v4414, %v4210
        %v4438 = vsel %vm2182, %v4415, %v4212
        %v4440 = vsel %vm2182, %v4416, %v4214
        %v4442 = vsel %vm2182, %v4417, %v4216
        %v4444 = vsel %vm2182, %v4418, %v4218
        %v4446 = vsel %vm2182, %v4419, %v4220
        %v4448 = vsel %vm2182, %v4420, %v4222
        %v4450 = vsel %vm2182, %v4421, %v4224
        %v4452 = vsel %vm2182, %v4422, %v4226
        %v4454 = vsel %vm2182, %v4423, %v4228
        %v4456 = vsel %vm2182, %v4424, %v4230
        %v4458 = vsel %vm2182, %v4426, %v4232
        %v4459 = vld [vmem:[%s4] sm:$0xf]
        %v4460 = vld [vmem:[%s4 + $0x4] sm:$0xf]
        %v4461 = vld [vmem:[%s4 + $0x8] sm:$0xf]
        %v4462 = vld [vmem:[%s4 + $0xc] sm:$0xf]
        %v4463 = vld [vmem:[%s4 + $0x10] sm:$0x3]
        %v4469 = vunpack.c.l.b16 %v4459
        %v4470 = vunpack.c.l.b16 %v4460
        %v4471 = vunpack.c.l.b16 %v4461
        %v4472 = vunpack.c.l.b16 %v4462
        %v4473 = vunpack.c.l.b16 %v4463
        %v4474 = vpack.c.b16 %v4470, %v4469
        %v4475 = vpack.c.b16 %v4472, %v4471
        %v4476 = vpack.c.b16 %v4473, %v4473
        %v4479 = vsel %vm2235, %v4428, 0
        %v4481 = vsel %vm2235, %v4430, 0
        %v4483 = vsel %vm2235, %v4432, 0
        %v4485 = vsel %vm2235, %v4434, 0
        %v4487 = vsel %vm2235, %v4436, 0
        %v4489 = vsel %vm2235, %v4438, 0
        %v4491 = vsel %vm2235, %v4440, 0
        %v4493 = vsel %vm2235, %v4442, 0
        %v4495 = vsel %vm2235, %v4444, 0
        %v4497 = vsel %vm2235, %v4446, 0
        %v4499 = vsel %vm2235, %v4448, 0
        %v4501 = vsel %vm2235, %v4450, 0
        %v4503 = vsel %vm2235, %v4452, 0
        %v4505 = vsel %vm2235, %v4454, 0
        %v4507 = vsel %vm2235, %v4456, 0
        %v4509 = vsel %vm2235, %v4458, 0
        %v4512 = vsel %vm1033, %v4476, 0
        %4514 = vmatprep.subr.bf16.mxu0 0
        %4515 = vmatpush1.bf16.msra.mxu0 %v4474
        %4516 = vmatprep.subr.bf16.mxu0 0
        %4517 = vmatpush1.bf16.msra.mxu0 %v4475
        %4518 = vmatprep.subr.bf16.mxu0 0
        %4519 = vmatpush1.bf16.msra.mxu0 %v4512
        %4520 = vmatprep.subr.bf16.mxu0 0
        %4521 = vmatpush1.bf16.msra.mxu0 0
        %4522 = vmatprep.subr.bf16.mxu0 0
        %4523 = vmatpush1.bf16.msra.mxu0 0
        %4524 = vmatprep.subr.bf16.mxu0 0
        %4525 = vmatpush1.bf16.msra.mxu0 0
        %4526 = vmatprep.subr.bf16.mxu0 0
        %4527 = vmatpush1.bf16.msra.mxu0 0
        %4528 = vmatprep.subr.bf16.mxu0 0
        %4529 = vmatpush1.bf16.msra.mxu0 0
        %4530 = vmatprep.subr.bf16.mxu0 0
        %4531 = vmatpush1.bf16.msra.mxu0 0
        %4532 = vmatprep.subr.bf16.mxu0 0
        %4533 = vmatpush1.bf16.msra.mxu0 0
        %4534 = vmatprep.subr.bf16.mxu0 0
        %4535 = vmatpush1.bf16.msra.mxu0 0
        %4536 = vmatprep.subr.bf16.mxu0 0
        %4537 = vmatpush1.bf16.msra.mxu0 0
        %4538 = vmatprep.subr.bf16.mxu0 0
        %4539 = vmatpush1.bf16.msra.mxu0 0
        %4540 = vmatprep.subr.bf16.mxu0 0
        %4541 = vmatpush1.bf16.msra.mxu0 0
        %4542 = vmatprep.subr.bf16.mxu0 0
        %4543 = vmatpush1.bf16.msra.mxu0 0
        %4544 = vmatprep.subr.bf16.mxu0 0
        %4545 = vmatpush1.bf16.msra.mxu0 0
        %4546 = vmatprep.mubr.bf16.mxu0 0
        %4547 = vmatmul.mubr.bf16.gmra.mrb[0].mxu0 %v4479
        %v4548 = vpop.f32.mrb[0].mxu0
        %v4549 = vadd.f32 0.0, %v4548
        %v4550 = vpop.f32.mrb[0].mxu0
        %v4551 = vpop.f32.mrb[0].mxu0
        %v4552 = vadd.f32 0.0, %v4551
        %v4553 = vpop.f32.mrb[0].mxu0
        %4554 = vmatprep.mubr.bf16.mxu0 0
        %4555 = vmatmul.mubr.bf16.gmra.mrb[0].mxu0 %v4481
        %v4556 = vpop.f32.mrb[0].mxu0
        %v4557 = vadd.f32 0.0, %v4556
        %v4558 = vpop.f32.mrb[0].mxu0
        %v4559 = vpop.f32.mrb[0].mxu0
        %v4560 = vadd.f32 0.0, %v4559
        %v4561 = vpop.f32.mrb[0].mxu0
        %4562 = vmatprep.mubr.bf16.mxu0 0
        %4563 = vmatmul.mubr.bf16.gmra.mrb[0].mxu0 %v4483
        %v4564 = vpop.f32.mrb[0].mxu0
        %v4565 = vadd.f32 0.0, %v4564
        %v4566 = vpop.f32.mrb[0].mxu0
        %v4567 = vpop.f32.mrb[0].mxu0
        %v4568 = vadd.f32 0.0, %v4567
        %v4569 = vpop.f32.mrb[0].mxu0
        %4570 = vmatprep.mubr.bf16.mxu0 0
        %4571 = vmatmul.mubr.bf16.gmra.mrb[0].mxu0 %v4485
        %v4572 = vpop.f32.mrb[0].mxu0
        %v4573 = vadd.f32 0.0, %v4572
        %v4574 = vpop.f32.mrb[0].mxu0
        %v4575 = vpop.f32.mrb[0].mxu0
        %v4576 = vadd.f32 0.0, %v4575
        %v4577 = vpop.f32.mrb[0].mxu0
        %4578 = vmatprep.mubr.bf16.mxu0 0
        %4579 = vmatmul.mubr.bf16.gmra.mrb[0].mxu0 %v4487
        %v4580 = vpop.f32.mrb[0].mxu0
        %v4581 = vadd.f32 0.0, %v4580
        %v4582 = vpop.f32.mrb[0].mxu0
        %v4583 = vpop.f32.mrb[0].mxu0
        %v4584 = vadd.f32 0.0, %v4583
        %v4585 = vpop.f32.mrb[0].mxu0
        %4586 = vmatprep.mubr.bf16.mxu0 0
        %4587 = vmatmul.mubr.bf16.gmra.mrb[0].mxu0 %v4489
        %v4588 = vpop.f32.mrb[0].mxu0
        %v4589 = vadd.f32 0.0, %v4588
        %v4590 = vpop.f32.mrb[0].mxu0
        %v4591 = vpop.f32.mrb[0].mxu0
        %v4592 = vadd.f32 0.0, %v4591
        %v4593 = vpop.f32.mrb[0].mxu0
        %4594 = vmatprep.mubr.bf16.mxu0 0
        %4595 = vmatmul.mubr.bf16.gmra.mrb[0].mxu0 %v4491
        %v4596 = vpop.f32.mrb[0].mxu0
        %v4597 = vadd.f32 0.0, %v4596
        %v4598 = vpop.f32.mrb[0].mxu0
        %v4599 = vpop.f32.mrb[0].mxu0
        %v4600 = vadd.f32 0.0, %v4599
        %v4601 = vpop.f32.mrb[0].mxu0
        %4602 = vmatprep.mubr.bf16.mxu0 0
        %4603 = vmatmul.mubr.bf16.gmra.mrb[0].mxu0 %v4493
        %v4604 = vpop.f32.mrb[0].mxu0
        %v4605 = vadd.f32 0.0, %v4604
        %v4606 = vpop.f32.mrb[0].mxu0
        %v4607 = vpop.f32.mrb[0].mxu0
        %v4608 = vadd.f32 0.0, %v4607
        %v4609 = vpop.f32.mrb[0].mxu0
        %4610 = vmatprep.mubr.bf16.mxu0 0
        %4611 = vmatmul.mubr.bf16.gmra.mrb[0].mxu0 %v4495
        %v4612 = vpop.f32.mrb[0].mxu0
        %v4613 = vadd.f32 0.0, %v4612
        %v4614 = vpop.f32.mrb[0].mxu0
        %v4615 = vpop.f32.mrb[0].mxu0
        %v4616 = vadd.f32 0.0, %v4615
        %v4617 = vpop.f32.mrb[0].mxu0
        %4618 = vmatprep.mubr.bf16.mxu0 0
        %4619 = vmatmul.mubr.bf16.gmra.mrb[0].mxu0 %v4497
        %v4620 = vpop.f32.mrb[0].mxu0
        %v4621 = vadd.f32 0.0, %v4620
        %v4622 = vpop.f32.mrb[0].mxu0
        %v4623 = vpop.f32.mrb[0].mxu0
        %v4624 = vadd.f32 0.0, %v4623
        %v4625 = vpop.f32.mrb[0].mxu0
        %4626 = vmatprep.mubr.bf16.mxu0 0
        %4627 = vmatmul.mubr.bf16.gmra.mrb[0].mxu0 %v4499
        %v4628 = vpop.f32.mrb[0].mxu0
        %v4629 = vadd.f32 0.0, %v4628
        %v4630 = vpop.f32.mrb[0].mxu0
        %v4631 = vpop.f32.mrb[0].mxu0
        %v4632 = vadd.f32 0.0, %v4631
        %v4633 = vpop.f32.mrb[0].mxu0
        %4634 = vmatprep.mubr.bf16.mxu0 0
        %4635 = vmatmul.mubr.bf16.gmra.mrb[0].mxu0 %v4501
        %v4636 = vpop.f32.mrb[0].mxu0
        %v4637 = vadd.f32 0.0, %v4636
        %v4638 = vpop.f32.mrb[0].mxu0
        %v4639 = vpop.f32.mrb[0].mxu0
        %v4640 = vadd.f32 0.0, %v4639
        %v4641 = vpop.f32.mrb[0].mxu0
        %4642 = vmatprep.mubr.bf16.mxu0 0
        %4643 = vmatmul.mubr.bf16.gmra.mrb[0].mxu0 %v4503
        %v4644 = vpop.f32.mrb[0].mxu0
        %v4645 = vadd.f32 0.0, %v4644
        %v4646 = vpop.f32.mrb[0].mxu0
        %v4647 = vpop.f32.mrb[0].mxu0
        %v4648 = vadd.f32 0.0, %v4647
        %v4649 = vpop.f32.mrb[0].mxu0
        %4650 = vmatprep.mubr.bf16.mxu0 0
        %4651 = vmatmul.mubr.bf16.gmra.mrb[0].mxu0 %v4505
        %v4652 = vpop.f32.mrb[0].mxu0
        %v4653 = vadd.f32 0.0, %v4652
        %v4654 = vpop.f32.mrb[0].mxu0
        %v4655 = vpop.f32.mrb[0].mxu0
        %v4656 = vadd.f32 0.0, %v4655
        %v4657 = vpop.f32.mrb[0].mxu0
        %4658 = vmatprep.mubr.bf16.mxu0 0
        %4659 = vmatmul.mubr.bf16.gmra.mrb[0].mxu0 %v4507
        %v4660 = vpop.f32.mrb[0].mxu0
        %v4661 = vadd.f32 0.0, %v4660
        %v4662 = vpop.f32.mrb[0].mxu0
        %v4663 = vpop.f32.mrb[0].mxu0
        %v4664 = vadd.f32 0.0, %v4663
        %v4665 = vpop.f32.mrb[0].mxu0
        %4666 = vmatprep.mubr.bf16.mxu0 0
        %4667 = vmatmul.mubr.bf16.gmra.mrb[0].mxu0 %v4509
        %v4668 = vpop.f32.mrb[0].mxu0
        %v4669 = vadd.f32 0.0, %v4668
        %v4670 = vpop.f32.mrb[0].mxu0
        %v4671 = vpop.f32.mrb[0].mxu0
        %v4672 = vadd.f32 0.0, %v4671
        %v4673 = vpop.f32.mrb[0].mxu0
        %4674 = vdwg.mxu0
        %4707 = vrot.lane.b32.xlu0 %v2306, 8
        %v4708 = vpop.permute.xlu0 %4707
        %4709 = vrot.lane.b32.xlu0 %v2309, 8
        %v4710 = vpop.permute.xlu0 %4709
        %4711 = vrot.lane.b32.xlu0 %v2314, 8
        %v4712 = vpop.permute.xlu0 %4711
        %4713 = vrot.lane.b32.xlu0 %v2317, 8
        %v4714 = vpop.permute.xlu0 %4713
        %4715 = vrot.lane.b32.xlu0 %v2322, 8
        %v4716 = vpop.permute.xlu0 %4715
        %4717 = vrot.lane.b32.xlu0 %v2325, 8
        %v4718 = vpop.permute.xlu0 %4717
        %4719 = vrot.lane.b32.xlu0 %v2330, 8
        %v4720 = vpop.permute.xlu0 %4719
        %4721 = vrot.lane.b32.xlu0 %v2333, 8
        %v4722 = vpop.permute.xlu0 %4721
        %4723 = vrot.lane.b32.xlu0 %v2338, 8
        %v4724 = vpop.permute.xlu0 %4723
        %4725 = vrot.lane.b32.xlu0 %v2341, 8
        %v4726 = vpop.permute.xlu0 %4725
        %4727 = vrot.lane.b32.xlu0 %v2346, 8
        %v4728 = vpop.permute.xlu0 %4727
        %4729 = vrot.lane.b32.xlu0 %v2349, 8
        %v4730 = vpop.permute.xlu0 %4729
        %4731 = vrot.lane.b32.xlu0 %v2354, 8
        %v4732 = vpop.permute.xlu0 %4731
        %4733 = vrot.lane.b32.xlu0 %v2357, 8
        %v4734 = vpop.permute.xlu0 %4733
        %4735 = vrot.lane.b32.xlu0 %v2362, 8
        %v4736 = vpop.permute.xlu0 %4735
        %4737 = vrot.lane.b32.xlu0 %v2365, 8
        %v4738 = vpop.permute.xlu0 %4737
        %4739 = vrot.lane.b32.xlu0 %v2370, 8
        %v4740 = vpop.permute.xlu0 %4739
        %4741 = vrot.lane.b32.xlu0 %v2373, 8
        %v4742 = vpop.permute.xlu0 %4741
        %4743 = vrot.lane.b32.xlu0 %v2378, 8
        %v4744 = vpop.permute.xlu0 %4743
        %4745 = vrot.lane.b32.xlu0 %v2381, 8
        %v4746 = vpop.permute.xlu0 %4745
        %4747 = vrot.lane.b32.xlu0 %v2386, 8
        %v4748 = vpop.permute.xlu0 %4747
        %4749 = vrot.lane.b32.xlu0 %v2389, 8
        %v4750 = vpop.permute.xlu0 %4749
        %4751 = vrot.lane.b32.xlu0 %v2394, 8
        %v4752 = vpop.permute.xlu0 %4751
        %4753 = vrot.lane.b32.xlu0 %v2397, 8
        %v4754 = vpop.permute.xlu0 %4753
        %4755 = vrot.lane.b32.xlu0 %v2402, 8
        %v4756 = vpop.permute.xlu0 %4755
        %4757 = vrot.lane.b32.xlu0 %v2405, 8
        %v4758 = vpop.permute.xlu0 %4757
        %4759 = vrot.lane.b32.xlu0 %v2410, 8
        %v4760 = vpop.permute.xlu0 %4759
        %4761 = vrot.lane.b32.xlu0 %v2413, 8
        %v4762 = vpop.permute.xlu0 %4761
        %4763 = vrot.lane.b32.xlu0 %v2418, 8
        %v4764 = vpop.permute.xlu0 %4763
        %4765 = vrot.lane.b32.xlu0 %v2421, 8
        %v4766 = vpop.permute.xlu0 %4765
        %4767 = vrot.lane.b32.xlu0 %v2426, 8
        %v4768 = vpop.permute.xlu0 %4767
        %4769 = vrot.lane.b32.xlu0 %v2429, 8
        %v4770 = vpop.permute.xlu0 %4769
        %4835 = vrot.lane.b32.xlu0 %v3580, 16
        %v4836 = vpop.permute.xlu0 %4835
        %4837 = vrot.lane.b32.xlu0 %v3583, 16
        %v4838 = vpop.permute.xlu0 %4837
        %4839 = vrot.lane.b32.xlu0 %v3588, 16
        %v4840 = vpop.permute.xlu0 %4839
        %4841 = vrot.lane.b32.xlu0 %v3591, 16
        %v4842 = vpop.permute.xlu0 %4841
        %4843 = vrot.lane.b32.xlu0 %v3596, 16
        %v4844 = vpop.permute.xlu0 %4843
        %4845 = vrot.lane.b32.xlu0 %v3599, 16
        %v4846 = vpop.permute.xlu0 %4845
        %4847 = vrot.lane.b32.xlu0 %v3604, 16
        %v4848 = vpop.permute.xlu0 %4847
        %4849 = vrot.lane.b32.xlu0 %v3607, 16
        %v4850 = vpop.permute.xlu0 %4849
        %4851 = vrot.lane.b32.xlu0 %v3612, 16
        %v4852 = vpop.permute.xlu0 %4851
        %4853 = vrot.lane.b32.xlu0 %v3615, 16
        %v4854 = vpop.permute.xlu0 %4853
        %4855 = vrot.lane.b32.xlu0 %v3620, 16
        %v4856 = vpop.permute.xlu0 %4855
        %4857 = vrot.lane.b32.xlu0 %v3623, 16
        %v4858 = vpop.permute.xlu0 %4857
        %4859 = vrot.lane.b32.xlu0 %v3628, 16
        %v4860 = vpop.permute.xlu0 %4859
        %4861 = vrot.lane.b32.xlu0 %v3631, 16
        %v4862 = vpop.permute.xlu0 %4861
        %4863 = vrot.lane.b32.xlu0 %v3636, 16
        %v4864 = vpop.permute.xlu0 %4863
        %4865 = vrot.lane.b32.xlu0 %v3639, 16
        %v4866 = vpop.permute.xlu0 %4865
        %4867 = vrot.lane.b32.xlu0 %v3644, 16
        %v4868 = vpop.permute.xlu0 %4867
        %4869 = vrot.lane.b32.xlu0 %v3647, 16
        %v4870 = vpop.permute.xlu0 %4869
        %4871 = vrot.lane.b32.xlu0 %v3652, 16
        %v4872 = vpop.permute.xlu0 %4871
        %4873 = vrot.lane.b32.xlu0 %v3655, 16
        %v4874 = vpop.permute.xlu0 %4873
        %4875 = vrot.lane.b32.xlu0 %v3660, 16
        %v4876 = vpop.permute.xlu0 %4875
        %4877 = vrot.lane.b32.xlu0 %v3663, 16
        %v4878 = vpop.permute.xlu0 %4877
        %4879 = vrot.lane.b32.xlu0 %v3668, 16
        %v4880 = vpop.permute.xlu0 %4879
        %4881 = vrot.lane.b32.xlu0 %v3671, 16
        %v4882 = vpop.permute.xlu0 %4881
        %4883 = vrot.lane.b32.xlu0 %v3676, 16
        %v4884 = vpop.permute.xlu0 %4883
        %4885 = vrot.lane.b32.xlu0 %v3679, 16
        %v4886 = vpop.permute.xlu0 %4885
        %4887 = vrot.lane.b32.xlu0 %v3684, 16
        %v4888 = vpop.permute.xlu0 %4887
        %4889 = vrot.lane.b32.xlu0 %v3687, 16
        %v4890 = vpop.permute.xlu0 %4889
        %4891 = vrot.lane.b32.xlu0 %v3692, 16
        %v4892 = vpop.permute.xlu0 %4891
        %4893 = vrot.lane.b32.xlu0 %v3695, 16
        %v4894 = vpop.permute.xlu0 %4893
        %4895 = vrot.lane.b32.xlu0 %v3700, 16
        %v4896 = vpop.permute.xlu0 %4895
        %4897 = vrot.lane.b32.xlu0 %v3703, 16
        %v4898 = vpop.permute.xlu0 %4897
        %4963 = vrot.lane.b32.xlu0 %v4549, 24
        %v4964 = vpop.permute.xlu0 %4963
        %4965 = vrot.lane.b32.xlu0 %v4552, 24
        %v4966 = vpop.permute.xlu0 %4965
        %4967 = vrot.lane.b32.xlu0 %v4557, 24
        %v4968 = vpop.permute.xlu0 %4967
        %4969 = vrot.lane.b32.xlu0 %v4560, 24
        %v4970 = vpop.permute.xlu0 %4969
        %4971 = vrot.lane.b32.xlu0 %v4565, 24
        %v4972 = vpop.permute.xlu0 %4971
        %4973 = vrot.lane.b32.xlu0 %v4568, 24
        %v4974 = vpop.permute.xlu0 %4973
        %4975 = vrot.lane.b32.xlu0 %v4573, 24
        %v4976 = vpop.permute.xlu0 %4975
        %4977 = vrot.lane.b32.xlu0 %v4576, 24
        %v4978 = vpop.permute.xlu0 %4977
        %4979 = vrot.lane.b32.xlu0 %v4581, 24
        %v4980 = vpop.permute.xlu0 %4979
        %4981 = vrot.lane.b32.xlu0 %v4584, 24
        %v4982 = vpop.permute.xlu0 %4981
        %4983 = vrot.lane.b32.xlu0 %v4589, 24
        %v4984 = vpop.permute.xlu0 %4983
        %4985 = vrot.lane.b32.xlu0 %v4592, 24
        %v4986 = vpop.permute.xlu0 %4985
        %4987 = vrot.lane.b32.xlu0 %v4597, 24
        %v4988 = vpop.permute.xlu0 %4987
        %4989 = vrot.lane.b32.xlu0 %v4600, 24
        %v4990 = vpop.permute.xlu0 %4989
        %4991 = vrot.lane.b32.xlu0 %v4605, 24
        %v4992 = vpop.permute.xlu0 %4991
        %4993 = vrot.lane.b32.xlu0 %v4608, 24
        %v4994 = vpop.permute.xlu0 %4993
        %4995 = vrot.lane.b32.xlu0 %v4613, 24
        %v4996 = vpop.permute.xlu0 %4995
        %4997 = vrot.lane.b32.xlu0 %v4616, 24
        %v4998 = vpop.permute.xlu0 %4997
        %4999 = vrot.lane.b32.xlu0 %v4621, 24
        %v5000 = vpop.permute.xlu0 %4999
        %5001 = vrot.lane.b32.xlu0 %v4624, 24
        %v5002 = vpop.permute.xlu0 %5001
        %5003 = vrot.lane.b32.xlu0 %v4629, 24
        %v5004 = vpop.permute.xlu0 %5003
        %5005 = vrot.lane.b32.xlu0 %v4632, 24
        %v5006 = vpop.permute.xlu0 %5005
        %5007 = vrot.lane.b32.xlu0 %v4637, 24
        %v5008 = vpop.permute.xlu0 %5007
        %5009 = vrot.lane.b32.xlu0 %v4640, 24
        %v5010 = vpop.permute.xlu0 %5009
        %5011 = vrot.lane.b32.xlu0 %v4645, 24
        %v5012 = vpop.permute.xlu0 %5011
        %5013 = vrot.lane.b32.xlu0 %v4648, 24
        %v5014 = vpop.permute.xlu0 %5013
        %5015 = vrot.lane.b32.xlu0 %v4653, 24
        %v5016 = vpop.permute.xlu0 %5015
        %5017 = vrot.lane.b32.xlu0 %v4656, 24
        %v5018 = vpop.permute.xlu0 %5017
        %5019 = vrot.lane.b32.xlu0 %v4661, 24
        %v5020 = vpop.permute.xlu0 %5019
        %5021 = vrot.lane.b32.xlu0 %v4664, 24
        %v5022 = vpop.permute.xlu0 %5021
        %5023 = vrot.lane.b32.xlu0 %v4669, 24
        %v5024 = vpop.permute.xlu0 %5023
        %5025 = vrot.lane.b32.xlu0 %v4672, 24
        %v5026 = vpop.permute.xlu0 %5025
        %v5059 = vsel %vm1984, %v1072, %v4708
        %v5060 = vsel %vm1984, %v1075, %v4710
        %v5061 = vsel %vm1984, %v1080, %v4712
        %v5062 = vsel %vm1984, %v1083, %v4714
        %v5063 = vsel %vm1984, %v1088, %v4716
        %v5064 = vsel %vm1984, %v1091, %v4718
        %v5065 = vsel %vm1984, %v1096, %v4720
        %v5066 = vsel %vm1984, %v1099, %v4722
        %v5067 = vsel %vm1984, %v1104, %v4724
        %v5068 = vsel %vm1984, %v1107, %v4726
        %v5069 = vsel %vm1984, %v1112, %v4728
        %v5070 = vsel %vm1984, %v1115, %v4730
        %v5071 = vsel %vm1984, %v1120, %v4732
        %v5072 = vsel %vm1984, %v1123, %v4734
        %v5073 = vsel %vm1984, %v1128, %v4736
        %v5074 = vsel %vm1984, %v1131, %v4738
        %v5075 = vsel %vm1984, %v1136, %v4740
        %v5076 = vsel %vm1984, %v1139, %v4742
        %v5077 = vsel %vm1984, %v1144, %v4744
        %v5078 = vsel %vm1984, %v1147, %v4746
        %v5079 = vsel %vm1984, %v1152, %v4748
        %v5080 = vsel %vm1984, %v1155, %v4750
        %v5081 = vsel %vm1984, %v1160, %v4752
        %v5082 = vsel %vm1984, %v1163, %v4754
        %v5083 = vsel %vm1984, %v1168, %v4756
        %v5084 = vsel %vm1984, %v1171, %v4758
        %v5085 = vsel %vm1984, %v1176, %v4760
        %v5086 = vsel %vm1984, %v1179, %v4762
        %v5087 = vsel %vm1984, %v1184, %v4764
        %v5088 = vsel %vm1984, %v1187, %v4766
        %v5089 = vsel %vm1984, %v1192, %v4768
        %v5090 = vsel %vm1984, %v1195, %v4770
        %v5091 = vsel %vm2050, %v5059, %v4836
        %v5092 = vsel %vm2050, %v5060, %v4838
        %v5093 = vsel %vm2050, %v5061, %v4840
        %v5094 = vsel %vm2050, %v5062, %v4842
        %v5095 = vsel %vm2050, %v5063, %v4844
        %v5096 = vsel %vm2050, %v5064, %v4846
        %v5097 = vsel %vm2050, %v5065, %v4848
        %v5098 = vsel %vm2050, %v5066, %v4850
        %v5099 = vsel %vm2050, %v5067, %v4852
        %v5100 = vsel %vm2050, %v5068, %v4854
        %v5101 = vsel %vm2050, %v5069, %v4856
        %v5102 = vsel %vm2050, %v5070, %v4858
        %v5103 = vsel %vm2050, %v5071, %v4860
        %v5104 = vsel %vm2050, %v5072, %v4862
        %v5105 = vsel %vm2050, %v5073, %v4864
        %v5106 = vsel %vm2050, %v5074, %v4866
        %v5107 = vsel %vm2050, %v5075, %v4868
        %v5108 = vsel %vm2050, %v5076, %v4870
        %v5109 = vsel %vm2050, %v5077, %v4872
        %v5110 = vsel %vm2050, %v5078, %v4874
        %v5111 = vsel %vm2050, %v5079, %v4876
        %v5112 = vsel %vm2050, %v5080, %v4878
        %v5113 = vsel %vm2050, %v5081, %v4880
        %v5114 = vsel %vm2050, %v5082, %v4882
        %v5115 = vsel %vm2050, %v5083, %v4884
        %v5116 = vsel %vm2050, %v5084, %v4886
        %v5117 = vsel %vm2050, %v5085, %v4888
        %v5118 = vsel %vm2050, %v5086, %v4890
        %v5119 = vsel %vm2050, %v5087, %v4892
        %v5120 = vsel %vm2050, %v5088, %v4894
        %v5121 = vsel %vm2050, %v5089, %v4896
        %v5122 = vsel %vm2050, %v5090, %v4898
        %v5123 = vsel %vm2116, %v5091, %v4964
        %v5124 = vsel %vm2116, %v5092, %v4966
        %v5125 = vsel %vm2116, %v5093, %v4968
        %v5126 = vsel %vm2116, %v5094, %v4970
        %v5127 = vsel %vm2116, %v5095, %v4972
        %v5128 = vsel %vm2116, %v5096, %v4974
        %v5129 = vsel %vm2116, %v5097, %v4976
        %v5130 = vsel %vm2116, %v5098, %v4978
        %v5131 = vsel %vm2116, %v5099, %v4980
        %v5132 = vsel %vm2116, %v5100, %v4982
        %v5133 = vsel %vm2116, %v5101, %v4984
        %v5134 = vsel %vm2116, %v5102, %v4986
        %v5135 = vsel %vm2116, %v5103, %v4988
        %v5136 = vsel %vm2116, %v5104, %v4990
        %v5137 = vsel %vm2116, %v5105, %v4992
        %v5138 = vsel %vm2116, %v5106, %v4994
        %v5139 = vsel %vm2116, %v5107, %v4996
        %v5140 = vsel %vm2116, %v5108, %v4998
        %v5141 = vsel %vm2116, %v5109, %v5000
        %v5142 = vsel %vm2116, %v5110, %v5002
        %v5143 = vsel %vm2116, %v5111, %v5004
        %v5144 = vsel %vm2116, %v5112, %v5006
        %v5145 = vsel %vm2116, %v5113, %v5008
        %v5146 = vsel %vm2116, %v5114, %v5010
        %v5147 = vsel %vm2116, %v5115, %v5012
        %v5148 = vsel %vm2116, %v5116, %v5014
        %v5149 = vsel %vm2116, %v5117, %v5016
        %v5150 = vsel %vm2116, %v5118, %v5018
        %v5151 = vsel %vm2116, %v5119, %v5020
        %v5152 = vsel %vm2116, %v5120, %v5022
        %v5153 = vsel %vm2116, %v5121, %v5024
        %v5154 = vsel %vm2116, %v5122, %v5026
        %v5155 = vld [vmem:[%s5] sm:$0x1]
        %v5157 = vlaneseq
        %v5158 = vshrl.u32 %v5157, 7
        %v5159 = vsub.s32 0, %v5158
        %v5160 = vrot.slane %v5155, %v5159
        %v5162 = vadd.f32 %v5123, %v5160
        %v5163 = vadd.f32 %v5124, %v5160
        %v5164 = vadd.f32 %v5125, %v5160
        %v5165 = vadd.f32 %v5126, %v5160
        %v5166 = vadd.f32 %v5127, %v5160
        %v5167 = vadd.f32 %v5128, %v5160
        %v5168 = vadd.f32 %v5129, %v5160
        %v5169 = vadd.f32 %v5130, %v5160
        %v5170 = vadd.f32 %v5131, %v5160
        %v5171 = vadd.f32 %v5132, %v5160
        %v5172 = vadd.f32 %v5133, %v5160
        %v5173 = vadd.f32 %v5134, %v5160
        %v5174 = vadd.f32 %v5135, %v5160
        %v5175 = vadd.f32 %v5136, %v5160
        %v5176 = vadd.f32 %v5137, %v5160
        %v5177 = vadd.f32 %v5138, %v5160
        %v5178 = vadd.f32 %v5139, %v5160
        %v5179 = vadd.f32 %v5140, %v5160
        %v5180 = vadd.f32 %v5141, %v5160
        %v5181 = vadd.f32 %v5142, %v5160
        %v5182 = vadd.f32 %v5143, %v5160
        %v5183 = vadd.f32 %v5144, %v5160
        %v5184 = vadd.f32 %v5145, %v5160
        %v5185 = vadd.f32 %v5146, %v5160
        %v5186 = vadd.f32 %v5147, %v5160
        %v5187 = vadd.f32 %v5148, %v5160
        %v5188 = vadd.f32 %v5149, %v5160
        %v5189 = vadd.f32 %v5150, %v5160
        %v5190 = vadd.f32 %v5151, %v5160
        %v5191 = vadd.f32 %v5152, %v5160
        %v5192 = vadd.f32 %v5153, %v5160
        %v5193 = vadd.f32 %v5154, %v5160
        %v5194 = vmax.f32 %v5162, 0.0
        %v5195 = vmax.f32 %v5163, 0.0
        %v5196 = vmax.f32 %v5164, 0.0
        %v5197 = vmax.f32 %v5165, 0.0
        %v5198 = vmax.f32 %v5166, 0.0
        %v5199 = vmax.f32 %v5167, 0.0
        %v5200 = vmax.f32 %v5168, 0.0
        %v5201 = vmax.f32 %v5169, 0.0
        %v5202 = vmax.f32 %v5170, 0.0
        %v5203 = vmax.f32 %v5171, 0.0
        %v5204 = vmax.f32 %v5172, 0.0
        %v5205 = vmax.f32 %v5173, 0.0
        %v5206 = vmax.f32 %v5174, 0.0
        %v5207 = vmax.f32 %v5175, 0.0
        %v5208 = vmax.f32 %v5176, 0.0
        %v5209 = vmax.f32 %v5177, 0.0
        %v5210 = vmax.f32 %v5178, 0.0
        %v5211 = vmax.f32 %v5179, 0.0
        %v5212 = vmax.f32 %v5180, 0.0
        %v5213 = vmax.f32 %v5181, 0.0
        %v5214 = vmax.f32 %v5182, 0.0
        %v5215 = vmax.f32 %v5183, 0.0
        %v5216 = vmax.f32 %v5184, 0.0
        %v5217 = vmax.f32 %v5185, 0.0
        %v5218 = vmax.f32 %v5186, 0.0
        %v5219 = vmax.f32 %v5187, 0.0
        %v5220 = vmax.f32 %v5188, 0.0
        %v5221 = vmax.f32 %v5189, 0.0
        %v5222 = vmax.f32 %v5190, 0.0
        %v5223 = vmax.f32 %v5191, 0.0
        %v5224 = vmax.f32 %v5192, 0.0
        %v5225 = vmax.f32 %v5193, 0.0
        %v5226 = vunpack.c.l.bf16 %v472
        %v5227 = vunpack.c.l.bf16 %v482
        %v5228 = vunpack.c.l.bf16 %v500
        %v5229 = vunpack.c.l.bf16 %v510
        %v5230 = vunpack.c.l.bf16 %v528
        %v5231 = vunpack.c.l.bf16 %v538
        %v5232 = vunpack.c.l.bf16 %v556
        %v5233 = vunpack.c.l.bf16 %v566
        %v5234 = vunpack.c.l.bf16 %v584
        %v5235 = vunpack.c.l.bf16 %v594
        %v5236 = vunpack.c.l.bf16 %v612
        %v5237 = vunpack.c.l.bf16 %v622
        %v5238 = vunpack.c.l.bf16 %v640
        %v5239 = vunpack.c.l.bf16 %v650
        %v5240 = vunpack.c.l.bf16 %v668
        %v5241 = vunpack.c.l.bf16 %v678
        %v5242 = vunpack.c.l.bf16 %v696
        %v5243 = vunpack.c.l.bf16 %v706
        %v5244 = vunpack.c.l.bf16 %v724
        %v5245 = vunpack.c.l.bf16 %v734
        %v5246 = vunpack.c.l.bf16 %v752
        %v5247 = vunpack.c.l.bf16 %v762
        %v5248 = vunpack.c.l.bf16 %v780
        %v5249 = vunpack.c.l.bf16 %v790
        %v5250 = vunpack.c.l.bf16 %v808
        %v5251 = vunpack.c.l.bf16 %v818
        %v5252 = vunpack.c.l.bf16 %v836
        %v5253 = vunpack.c.l.bf16 %v846
        %v5254 = vunpack.c.l.bf16 %v864
        %v5255 = vunpack.c.l.bf16 %v874
        %v5256 = vunpack.c.l.bf16 %v892
        %v5257 = vunpack.c.l.bf16 %v902
        %v5258 = vsel %vm984, %v5226, 0.0
        %v5259 = vsel %vm984, %v5227, 0.0
        %v5260 = vadd.f32 %v5258, %v5259
        %v5261 = vsel %vm984, %v5228, 0.0
        %v5262 = vadd.f32 %v5260, %v5261
        %v5263 = vsel %vm984, %v5229, 0.0
        %v5264 = vadd.f32 %v5262, %v5263
        %v5265 = vsel %vm984, %v5230, 0.0
        %v5266 = vadd.f32 %v5264, %v5265
        %v5267 = vsel %vm984, %v5231, 0.0
        %v5268 = vadd.f32 %v5266, %v5267
        %v5269 = vsel %vm984, %v5232, 0.0
        %v5270 = vadd.f32 %v5268, %v5269
        %v5271 = vsel %vm984, %v5233, 0.0
        %v5272 = vadd.f32 %v5270, %v5271
        %v5273 = vsel %vm984, %v5234, 0.0
        %v5274 = vadd.f32 %v5272, %v5273
        %v5275 = vsel %vm984, %v5235, 0.0
        %v5276 = vadd.f32 %v5274, %v5275
        %v5277 = vsel %vm984, %v5236, 0.0
        %v5278 = vadd.f32 %v5276, %v5277
        %v5279 = vsel %vm984, %v5237, 0.0
        %v5280 = vadd.f32 %v5278, %v5279
        %v5281 = vsel %vm984, %v5238, 0.0
        %v5282 = vadd.f32 %v5280, %v5281
        %v5283 = vsel %vm984, %v5239, 0.0
        %v5284 = vadd.f32 %v5282, %v5283
        %v5285 = vsel %vm984, %v5240, 0.0
        %v5286 = vadd.f32 %v5284, %v5285
        %v5287 = vsel %vm984, %v5241, 0.0
        %v5288 = vadd.f32 %v5286, %v5287
        %v5289 = vsel %vm984, %v5242, 0.0
        %v5290 = vadd.f32 %v5288, %v5289
        %v5291 = vsel %vm984, %v5243, 0.0
        %v5292 = vadd.f32 %v5290, %v5291
        %v5293 = vsel %vm984, %v5244, 0.0
        %v5294 = vadd.f32 %v5292, %v5293
        %v5295 = vsel %vm984, %v5245, 0.0
        %v5296 = vadd.f32 %v5294, %v5295
        %v5297 = vsel %vm984, %v5246, 0.0
        %v5298 = vadd.f32 %v5296, %v5297
        %v5299 = vsel %vm984, %v5247, 0.0
        %v5300 = vadd.f32 %v5298, %v5299
        %v5301 = vsel %vm984, %v5248, 0.0
        %v5302 = vadd.f32 %v5300, %v5301
        %v5303 = vsel %vm984, %v5249, 0.0
        %v5304 = vadd.f32 %v5302, %v5303
        %v5305 = vsel %vm984, %v5250, 0.0
        %v5306 = vadd.f32 %v5304, %v5305
        %v5307 = vsel %vm984, %v5251, 0.0
        %v5308 = vadd.f32 %v5306, %v5307
        %v5309 = vsel %vm984, %v5252, 0.0
        %v5310 = vadd.f32 %v5308, %v5309
        %v5311 = vsel %vm984, %v5253, 0.0
        %v5312 = vadd.f32 %v5310, %v5311
        %v5313 = vsel %vm984, %v5254, 0.0
        %v5314 = vadd.f32 %v5312, %v5313
        %v5315 = vsel %vm984, %v5255, 0.0
        %v5316 = vadd.f32 %v5314, %v5315
        %v5317 = vsel %vm984, %v5256, 0.0
        %v5318 = vadd.f32 %v5316, %v5317
        %v5319 = vsel %vm984, %v5257, 0.0
        %v5320 = vadd.f32 %v5318, %v5319
        %v5321 = vrot.slane %v5320, 4
        %v5322 = vadd.f32 %v5320, %v5321
        %v5323 = vrot.slane %v5322, 2
        %v5324 = vadd.f32 %v5322, %v5323
        %v5325 = vrot.slane %v5324, 1
        %v5326 = vadd.f32 %v5324, %v5325
        %v5327 = vrcp.pop 256.0
        %v5328 = vmul.f32 %v5326, %v5327
        %v5329 = vpack.c.bf16 %v5328, %v5328
        %v5330 = vld [vmem:[%s6] sm:$0x3]
        %v5331 = vld [vmem:[%s7] sm:$0x1]
        %v5333 = vsel %vm984, %v5329, 0
        %v5336 = vsel %vm1033, %v5330, 0
        %5338 = vmatprep.subr.bf16.mxu0 0
        %5339 = vmatpush1.bf16.msra.mxu0 %v5336
        %5340 = vmatprep.subr.bf16.mxu0 0
        %5341 = vmatpush1.bf16.msra.mxu0 0
        %5342 = vmatprep.subr.bf16.mxu0 0
        %5343 = vmatpush1.bf16.msra.mxu0 0
        %5344 = vmatprep.subr.bf16.mxu0 0
        %5345 = vmatpush1.bf16.msra.mxu0 0
        %5346 = vmatprep.subr.bf16.mxu0 0
        %5347 = vmatpush1.bf16.msra.mxu0 0
        %5348 = vmatprep.subr.bf16.mxu0 0
        %5349 = vmatpush1.bf16.msra.mxu0 0
        %5350 = vmatprep.subr.bf16.mxu0 0
        %5351 = vmatpush1.bf16.msra.mxu0 0
        %5352 = vmatprep.subr.bf16.mxu0 0
        %5353 = vmatpush1.bf16.msra.mxu0 0
        %5354 = vmatprep.subr.bf16.mxu0 0
        %5355 = vmatpush1.bf16.msra.mxu0 0
        %5356 = vmatprep.subr.bf16.mxu0 0
        %5357 = vmatpush1.bf16.msra.mxu0 0
        %5358 = vmatprep.subr.bf16.mxu0 0
        %5359 = vmatpush1.bf16.msra.mxu0 0
        %5360 = vmatprep.subr.bf16.mxu0 0
        %5361 = vmatpush1.bf16.msra.mxu0 0
        %5362 = vmatprep.subr.bf16.mxu0 0
        %5363 = vmatpush1.bf16.msra.mxu0 0
        %5364 = vmatprep.subr.bf16.mxu0 0
        %5365 = vmatpush1.bf16.msra.mxu0 0
        %5366 = vmatprep.subr.bf16.mxu0 0
        %5367 = vmatpush1.bf16.msra.mxu0 0
        %5368 = vmatprep.subr.bf16.mxu0 0
        %5369 = vmatpush1.bf16.msra.mxu0 0
        %5370 = vmatprep.mubr.bf16.mxu0 0
        %5371 = vmatmul.mubr.bf16.gmra.mrb[0].mxu0 %v5333
        %v5372 = vpop.f32.mrb[0].mxu0
        %v5373 = vadd.f32 %v5331, %v5372
        %v5374 = vpop.f32.mrb[0].mxu0
        %v5375 = vpop.f32.mrb[0].mxu0
        %v5376 = vpop.f32.mrb[0].mxu0
        %5377 = vdwg.mxu0
        %v5378 = vmax.f32 %v5373, 0.0
        %v5379 = vld [vmem:[%s10] sm:$0xf]
        %v5380 = vld [vmem:[%s9] sm:$0x3]
        %v5381 = vunpack.c.l.bf16 %v5380
        %v5382 = vlaneseq
        %v5383 = vshrl.u32 %v5382, 7
        %v5384 = vsub.s32 0, %v5383
        %v5385 = vrot.slane %v5378, %v5384
        %v5386 = vmul.f32 %v5381, %v5385
        %vm5387 = vcmask 60416
        %v5388 = vsel %vm5387, %v5386, 0.0
        %5389 = vadd.xlane.f32.xlu0 %v5388
        %v5390 = vpop.xlane.xlu0 %5389
        %v5391 = vadd.f32 %v5379, %v5390
        %v5392 = vld [vmem:[%s8] sm:$0x3]
        %v5393 = vpack.c.bf16 %v5195, %v5194
        %v5394 = vpack.c.bf16 %v5197, %v5196
        %v5395 = vpack.c.bf16 %v5199, %v5198
        %v5396 = vpack.c.bf16 %v5201, %v5200
        %v5397 = vpack.c.bf16 %v5203, %v5202
        %v5398 = vpack.c.bf16 %v5205, %v5204
        %v5399 = vpack.c.bf16 %v5207, %v5206
        %v5400 = vpack.c.bf16 %v5209, %v5208
        %v5401 = vpack.c.bf16 %v5211, %v5210
        %v5402 = vpack.c.bf16 %v5213, %v5212
        %v5403 = vpack.c.bf16 %v5215, %v5214
        %v5404 = vpack.c.bf16 %v5217, %v5216
        %v5405 = vpack.c.bf16 %v5219, %v5218
        %v5406 = vpack.c.bf16 %v5221, %v5220
        %v5407 = vpack.c.bf16 %v5223, %v5222
        %v5408 = vpack.c.bf16 %v5225, %v5224
        %5410 = vset.pattern.permute.xlu0 0
        %5411 = vperm.xlu0 %5410, %v5391
        %v5412 = vpop.permute.xlu0 %5411
        %v5415 = vsel %vm2182, %v5392, 0
        %v5418 = vsel %vm2182, %v5393, 0
        %v5421 = vsel %vm2182, %v5394, 0
        %v5424 = vsel %vm2182, %v5395, 0
        %v5427 = vsel %vm2182, %v5396, 0
        %v5430 = vsel %vm2182, %v5397, 0
        %v5433 = vsel %vm2182, %v5398, 0
        %v5436 = vsel %vm2182, %v5399, 0
        %v5439 = vsel %vm2182, %v5400, 0
        %v5442 = vsel %vm2182, %v5401, 0
        %v5445 = vsel %vm2182, %v5402, 0
        %v5448 = vsel %vm2182, %v5403, 0
        %v5451 = vsel %vm2182, %v5404, 0
        %v5454 = vsel %vm2182, %v5405, 0
        %v5457 = vsel %vm2182, %v5406, 0
        %v5460 = vsel %vm2182, %v5407, 0
        %v5463 = vsel %vm2182, %v5408, 0
        %5465 = vmatprep.subr.bf16.mxu0 0
        %5466 = vmatpush1.bf16.xpose.msra.mxu0 %v5418
        %5467 = vmatprep.subr.bf16.mxu0 0
        %5468 = vmatpush1.bf16.xpose.msra.mxu0 %v5421
        %5469 = vmatprep.subr.bf16.mxu0 0
        %5470 = vmatpush1.bf16.xpose.msra.mxu0 %v5424
        %5471 = vmatprep.subr.bf16.mxu0 0
        %5472 = vmatpush1.bf16.xpose.msra.mxu0 %v5427
        %5473 = vmatprep.subr.bf16.mxu0 0
        %5474 = vmatpush1.bf16.xpose.msra.mxu0 %v5430
        %5475 = vmatprep.subr.bf16.mxu0 0
        %5476 = vmatpush1.bf16.xpose.msra.mxu0 %v5433
        %5477 = vmatprep.subr.bf16.mxu0 0
        %5478 = vmatpush1.bf16.xpose.msra.mxu0 %v5436
        %5479 = vmatprep.subr.bf16.mxu0 0
        %5480 = vmatpush1.bf16.xpose.msra.mxu0 %v5439
        %5481 = vmatprep.subr.bf16.mxu0 0
        %5482 = vmatpush1.bf16.xpose.msra.mxu0 %v5442
        %5483 = vmatprep.subr.bf16.mxu0 0
        %5484 = vmatpush1.bf16.xpose.msra.mxu0 %v5445
        %5485 = vmatprep.subr.bf16.mxu0 0
        %5486 = vmatpush1.bf16.xpose.msra.mxu0 %v5448
        %5487 = vmatprep.subr.bf16.mxu0 0
        %5488 = vmatpush1.bf16.xpose.msra.mxu0 %v5451
        %5489 = vmatprep.subr.bf16.mxu0 0
        %5490 = vmatpush1.bf16.xpose.msra.mxu0 %v5454
        %5491 = vmatprep.subr.bf16.mxu0 0
        %5492 = vmatpush1.bf16.xpose.msra.mxu0 %v5457
        %5493 = vmatprep.subr.bf16.mxu0 0
        %5494 = vmatpush1.bf16.xpose.msra.mxu0 %v5460
        %5495 = vmatprep.subr.bf16.mxu0 0
        %5496 = vmatpush1.bf16.xpose.msra.mxu0 %v5463
        %5497 = vmatprep.mubr.bf16.mxu0 0
        %5498 = vmatmul.mubr.bf16.gmra.mrb[0].mxu0 %v5415
        %v5499 = vpop.f32.mrb[0].mxu0
        %v5500 = vadd.f32 %v5412, %v5499
        %v5501 = vpop.f32.mrb[0].mxu0
        %v5502 = vadd.f32 %v5412, %v5501
        %v5503 = vpop.f32.mrb[0].mxu0
        %v5504 = vpop.f32.mrb[0].mxu0
        %5505 = vdwg.mxu0
        %v5506 = vmax.f32 %v5500, 0.0
        %v5507 = vmax.f32 %v5502, 0.0
        %v5510 = vcombine.low %v5506, %v5507
        %5512 = vst [vmem:[%s379] sm:$0xff] %v5510
        %s5513 = sand.u32 %s269, 1
        %s5514 = scalar_lea.sflag [#allocation3], %s5513
        %s5515 = sand.u32 %s269, 1
        %s5516 = smul.addr %s5515, 8
        %s5517 = scalar_lea.vmem [#allocation2], %s5516
        // Predicated region
        $region65: #{tpu_custom_call.1} parent=63 // pred_check
          %p5518 = pneg %p279
        $region66: #{tpu_custom_call.1} parent=63 // pred_check_branch
          %5520 = sbr.rel (%p5518) target = $region68
        $region67: #{tpu_custom_call.1} parent=63 // pred_region
          %s5522 = ssub.s32 128, 128
          %5523 = vsyncadd %s5514, %s5522
          %s5524 = smul.addr %s25, 2
          %s5525 = smul.addr %s5524, 64
          %s5526 = scalar_lea.hbm %s11, %s5525
          %s5528 = sshll.u32 %s5517, 4
          %s5529 = int_to_ptr.vmem [resolvable:$true] %s5528
          %5531 = dma.vmem_to_hbm [thread:$0]  %s5529, 128, %s5526, %s5514
        $region68: #{tpu_custom_call.1} parent=63 // pred_fallthru
          _
      $region64: #{tpu_custom_call.1} parent=5 // pred_fallthru
        _
      %p5532 = scmp.le.s32.totalorder 2, %s20
      // Predicated region
      $region69: #{tpu_custom_call.1} parent=5 // pred_check
        %p5533 = pneg %p5532
      $region70: #{tpu_custom_call.1} parent=5 // pred_check_branch
        %5535 = sbr.rel (%p5533) target = $region72
      $region71: #{tpu_custom_call.1} parent=5 // pred_region
        %s5536 = ssub.s32 %s20, 2
        // Predicated region
        $region73: #{tpu_custom_call.1} parent=71 // pred_check
          %p5537 = pneg %p285
        $region74: #{tpu_custom_call.1} parent=71 // pred_check_branch
          %5539 = sbr.rel (%p5537) target = $region76
        $region75: #{tpu_custom_call.1} parent=71 // pred_region
          %s5540 = sand.u32 %s270, 1
          %s5541 = scalar_lea.sflag [#allocation3], %s5540
          %s5542 = sand.u32 %s270, 1
          %s5543 = smul.addr %s5542, 8
          %s5544 = scalar_lea.vmem [#allocation2], %s5543
          %5545 = dma.done %s5541, 128
        $region76: #{tpu_custom_call.1} parent=71 // pred_fallthru
          _
      $region72: #{tpu_custom_call.1} parent=5 // pred_fallthru
        _
    $region6: #{tpu_custom_call.1} parent=1 // loop_footer
      %s24 = sadd.s32 1, %s20
    $region7: #{tpu_custom_call.1} parent=1 // loop_footer_branch
      %19 = sbr.rel target = $region3
    $region8: #{tpu_custom_call.1} parent=1 // loop_exit
      _
    %5546 = vsyncpa [#allocation3], 1
    %s5547 = scalar_lea.sflag [#allocation3], 1
    %5548 = vsyncpa %s5547, 1

</llo_original>
